<compile_context>
chip_gen: v6e
topology: v6e:2x2x1
jax: 0.10.0
libtpu: 0.0.40
codegen_flags: <defaults>
</compile_context>

<pallas_src>
import functools
import numpy as np
import jax
import jax.numpy as jnp
from jax.experimental import pallas as pl
from jax.experimental.pallas import tpu as pltpu


def _round_up(x, m):
    return ((x + m - 1) // m) * m


# ----------------------------------------------------------------------------
# Kernel 1: ContextBranch (1x1-conv key/value heads) fused with per-image GAP.
#   grid = (B [parallel], HW tiles [arbitrary]); GAP accumulates into a
#   resident (1, C_in) f32 output block; K/V emitted bf16 per HW tile.
# ----------------------------------------------------------------------------
def _context_kv_gap_kernel(x_ref, wk_ref, wv_ref, bk_ref, bv_ref,
                           k_ref, v_ref, gap_ref, *, inv_hw):
    t = pl.program_id(1)
    x = x_ref[...]                                           # (thw, C_in) f32
    psum = jnp.sum(x, axis=0, keepdims=True) * inv_hw        # (1, C_in) f32

    @pl.when(t == 0)
    def _():
        gap_ref[...] = psum

    @pl.when(t > 0)
    def _():
        gap_ref[...] += psum

    xb = x.astype(jnp.bfloat16)
    k_ref[...] = jnp.maximum(
        jnp.dot(xb, wk_ref[...], preferred_element_type=jnp.float32) + bk_ref[...],
        0.0).astype(k_ref.dtype)
    v_ref[...] = jnp.maximum(
        jnp.dot(xb, wv_ref[...], preferred_element_type=jnp.float32) + bv_ref[...],
        0.0).astype(v_ref.dtype)


def context_branch_kv_gap(x_pix, wk, wv, bk, bv, *, hw, thw):
    """x_pix: (B, HWp, C_in) f32 pixel-major slab (already transposed/padded)."""
    B, HWp, C_in = x_pix.shape
    C_kv = wk.shape[1]
    nt = HWp // thw
    key, val, gap = pl.pallas_call(
        functools.partial(_context_kv_gap_kernel, inv_hw=1.0 / float(hw)),
        out_shape=(
            jax.ShapeDtypeStruct((B, HWp, C_kv), jnp.bfloat16),
            jax.ShapeDtypeStruct((B, HWp, C_kv), jnp.bfloat16),
            jax.ShapeDtypeStruct((B, 1, C_in), jnp.float32),
        ),
        grid_spec=pltpu.PrefetchScalarGridSpec(
            num_scalar_prefetch=0,
            grid=(B, nt),
            in_specs=[
                pl.BlockSpec((pl.Squeezed(), thw, C_in), lambda b, t: (b, t, 0)),
                pl.BlockSpec((C_in, C_kv), lambda b, t: (0, 0)),
                pl.BlockSpec((C_in, C_kv), lambda b, t: (0, 0)),
                pl.BlockSpec((1, C_kv), lambda b, t: (0, 0)),
                pl.BlockSpec((1, C_kv), lambda b, t: (0, 0)),
            ],
            out_specs=(
                pl.BlockSpec((pl.Squeezed(), thw, C_kv), lambda b, t: (b, t, 0)),
                pl.BlockSpec((pl.Squeezed(), thw, C_kv), lambda b, t: (b, t, 0)),
                pl.BlockSpec((pl.Squeezed(), 1, C_in), lambda b, t: (b, 0, 0)),
            ),
        ),
        compiler_params=pltpu.CompilerParams(
            dimension_semantics=("parallel", "arbitrary")),
    )(x_pix, wk, wv, bk, bv)
    return key, val, gap.reshape(B, C_in)


# ----------------------------------------------------------------------------
# Kernel 2: ObjectBranch stub + object_lin_transform fused, on B unique rows.
#   obj = relu(gap @ Wo + bo)   (B, 2048)
#   q   = relu(obj @ Wq + bq)   (B, 512)
# ----------------------------------------------------------------------------
def _obj_query_kernel(g_ref, wo_ref, bo_ref, wq_ref, bq_ref, obj_ref, q_ref):
    h = jnp.maximum(
        jnp.dot(g_ref[...], wo_ref[...], preferred_element_type=jnp.float32)
        + bo_ref[...], 0.0)                                   # (Bp, 2048) f32
    hb = h.astype(jnp.bfloat16)
    obj_ref[...] = hb.astype(obj_ref.dtype)
    q = jnp.dot(hb, wq_ref[...], preferred_element_type=jnp.float32)
    q_ref[...] = jnp.maximum(q + bq_ref[...], 0.0).astype(q_ref.dtype)


def object_branch_queries(gap, wo, bo, wq, bq):
    B, C_in = gap.shape
    Bp = max(8, _round_up(B, 8))
    g = gap.astype(jnp.bfloat16)
    if Bp != B:
        g = jnp.pad(g, ((0, Bp - B), (0, 0)))
    D_obj = wo.shape[1]
    D_q = wq.shape[1]
    obj, q = pl.pallas_call(
        _obj_query_kernel,
        out_shape=(jax.ShapeDtypeStruct((Bp, D_obj), jnp.bfloat16),
                   jax.ShapeDtypeStruct((Bp, D_q), jnp.bfloat16)),
        grid_spec=pltpu.PrefetchScalarGridSpec(
            num_scalar_prefetch=0,
            grid=(1,),
            in_specs=[
                pl.BlockSpec((Bp, C_in), lambda i: (0, 0)),
                pl.BlockSpec((C_in, D_obj), lambda i: (0, 0)),
                pl.BlockSpec((1, D_obj), lambda i: (0, 0)),
                pl.BlockSpec((D_obj, D_q), lambda i: (0, 0)),
                pl.BlockSpec((1, D_q), lambda i: (0, 0)),
            ],
            out_specs=(pl.BlockSpec((Bp, D_obj), lambda i: (0, 0)),
                       pl.BlockSpec((Bp, D_q), lambda i: (0, 0))),
        ),
        compiler_params=pltpu.CompilerParams(dimension_semantics=("arbitrary",)),
    )(g, wo, bo, wq, bq)
    return obj[:B], q[:B]


# ----------------------------------------------------------------------------
# Kernel 3: iCAN attention fused with context_lin_transform, per image.
#   scores = Q (Qp,C) . K (HWp,C)^T  -> masked exact softmax over HW
#   -> att @ V (Qp,C) -> relu(. @ clin_w + clin_b) (Qp, 1024)
#   No score scaling (matches the reference iCAN); exact softmax divide.
# ----------------------------------------------------------------------------
def _ican_clin_kernel(q_ref, k_ref, v_ref, wc_ref, bc_ref, o_ref, *, hw):
    q = q_ref[...]                                            # (Qp, C)  bf16
    k = k_ref[...]                                            # (HWp, C) bf16
    v = v_ref[...]                                            # (HWp, C) bf16
    s = jax.lax.dot_general(q, k, (((1,), (1,)), ((), ())),
                            preferred_element_type=jnp.float32)   # (Qp, HWp)
    if hw < s.shape[1]:      # static: mask padded HW positions
        col = jax.lax.broadcasted_iota(jnp.int32, s.shape, 1)
        s = jnp.where(col < hw, s, -jnp.inf)
    m = jnp.max(s, axis=1, keepdims=True)
    e = jnp.exp(s - m)
    att = e / jnp.sum(e, axis=1, keepdims=True)               # exact softmax
    ctx = jnp.dot(att.astype(v.dtype), v, preferred_element_type=jnp.float32)
    y = jnp.dot(ctx.astype(jnp.bfloat16), wc_ref[...],
                preferred_element_type=jnp.float32)
    o_ref[...] = jnp.maximum(y + bc_ref[...], 0.0).astype(o_ref.dtype)


def ican_attention_clin(q_img, ctx_key, ctx_val, wc, bc, *, qp, hw):
    """q_img: (B, 512) bf16 per-image queries; ctx_key/val: (B, HWp, 512) bf16."""
    B, C = q_img.shape
    HWp = ctx_key.shape[1]
    N = wc.shape[1]
    # Under the GAP object-branch stub every object in an image shares a query,
    # so the padded (B, Qp, C) slab is a broadcast; with a real per-object
    # ObjectBranch this becomes a scatter of distinct rows (kernel is general).
    q_pad = jnp.broadcast_to(q_img[:, None, :], (B, qp, C))
    return pl.pallas_call(
        functools.partial(_ican_clin_kernel, hw=hw),
        out_shape=jax.ShapeDtypeStruct((B, qp, N), jnp.bfloat16),
        grid_spec=pltpu.PrefetchScalarGridSpec(
            num_scalar_prefetch=0,
            grid=(B,),
            in_specs=[
                pl.BlockSpec((pl.Squeezed(), qp, C), lambda b: (b, 0, 0)),
                pl.BlockSpec((pl.Squeezed(), HWp, C), lambda b: (b, 0, 0)),
                pl.BlockSpec((pl.Squeezed(), HWp, C), lambda b: (b, 0, 0)),
                pl.BlockSpec((C, N), lambda b: (0, 0)),
                pl.BlockSpec((1, N), lambda b: (0, 0)),
            ],
            out_specs=pl.BlockSpec((pl.Squeezed(), qp, N), lambda b: (b, 0, 0)),
        ),
        compiler_params=pltpu.CompilerParams(dimension_semantics=("parallel",)),
    )(q_pad, ctx_key, ctx_val, wc, bc)        # (B, Qp, N) bf16


# ----------------------------------------------------------------------------
# Kernel 4: concat_lin_transform without materializing the (N_obj, 3072) concat
#   relu([x1 | x2] @ W + b) == relu(x1 @ W1 + x2 @ W2 + b); N tiled to 512.
# ----------------------------------------------------------------------------
def _concat_linear_relu_kernel(x1_ref, x2_ref, w1_ref, w2_ref, b_ref, o_ref):
    acc = jnp.dot(x1_ref[...], w1_ref[...], preferred_element_type=jnp.float32)
    acc = acc + jnp.dot(x2_ref[...], w2_ref[...],
                        preferred_element_type=jnp.float32)
    o_ref[...] = jnp.maximum(acc + b_ref[...], 0.0).astype(o_ref.dtype)


def concat_linear_relu(x1, x2, w1, w2, b, *, tm=256, tn=512,
                       out_dtype=jnp.float32):
    M, K1 = x1.shape
    K2 = x2.shape[1]
    N = w1.shape[1]
    x1 = x1.astype(jnp.bfloat16)
    x2 = x2.astype(jnp.bfloat16)
    tm = min(tm, max(8, _round_up(M, 8)))
    Mp = _round_up(M, tm)
    if Mp != M:
        x1 = jnp.pad(x1, ((0, Mp - M), (0, 0)))
        x2 = jnp.pad(x2, ((0, Mp - M), (0, 0)))
    if N % tn != 0:
        tn = N
    out = pl.pallas_call(
        _concat_linear_relu_kernel,
        out_shape=jax.ShapeDtypeStruct((Mp, N), out_dtype),
        grid_spec=pltpu.PrefetchScalarGridSpec(
            num_scalar_prefetch=0,
            grid=(Mp // tm, N // tn),
            in_specs=[
                pl.BlockSpec((tm, K1), lambda i, j: (i, 0)),
                pl.BlockSpec((tm, K2), lambda i, j: (i, 0)),
                pl.BlockSpec((K1, tn), lambda i, j: (0, j)),
                pl.BlockSpec((K2, tn), lambda i, j: (0, j)),
                pl.BlockSpec((1, tn), lambda i, j: (0, j)),
            ],
            out_specs=pl.BlockSpec((tm, tn), lambda i, j: (i, j)),
        ),
        compiler_params=pltpu.CompilerParams(
            dimension_semantics=("parallel", "parallel")),
    )(x1, x2, w1, w2, b)
    return out[:M]


# ----------------------------------------------------------------------------
# Parameters (deterministic synthetic init — shapes from VisualBranch_ican).
# Weights stored bf16 once (MXU operand dtype); biases f32 (1, N).
# ----------------------------------------------------------------------------
def init_params(key, c_in):
    ks = jax.random.split(key, 16)
    s = 0.02

    def w(k, shape):
        return (s * jax.random.normal(k, shape, jnp.float32)).astype(jnp.bfloat16)

    def bias(k, n):
        return s * jax.random.normal(k, (1, n), jnp.float32)

    return {
        # ObjectBranch_ican stub: C_in -> 2048
        "obj_w": w(ks[0], (c_in, 2048)), "obj_b": bias(ks[1], 2048),
        # ContextBranch_ican stub: 1x1-conv key / value heads (pre-split)
        "key_w": w(ks[2], (c_in, 512)), "key_b": bias(ks[3], 512),
        "val_w": w(ks[4], (c_in, 512)), "val_b": bias(ks[5], 512),
        # object_lin_transform: Linear(2048, 512) + ReLU
        "olin_w": w(ks[6], (2048, 512)), "olin_b": bias(ks[7], 512),
        # context_lin_transform: Linear(512, 1024) + ReLU
        "clin_w": w(ks[8], (512, 1024)), "clin_b": bias(ks[9], 1024),
        # concat_lin_transform: Linear(3072, 1024) + ReLU (pre-split along K)
        "cat_w1": w(ks[10], (2048, 1024)), "cat_w2": w(ks[11], (1024, 1024)),
        "cat_b": bias(ks[12], 1024),
    }


# ----------------------------------------------------------------------------
# Forward pass (glue in plain JAX, compute in the Pallas kernels above)
# ----------------------------------------------------------------------------
def visual_branch_forward(params, frame_feature_map, num_obj, obj_pairs, num_rels):
    # frame_feature_map: (B, C_in, H, W) float32 (NCHW, as in PyTorch)
    B, C_in, H, W = frame_feature_map.shape
    HW = H * W
    num_obj_np = np.asarray(num_obj)
    num_rels_np = np.asarray(num_rels)
    obj_pairs_np = np.asarray(obj_pairs)

    # --- host-side index metadata (vectorized numpy) -------------------------
    # TODO(synk): in a serving loop, pad num_obj/num_rels/obj_pairs to static
    # maxima (or use scalar-prefetch index maps) to avoid per-batch retraces.
    max_obj = max(int(num_obj_np.max()), 1)
    Qp = max(8, _round_up(max_obj, 8))
    obj_batch = np.repeat(np.arange(B), num_obj_np).astype(np.int64)
    obj_off = np.zeros(B, np.int64)
    obj_off[1:] = np.cumsum(num_obj_np)[:-1]
    n_obj_total = int(num_obj_np.sum())
    obj_local = np.arange(n_obj_total, dtype=np.int64) - np.repeat(obj_off, num_obj_np)
    flat_q_idx = jnp.asarray((obj_batch * Qp + obj_local).astype(np.int32))
    obj_slicing = jnp.asarray(obj_batch.astype(np.int32))

    rel_b = np.repeat(np.arange(B), num_rels_np).astype(np.int64)
    rel_j = np.concatenate(
        [np.arange(int(r), dtype=np.int64) for r in num_rels_np])
    p0 = jnp.asarray((obj_pairs_np[rel_b, rel_j, 0] + obj_off[rel_b]).astype(np.int32))
    p1 = jnp.asarray((obj_pairs_np[rel_b, rel_j, 1] + obj_off[rel_b]).astype(np.int32))

    # --- single layout pass: NCHW -> pixel-major slab (stays f32, cast in-kernel)
    x_pix = frame_feature_map.transpose(0, 2, 3, 1).reshape(B, HW, C_in)
    if HW > 256:
        HWp, thw = _round_up(HW, 256), 256
    else:
        HWp = _round_up(HW, 8)
        thw = HWp
    if HWp != HW:
        x_pix = jnp.pad(x_pix, ((0, 0), (0, HWp - HW), (0, 0)))

    # --- ContextBranch_ican (stub) + GAP, fused: feature map read once -------
    ctx_key, ctx_val, gap = context_branch_kv_gap(
        x_pix, params["key_w"], params["val_w"], params["key_b"], params["val_b"],
        hw=HW, thw=thw)                        # (B,HWp,512) bf16 x2, (B,C_in) f32

    # --- ObjectBranch_ican (stub) + object_lin_transform on B unique rows ----
    obj_rows, q_rows = object_branch_queries(
        gap, params["obj_w"], params["obj_b"],
        params["olin_w"], params["olin_b"])    # (B,2048) bf16, (B,512) bf16
    obj_branch_output = obj_rows[obj_slicing]  # (N_obj, 2048) bf16

    # --- iCAN attention + context_lin_transform (per-image grid) -------------
    ctx_tr_pad = ican_attention_clin(
        q_rows, ctx_key, ctx_val, params["clin_w"], params["clin_b"],
        qp=Qp, hw=HW)                                      # (B, Qp, 1024) bf16
    obj_ctx_tr = ctx_tr_pad.reshape(B * Qp, -1)[flat_q_idx]  # (N_obj, 1024) bf16

    # --- concat + concat_lin_transform (concat never materialized) -----------
    obj_concat_tr = concat_linear_relu(
        obj_branch_output, obj_ctx_tr,
        params["cat_w1"], params["cat_w2"], params["cat_b"])  # (N_obj, 1024) f32

    # --- pair_features: gather + aggregate('mean') ----------------------------
    paired = 0.5 * (jnp.take(obj_concat_tr, p0, axis=0)
                    + jnp.take(obj_concat_tr, p1, axis=0))    # (R, 1024) f32
    return paired


# ----------------------------------------------------------------------------
# Example run
# ----------------------------------------------------------------------------
if __name__ == "__main__":
    key = jax.random.PRNGKey(0)
    k_feat, k_par = jax.random.split(key)

    B, C_in, H, W = 2, 256, 16, 16
    frame_feature_map = jax.random.normal(k_feat, (B, C_in, H, W), jnp.float32)

    num_obj = np.array([3, 2], dtype=np.int32)                # 5 objects total
    num_rels = np.array([2, 1], dtype=np.int32)               # 3 relations total
    obj_pairs = np.array([[[0, 1], [1, 2]],                   # batch 0
                          [[0, 1], [0, 0]]], dtype=np.int32)  # batch 1 (2nd unused)

    params = init_params(k_par, C_in)

    out = visual_branch_forward(params, frame_feature_map, num_obj, obj_pairs,
                                num_rels)
    out = jax.block_until_ready(out)

    assert out.shape == (int(num_rels.sum()), 1024), out.shape
    assert bool(jnp.all(jnp.isfinite(out)))
    print("KERNEL_OK")
</pallas_src>

<mosaic_0001>
module attributes {stable_mosaic.version = 11 : i64} {
  func.func @_context_kv_gap_kernel(%arg0: i32, %arg1: i32, %arg2: memref<1x256x256xf32, #tpu.memory_space<vmem>>, %arg3: memref<256x512xbf16, #tpu.memory_space<vmem>>, %arg4: memref<256x512xbf16, #tpu.memory_space<vmem>>, %arg5: memref<1x512xf32, #tpu.memory_space<vmem>>, %arg6: memref<1x512xf32, #tpu.memory_space<vmem>>, %arg7: memref<1x256x512xbf16, #tpu.memory_space<vmem>>, %arg8: memref<1x256x512xbf16, #tpu.memory_space<vmem>>, %arg9: memref<1x1x256xf32, #tpu.memory_space<vmem>>) attributes {dimension_semantics = [#tpu.dimension_semantics<parallel>, #tpu.dimension_semantics<arbitrary>], iteration_bounds = array<i64: 2, 1>, scalar_prefetch = 0 : i64, scratch_operands = 0 : i64, tpu.core_type = #tpu.core_type<tc>, window_params = [{transform_indices = @transform_0, window_bounds = array<i64: 1, 256, 256>}, {pipeline_mode = #tpu.pipeline_mode<synchronous>, transform_indices = @transform_1, window_bounds = array<i64: 256, 512>}, {pipeline_mode = #tpu.pipeline_mode<synchronous>, transform_indices = @transform_2, window_bounds = array<i64: 256, 512>}, {pipeline_mode = #tpu.pipeline_mode<synchronous>, transform_indices = @transform_3, window_bounds = array<i64: 1, 512>}, {pipeline_mode = #tpu.pipeline_mode<synchronous>, transform_indices = @transform_4, window_bounds = array<i64: 1, 512>}, {transform_indices = @transform_5, window_bounds = array<i64: 1, 256, 512>}, {transform_indices = @transform_6, window_bounds = array<i64: 1, 256, 512>}, {transform_indices = @transform_7, window_bounds = array<i64: 1, 1, 256>}]} {
    %c0 = arith.constant 0 : index
    %c0_0 = arith.constant 0 : index
    %c0_1 = arith.constant 0 : index
    %0 = vector.load %arg2[%c0, %c0_0, %c0_1] : memref<1x256x256xf32, #tpu.memory_space<vmem>>, vector<1x256x256xf32>
    %1 = vector.shape_cast %0 : vector<1x256x256xf32> to vector<256x256xf32>
    %cst = arith.constant dense<0.000000e+00> : vector<256xf32>
    %2 = vector.multi_reduction <add>, %1, %cst [0] : vector<256x256xf32> to vector<256xf32>
    %3 = vector.shape_cast %2 : vector<256xf32> to vector<1x256xf32>
    %cst_2 = arith.constant 3.906250e-03 : f32
    %4 = vector.broadcast %cst_2 : f32 to vector<1x256xf32>
    %5 = arith.mulf %3, %4 : vector<1x256xf32>
    %c0_i32 = arith.constant 0 : i32
    %6 = arith.cmpi eq, %arg1, %c0_i32 : i32
    %7 = arith.extui %6 : i1 to i32
    %c0_i32_3 = arith.constant 0 : i32
    %8 = arith.cmpi ne, %7, %c0_i32_3 : i32
    scf.if %8 {
      %c0_24 = arith.constant 0 : index
      %c0_25 = arith.constant 0 : index
      %c0_26 = arith.constant 0 : index
      %35 = vector.load %arg9[%c0_24, %c0_25, %c0_26] : memref<1x1x256xf32, #tpu.memory_space<vmem>>, vector<1x1x256xf32>
      %36 = vector.shape_cast %35 : vector<1x1x256xf32> to vector<1x256xf32>
      %37 = vector.shape_cast %5 : vector<1x256xf32> to vector<1x1x256xf32>
      tpu.vector_store %arg9[%c0_24, %c0_25, %c0_26], %37 {strides = array<i32>} : memref<1x1x256xf32, #tpu.memory_space<vmem>>, vector<1x1x256xf32>,
    } else {
    }
    %c0_i32_4 = arith.constant 0 : i32
    %9 = arith.cmpi sgt, %arg1, %c0_i32_4 : i32
    %10 = arith.extui %9 : i1 to i32
    %c0_i32_5 = arith.constant 0 : i32
    %11 = arith.cmpi ne, %10, %c0_i32_5 : i32
    scf.if %11 {
      %c0_24 = arith.constant 0 : index
      %c0_25 = arith.constant 0 : index
      %c0_26 = arith.constant 0 : index
      %35 = vector.load %arg9[%c0_24, %c0_25, %c0_26] : memref<1x1x256xf32, #tpu.memory_space<vmem>>, vector<1x1x256xf32>
      %36 = vector.shape_cast %35 : vector<1x1x256xf32> to vector<1x256xf32>
      %37 = arith.addf %36, %5 : vector<1x256xf32>
      %c0_27 = arith.constant 0 : index
      %c0_28 = arith.constant 0 : index
      %c0_29 = arith.constant 0 : index
      %38 = vector.load %arg9[%c0_27, %c0_28, %c0_29] : memref<1x1x256xf32, #tpu.memory_space<vmem>>, vector<1x1x256xf32>
      %39 = vector.shape_cast %38 : vector<1x1x256xf32> to vector<1x256xf32>
      %40 = vector.shape_cast %37 : vector<1x256xf32> to vector<1x1x256xf32>
      tpu.vector_store %arg9[%c0_27, %c0_28, %c0_29], %40 {strides = array<i32>} : memref<1x1x256xf32, #tpu.memory_space<vmem>>, vector<1x1x256xf32>,
    } else {
    }
    %12 = arith.truncf %1 : vector<256x256xf32> to vector<256x256xbf16>
    %c0_6 = arith.constant 0 : index
    %c0_7 = arith.constant 0 : index
    %13 = vector.load %arg3[%c0_6, %c0_7] : memref<256x512xbf16, #tpu.memory_space<vmem>>, vector<256x512xbf16>
    %cst_8 = arith.constant dense<0.000000e+00> : vector<256x512xf32>
    %14 = tpu.matmul %12, %13, %cst_8 {dimension_numbers = #tpu.dot_dimension_numbers<[1], [0], [0], [1], [0, 0, 1, 1], [], []>} : vector<256x256xbf16>, vector<256x512xbf16>, vector<256x512xf32> -> vector<256x512xf32>
    %c0_9 = arith.constant 0 : index
    %c0_10 = arith.constant 0 : index
    %15 = vector.load %arg5[%c0_9, %c0_10] : memref<1x512xf32, #tpu.memory_space<vmem>>, vector<1x512xf32>
    %16 = vector.broadcast %15 : vector<1x512xf32> to vector<256x512xf32>
    %17 = arith.addf %14, %16 : vector<256x512xf32>
    %cst_11 = arith.constant 0.000000e+00 : f32
    %18 = vector.broadcast %cst_11 : f32 to vector<256x512xf32>
    %19 = arith.maximumf %17, %18 : vector<256x512xf32>
    %20 = arith.truncf %19 : vector<256x512xf32> to vector<256x512xbf16>
    %c0_12 = arith.constant 0 : index
    %c0_13 = arith.constant 0 : index
    %c0_14 = arith.constant 0 : index
    %21 = vector.load %arg7[%c0_12, %c0_13, %c0_14] : memref<1x256x512xbf16, #tpu.memory_space<vmem>>, vector<1x256x512xbf16>
    %22 = vector.shape_cast %21 : vector<1x256x512xbf16> to vector<256x512xbf16>
    %23 = vector.shape_cast %20 : vector<256x512xbf16> to vector<1x256x512xbf16>
    tpu.vector_store %arg7[%c0_12, %c0_13, %c0_14], %23 {strides = array<i32>} : memref<1x256x512xbf16, #tpu.memory_space<vmem>>, vector<1x256x512xbf16>,
    %c0_15 = arith.constant 0 : index
    %c0_16 = arith.constant 0 : index
    %24 = vector.load %arg4[%c0_15, %c0_16] : memref<256x512xbf16, #tpu.memory_space<vmem>>, vector<256x512xbf16>
    %cst_17 = arith.constant dense<0.000000e+00> : vector<256x512xf32>
    %25 = tpu.matmul %12, %24, %cst_17 {dimension_numbers = #tpu.dot_dimension_numbers<[1], [0], [0], [1], [0, 0, 1, 1], [], []>} : vector<256x256xbf16>, vector<256x512xbf16>, vector<256x512xf32> -> vector<256x512xf32>
    %c0_18 = arith.constant 0 : index
    %c0_19 = arith.constant 0 : index
    %26 = vector.load %arg6[%c0_18, %c0_19] : memref<1x512xf32, #tpu.memory_space<vmem>>, vector<1x512xf32>
    %27 = vector.broadcast %26 : vector<1x512xf32> to vector<256x512xf32>
    %28 = arith.addf %25, %27 : vector<256x512xf32>
    %cst_20 = arith.constant 0.000000e+00 : f32
    %29 = vector.broadcast %cst_20 : f32 to vector<256x512xf32>
    %30 = arith.maximumf %28, %29 : vector<256x512xf32>
    %31 = arith.truncf %30 : vector<256x512xf32> to vector<256x512xbf16>
    %c0_21 = arith.constant 0 : index
    %c0_22 = arith.constant 0 : index
    %c0_23 = arith.constant 0 : index
    %32 = vector.load %arg8[%c0_21, %c0_22, %c0_23] : memref<1x256x512xbf16, #tpu.memory_space<vmem>>, vector<1x256x512xbf16>
    %33 = vector.shape_cast %32 : vector<1x256x512xbf16> to vector<256x512xbf16>
    %34 = vector.shape_cast %31 : vector<256x512xbf16> to vector<1x256x512xbf16>
    tpu.vector_store %arg8[%c0_21, %c0_22, %c0_23], %34 {strides = array<i32>} : memref<1x256x512xbf16, #tpu.memory_space<vmem>>, vector<1x256x512xbf16>,
    return
  }
  func.func @transform_0(%arg0: i32, %arg1: i32) -> (i32, i32, i32) {
    %c0_i32 = arith.constant 0 : i32
    %c0_i32_0 = arith.constant 0 : i32
    return %arg0, %arg1, %c0_i32 : i32, i32, i32
  }
  func.func @transform_1(%arg0: i32, %arg1: i32) -> (i32, i32) {
    %c0_i32 = arith.constant 0 : i32
    %c0_i32_0 = arith.constant 0 : i32
    %c0_i32_1 = arith.constant 0 : i32
    return %c0_i32, %c0_i32_0 : i32, i32
  }
  func.func @transform_2(%arg0: i32, %arg1: i32) -> (i32, i32) {
    %c0_i32 = arith.constant 0 : i32
    %c0_i32_0 = arith.constant 0 : i32
    %c0_i32_1 = arith.constant 0 : i32
    return %c0_i32, %c0_i32_0 : i32, i32
  }
  func.func @transform_3(%arg0: i32, %arg1: i32) -> (i32, i32) {
    %c0_i32 = arith.constant 0 : i32
    %c0_i32_0 = arith.constant 0 : i32
    %c0_i32_1 = arith.constant 0 : i32
    return %c0_i32, %c0_i32_0 : i32, i32
  }
  func.func @transform_4(%arg0: i32, %arg1: i32) -> (i32, i32) {
    %c0_i32 = arith.constant 0 : i32
    %c0_i32_0 = arith.constant 0 : i32
    %c0_i32_1 = arith.constant 0 : i32
    return %c0_i32, %c0_i32_0 : i32, i32
  }
  func.func @transform_5(%arg0: i32, %arg1: i32) -> (i32, i32, i32) {
    %c0_i32 = arith.constant 0 : i32
    %c0_i32_0 = arith.constant 0 : i32
    return %arg0, %arg1, %c0_i32 : i32, i32, i32
  }
  func.func @transform_6(%arg0: i32, %arg1: i32) -> (i32, i32, i32) {
    %c0_i32 = arith.constant 0 : i32
    %c0_i32_0 = arith.constant 0 : i32
    return %arg0, %arg1, %c0_i32 : i32, i32, i32
  }
  func.func @transform_7(%arg0: i32, %arg1: i32) -> (i32, i32, i32) {
    %c0_i32 = arith.constant 0 : i32
    %c0_i32_0 = arith.constant 0 : i32
    %c0_i32_1 = arith.constant 0 : i32
    return %arg0, %c0_i32, %c0_i32_0 : i32, i32, i32
  }
}

</mosaic_0001>

<llo_original>
// kernel: tpu_custom_call.1
$region0: #{tpu_custom_call.1}
  #allocation0 [shape = 'u32[]', space=smem, size = 0x4, offset = 0x4, fixed_abs, tag = 'smem constant byte address 0x4 - core index']
  #allocation1 [shape = 'u32[144,128]{1,0:T(1,128)}', space=vmem, size = 0x12000, scoped, tag = 'internal scratch']
  %s0 = inlined_call_operand.hbm [shape: f32[2,256,256], index: 0, kind: input, shape index: {}]
  %s1 = inlined_call_operand.hbm [shape: bf16[256,512], index: 1, kind: input, shape index: {}]
  %s2 = inlined_call_operand.hbm [shape: bf16[256,512], index: 2, kind: input, shape index: {}]
  %s3 = inlined_call_operand.vmem [shape: f32[1,512], index: 3, kind: input, shape index: {}]
  %s4 = inlined_call_operand.hbm [shape: f32[1,512], index: 4, kind: input, shape index: {}]
  %s5 = inlined_call_operand.hbm [shape: bf16[2,256,512], index: 5, kind: output, shape index: {0}]
  %s6 = inlined_call_operand.hbm [shape: bf16[2,256,512], index: 6, kind: output, shape index: {1}]
  %s7 = inlined_call_operand.hbm [shape: f32[2,1,256], index: 7, kind: output, shape index: {2}]
  %8 = xla_tuple %s5, %s6, %s7
  %s9 = sld [smem:[#allocation0]]
  $region93: #{tpu_custom_call.1} parent=0
    _
  %s11 = ssub.s32 1, %s9
  %s12 = scalar_select 0, %s11, %s9
  $region1: #{tpu_custom_call.1} parent=0
    #allocation2 [shape = 'u8[524288]{0}', space=vmem, size = 0x80000, scoped, tag = 'input window, operand 0']
    #allocation3 [shape = 's32[2]{0}', space=sflag, size = 0x8, scoped, tag = 'scoped memory for tpu_custom_call.1']
    #allocation4 [shape = 's32[2]{0}', space=sflag, size = 0x8, scoped, tag = 'scoped memory for tpu_custom_call.1']
    #allocation5 [shape = 'u8[262144]{0}', space=vmem, size = 0x40000, scoped, tag = 'input window, operand 1, single buffered']
    #allocation6 [shape = 's32[1]{0}', space=sflag, size = 0x4, scoped, tag = 'scoped memory for tpu_custom_call.1']
    #allocation7 [shape = 'u8[262144]{0}', space=vmem, size = 0x40000, scoped, tag = 'input window, operand 2, single buffered']
    #allocation8 [shape = 'u8[2048]{0}', space=vmem, size = 0x800, scoped, tag = 'input window, operand 4, single buffered']
    #allocation9 [shape = 's32[1]{0}', space=sflag, size = 0x4, scoped, tag = 'scoped memory for tpu_custom_call.1']
    #allocation10 [shape = 'u8[524288]{0}', space=vmem, size = 0x80000, scoped, tag = 'output window, operand 0']
    #allocation11 [shape = 'u8[524288]{0}', space=vmem, size = 0x80000, scoped, tag = 'output window, operand 1']
    #allocation12 [shape = 's32[2]{0}', space=sflag, size = 0x8, scoped, tag = 'scoped memory for tpu_custom_call.1']
    #allocation13 [shape = 'u8[2048]{0}', space=vmem, size = 0x800, scoped, tag = 'output window, operand 2']
    %13 = vsyncpa [#allocation3], 0
    %s14 = scalar_lea.sflag [#allocation3], 1
    %15 = vsyncpa %s14, 0
    %16 = vsyncpa [#allocation6], 0
    %17 = vsyncpa [#allocation9], 0
    %18 = vsyncpa [#allocation4], 0
    %s19 = scalar_lea.sflag [#allocation4], 1
    %20 = vsyncpa %s19, 0
    %21 = vsyncpa [#allocation12], 0
    %s22 = scalar_lea.sflag [#allocation12], 1
    %23 = vsyncpa %s22, 0
    loop: start=0, step=1, limit=4
    $region2: #{tpu_custom_call.1} parent=1 // loop_pre_header
      _
    $region3: #{tpu_custom_call.1} parent=1 // loop_header
      %s25 = sphi 0, %s29
      %p26 = scmp.ge.s32.totalorder %s25, 4
      %s32 = sphi 0, %s44
      %s33 = sphi 0, %s40
      %s34 = sphi 0, %s32
      %s35 = sphi 0, %s33
      %s36 = sphi 0, %s34
      %s37 = sphi 0, %s35
      %s49 = sphi 0, %s51
      %s52 = sphi 0, %s49
      %s53 = sphi 0, %s52
      %s69 = sphi 0, %s53
      %s73 = sphi 0, %s73
      %s75 = sphi 0, %s73
      %s76 = sphi 0, %s75
      %s90 = sphi 0, %s76
      %s94 = sphi 0, %s94
      %s96 = sphi 0, %s94
      %s97 = sphi 0, %s96
      %s111 = sphi 0, %s97
      %s115 = sphi 0, %s115
      %s117 = sphi 0, %s115
      %s118 = sphi 0, %s117
      %s132 = sphi 0, %s118
      %s136 = sphi 0, %s136
      %s138 = sphi 0, %s136
      %s139 = sphi 0, %s138
      %s153 = sphi 0, %s139
      %s161 = sphi 0, %s163
      %s164 = sphi 0, %s161
      %s165 = sphi 0, %s164
      %s181 = sphi 0, %s165
      %s189 = sphi 0, %s191
      %s192 = sphi 0, %s189
      %s193 = sphi 0, %s192
      %s209 = sphi 0, %s193
      %s215 = sphi 0, %s217
      %s218 = sphi 0, %s215
      %s219 = sphi 0, %s218
      %s235 = sphi 0, %s219
    $region4: #{tpu_custom_call.1} parent=1 // loop_header_branch
      %28 = sbr.rel (%p26) target = $region8
    $region5: #{tpu_custom_call.1} parent=1 // loop_body
      %s30 = ssub.s32 %s25, 1
      %s31 = ssub.s32 %s25, 2
      %s38 = sadd.s32 1, %s33
      %p39 = scmp.ge.s32.totalorder %s38, 1
      %s40 = scalar_select %p39, 0, %s38
      %s41 = sadd.s32 1, %s32
      %s42 = scalar_select %p39, %s41, %s32
      %p43 = scmp.ge.s32.totalorder %s42, 2
      %s44 = scalar_select %p43, 0, %s42
      %s45 = ssub.s32 %s32, %s44
      %s46 = ssub.s32 %s33, %s40
      %s47 = sor.u32 %s45, %s46
      %p48 = scmp.eq.s32.totalorder %s47, 0
      %s50 = sadd.s32 %s49, 1
      %s51 = scalar_select %p48, %s49, %s50
      %p54 = pneg %p48
      %p55 = scmp.eq.s32.totalorder %s25, 1
      %p56 = por %p54, %p55
      %p57 = scmp.ne.s32.totalorder %s49, %s52
      %p58 = scmp.eq.s32.totalorder %s25, 0
      %p59 = por %p57, %p58
      %p60 = scmp.ne.s32.totalorder %s49, %s52
      %p61 = scmp.eq.s32.totalorder %s30, 1
      %p62 = por %p60, %p61
      %p63 = scmp.ne.s32.totalorder %s52, %s53
      %p64 = scmp.eq.s32.totalorder %s30, 0
      %p65 = por %p63, %p64
      %p66 = scmp.ne.s32.totalorder %s52, %s53
      %p67 = scmp.eq.s32.totalorder %s31, 1
      %p68 = por %p66, %p67
      %p70 = scmp.ne.s32.totalorder %s53, %s69
      %p71 = scmp.eq.s32.totalorder %s31, 0
      %p72 = por %p70, %p71
      %s74 = sadd.s32 %s73, 1
      %p77 = scmp.eq.s32.totalorder %s25, 1
      %p78 = scmp.ne.s32.totalorder %s73, %s75
      %p79 = scmp.eq.s32.totalorder %s25, 0
      %p80 = por %p78, %p79
      %p81 = scmp.ne.s32.totalorder %s73, %s75
      %p82 = scmp.eq.s32.totalorder %s30, 1
      %p83 = por %p81, %p82
      %p84 = scmp.ne.s32.totalorder %s75, %s76
      %p85 = scmp.eq.s32.totalorder %s30, 0
      %p86 = por %p84, %p85
      %p87 = scmp.ne.s32.totalorder %s75, %s76
      %p88 = scmp.eq.s32.totalorder %s31, 1
      %p89 = por %p87, %p88
      %p91 = scmp.ne.s32.totalorder %s76, %s90
      %p92 = scmp.eq.s32.totalorder %s31, 0
      %p93 = por %p91, %p92
      %s95 = sadd.s32 %s94, 1
      %p98 = scmp.eq.s32.totalorder %s25, 1
      %p99 = scmp.ne.s32.totalorder %s94, %s96
      %p100 = scmp.eq.s32.totalorder %s25, 0
      %p101 = por %p99, %p100
      %p102 = scmp.ne.s32.totalorder %s94, %s96
      %p103 = scmp.eq.s32.totalorder %s30, 1
      %p104 = por %p102, %p103
      %p105 = scmp.ne.s32.totalorder %s96, %s97
      %p106 = scmp.eq.s32.totalorder %s30, 0
      %p107 = por %p105, %p106
      %p108 = scmp.ne.s32.totalorder %s96, %s97
      %p109 = scmp.eq.s32.totalorder %s31, 1
      %p110 = por %p108, %p109
      %p112 = scmp.ne.s32.totalorder %s97, %s111
      %p113 = scmp.eq.s32.totalorder %s31, 0
      %p114 = por %p112, %p113
      %s116 = sadd.s32 %s115, 1
      %p119 = scmp.eq.s32.totalorder %s25, 1
      %p120 = scmp.ne.s32.totalorder %s115, %s117
      %p121 = scmp.eq.s32.totalorder %s25, 0
      %p122 = por %p120, %p121
      %p123 = scmp.ne.s32.totalorder %s115, %s117
      %p124 = scmp.eq.s32.totalorder %s30, 1
      %p125 = por %p123, %p124
      %p126 = scmp.ne.s32.totalorder %s117, %s118
      %p127 = scmp.eq.s32.totalorder %s30, 0
      %p128 = por %p126, %p127
      %p129 = scmp.ne.s32.totalorder %s117, %s118
      %p130 = scmp.eq.s32.totalorder %s31, 1
      %p131 = por %p129, %p130
      %p133 = scmp.ne.s32.totalorder %s118, %s132
      %p134 = scmp.eq.s32.totalorder %s31, 0
      %p135 = por %p133, %p134
      %s137 = sadd.s32 %s136, 1
      %p140 = scmp.eq.s32.totalorder %s25, 1
      %p141 = scmp.ne.s32.totalorder %s136, %s138
      %p142 = scmp.eq.s32.totalorder %s25, 0
      %p143 = por %p141, %p142
      %p144 = scmp.ne.s32.totalorder %s136, %s138
      %p145 = scmp.eq.s32.totalorder %s30, 1
      %p146 = por %p144, %p145
      %p147 = scmp.ne.s32.totalorder %s138, %s139
      %p148 = scmp.eq.s32.totalorder %s30, 0
      %p149 = por %p147, %p148
      %p150 = scmp.ne.s32.totalorder %s138, %s139
      %p151 = scmp.eq.s32.totalorder %s31, 1
      %p152 = por %p150, %p151
      %p154 = scmp.ne.s32.totalorder %s139, %s153
      %p155 = scmp.eq.s32.totalorder %s31, 0
      %p156 = por %p154, %p155
      %s157 = ssub.s32 %s32, %s44
      %s158 = ssub.s32 %s33, %s40
      %s159 = sor.u32 %s157, %s158
      %p160 = scmp.eq.s32.totalorder %s159, 0
      %s162 = sadd.s32 %s161, 1
      %s163 = scalar_select %p160, %s161, %s162
      %p166 = pneg %p160
      %p167 = scmp.eq.s32.totalorder %s25, 1
      %p168 = por %p166, %p167
      %p169 = scmp.ne.s32.totalorder %s161, %s164
      %p170 = scmp.eq.s32.totalorder %s25, 0
      %p171 = por %p169, %p170
      %p172 = scmp.ne.s32.totalorder %s161, %s164
      %p173 = scmp.eq.s32.totalorder %s30, 1
      %p174 = por %p172, %p173
      %p175 = scmp.ne.s32.totalorder %s164, %s165
      %p176 = scmp.eq.s32.totalorder %s30, 0
      %p177 = por %p175, %p176
      %p178 = scmp.ne.s32.totalorder %s164, %s165
      %p179 = scmp.eq.s32.totalorder %s31, 1
      %p180 = por %p178, %p179
      %p182 = scmp.ne.s32.totalorder %s165, %s181
      %p183 = scmp.eq.s32.totalorder %s31, 0
      %p184 = por %p182, %p183
      %s185 = ssub.s32 %s32, %s44
      %s186 = ssub.s32 %s33, %s40
      %s187 = sor.u32 %s185, %s186
      %p188 = scmp.eq.s32.totalorder %s187, 0
      %s190 = sadd.s32 %s189, 1
      %s191 = scalar_select %p188, %s189, %s190
      %p194 = pneg %p188
      %p195 = scmp.eq.s32.totalorder %s25, 1
      %p196 = por %p194, %p195
      %p197 = scmp.ne.s32.totalorder %s189, %s192
      %p198 = scmp.eq.s32.totalorder %s25, 0
      %p199 = por %p197, %p198
      %p200 = scmp.ne.s32.totalorder %s189, %s192
      %p201 = scmp.eq.s32.totalorder %s30, 1
      %p202 = por %p200, %p201
      %p203 = scmp.ne.s32.totalorder %s192, %s193
      %p204 = scmp.eq.s32.totalorder %s30, 0
      %p205 = por %p203, %p204
      %p206 = scmp.ne.s32.totalorder %s192, %s193
      %p207 = scmp.eq.s32.totalorder %s31, 1
      %p208 = por %p206, %p207
      %p210 = scmp.ne.s32.totalorder %s193, %s209
      %p211 = scmp.eq.s32.totalorder %s31, 0
      %p212 = por %p210, %p211
      %s213 = ssub.s32 %s32, %s44
      %p214 = scmp.eq.s32.totalorder %s213, 0
      %s216 = sadd.s32 %s215, 1
      %s217 = scalar_select %p214, %s215, %s216
      %p220 = pneg %p214
      %p221 = scmp.eq.s32.totalorder %s25, 1
      %p222 = por %p220, %p221
      %p223 = scmp.ne.s32.totalorder %s215, %s218
      %p224 = scmp.eq.s32.totalorder %s25, 0
      %p225 = por %p223, %p224
      %p226 = scmp.ne.s32.totalorder %s215, %s218
      %p227 = scmp.eq.s32.totalorder %s30, 1
      %p228 = por %p226, %p227
      %p229 = scmp.ne.s32.totalorder %s218, %s219
      %p230 = scmp.eq.s32.totalorder %s30, 0
      %p231 = por %p229, %p230
      %p232 = scmp.ne.s32.totalorder %s218, %s219
      %p233 = scmp.eq.s32.totalorder %s31, 1
      %p234 = por %p232, %p233
      %p236 = scmp.ne.s32.totalorder %s219, %s235
      %p237 = scmp.eq.s32.totalorder %s31, 0
      %p238 = por %p236, %p237
      %p239 = scmp.le.s32.totalorder 1, %s25
      %p240 = scmp.lt.s32.totalorder %s25, 3
      %p241 = pnand %p239, %p240
      %p242 = pneg %p241
      // Predicated region
      $region9: #{tpu_custom_call.1} parent=5 // pred_check
        _
      $region10: #{tpu_custom_call.1} parent=5 // pred_check_branch
        %244 = sbr.rel (%p241) target = $region12
      $region11: #{tpu_custom_call.1} parent=5 // pred_region
        %s245 = ssub.s32 %s25, 1
        // Predicated region
        $region13: #{tpu_custom_call.1} parent=11 // pred_check
          %p246 = pneg %p86
        $region14: #{tpu_custom_call.1} parent=11 // pred_check_branch
          %248 = sbr.rel (%p246) target = $region16
        $region15: #{tpu_custom_call.1} parent=11 // pred_region
          %s250 = ssub.s32 8192, 8192
          %251 = vsyncadd [#allocation6], %s250
          %s252 = sshll.u32 [#allocation5], 4
          %s253 = int_to_ptr.vmem [resolvable:$true] %s252
          %258 = dma.hbm_to_vmem [thread:$0]  %s1, 8192, %s253, [#allocation6], 256, 256, 16
        $region16: #{tpu_custom_call.1} parent=11 // pred_fallthru
          _
        // Predicated region
        $region17: #{tpu_custom_call.1} parent=11 // pred_check
          %p259 = pneg %p107
        $region18: #{tpu_custom_call.1} parent=11 // pred_check_branch
          %261 = sbr.rel (%p259) target = $region20
        $region19: #{tpu_custom_call.1} parent=11 // pred_region
          %s263 = ssub.s32 8192, 8192
          %264 = vsyncadd [#allocation6], %s263
          %s265 = sshll.u32 [#allocation7], 4
          %s266 = int_to_ptr.vmem [resolvable:$true] %s265
          %271 = dma.hbm_to_vmem [thread:$0]  %s2, 8192, %s266, [#allocation6], 256, 256, 16
        $region20: #{tpu_custom_call.1} parent=11 // pred_fallthru
          _
        // Predicated region
        $region21: #{tpu_custom_call.1} parent=11 // pred_check
          %p272 = pneg %p128
        $region22: #{tpu_custom_call.1} parent=11 // pred_check_branch
          %274 = sbr.rel (%p272) target = $region24
        $region23: #{tpu_custom_call.1} parent=11 // pred_region
          _
        $region24: #{tpu_custom_call.1} parent=11 // pred_fallthru
          _
        // Predicated region
        $region25: #{tpu_custom_call.1} parent=11 // pred_check
          %p275 = pneg %p149
        $region26: #{tpu_custom_call.1} parent=11 // pred_check_branch
          %277 = sbr.rel (%p275) target = $region28
        $region27: #{tpu_custom_call.1} parent=11 // pred_region
          %s279 = ssub.s32 64, 64
          %280 = vsyncadd [#allocation9], %s279
          %s282 = sshll.u32 [#allocation8], 4
          %s283 = int_to_ptr.vmem [resolvable:$true] %s282
          %285 = dma.hbm_to_vmem [thread:$0]  %s4, 64, %s283, [#allocation9]
        $region28: #{tpu_custom_call.1} parent=11 // pred_fallthru
          _
      $region12: #{tpu_custom_call.1} parent=5 // pred_fallthru
        _
      %p286 = scmp.lt.s32.totalorder %s25, 2
      // Predicated region
      $region29: #{tpu_custom_call.1} parent=5 // pred_check
        %p287 = pneg %p286
      $region30: #{tpu_custom_call.1} parent=5 // pred_check_branch
        %289 = sbr.rel (%p287) target = $region32
      $region31: #{tpu_custom_call.1} parent=5 // pred_region
        // Predicated region
        $region33: #{tpu_custom_call.1} parent=31 // pred_check
          %p290 = pneg %p59
        $region34: #{tpu_custom_call.1} parent=31 // pred_check_branch
          %292 = sbr.rel (%p290) target = $region36
        $region35: #{tpu_custom_call.1} parent=31 // pred_region
          %s293 = sand.u32 %s49, 1
          %s294 = scalar_lea.sflag [#allocation3], %s293
          %s295 = sand.u32 %s49, 1
          %s296 = smul.addr %s295, 512
          %s297 = scalar_lea.vmem [#allocation2], %s296
          %s298 = smul.u32 32, %s33
          %s300 = ssub.s32 8192, 8192
          %301 = vsyncadd %s294, %s300
          %s302 = smul.addr %s298, 2
          %s303 = smul.addr %s32, 64
          %s304 = sadd.s32 %s302, %s303
          %s305 = smul.addr %s304, 128
          %s306 = scalar_lea.hbm %s0, %s305
          %s307 = sshll.u32 %s297, 4
          %s308 = int_to_ptr.vmem [resolvable:$true] %s307
          %313 = dma.hbm_to_vmem [thread:$0]  %s306, 8192, %s308, %s294, 256, 256, 16
        $region36: #{tpu_custom_call.1} parent=31 // pred_fallthru
          _
      $region32: #{tpu_custom_call.1} parent=5 // pred_fallthru
        _
      %p314 = scmp.le.s32.totalorder 1, %s25
      %p315 = scmp.lt.s32.totalorder %s25, 3
      %p316 = pnand %p314, %p315
      %p317 = pneg %p316
      // Predicated region
      $region37: #{tpu_custom_call.1} parent=5 // pred_check
        _
      $region38: #{tpu_custom_call.1} parent=5 // pred_check_branch
        %319 = sbr.rel (%p316) target = $region40
      $region39: #{tpu_custom_call.1} parent=5 // pred_region
        %s320 = ssub.s32 %s25, 1
        %s321 = sand.u32 %s52, 1
        %s322 = scalar_lea.sflag [#allocation3], %s321
        %s323 = sand.u32 %s52, 1
        %s324 = smul.addr %s323, 512
        %s325 = scalar_lea.vmem [#allocation2], %s324
        // Predicated region
        $region41: #{tpu_custom_call.1} parent=39 // pred_check
          %p326 = pneg %p65
        $region42: #{tpu_custom_call.1} parent=39 // pred_check_branch
          %328 = sbr.rel (%p326) target = $region44
        $region43: #{tpu_custom_call.1} parent=39 // pred_region
          %329 = dma.done %s322, 8192
        $region44: #{tpu_custom_call.1} parent=39 // pred_fallthru
          _
        // Predicated region
        $region45: #{tpu_custom_call.1} parent=39 // pred_check
          %p330 = pneg %p86
        $region46: #{tpu_custom_call.1} parent=39 // pred_check_branch
          %332 = sbr.rel (%p330) target = $region48
        $region47: #{tpu_custom_call.1} parent=39 // pred_region
          %333 = dma.done [#allocation6], 8192
        $region48: #{tpu_custom_call.1} parent=39 // pred_fallthru
          _
        // Predicated region
        $region49: #{tpu_custom_call.1} parent=39 // pred_check
          %p334 = pneg %p107
        $region50: #{tpu_custom_call.1} parent=39 // pred_check_branch
          %336 = sbr.rel (%p334) target = $region52
        $region51: #{tpu_custom_call.1} parent=39 // pred_region
          %337 = dma.done [#allocation6], 8192
        $region52: #{tpu_custom_call.1} parent=39 // pred_fallthru
          _
        // Predicated region
        $region53: #{tpu_custom_call.1} parent=39 // pred_check
          %p338 = pneg %p149
        $region54: #{tpu_custom_call.1} parent=39 // pred_check_branch
          %340 = sbr.rel (%p338) target = $region56
        $region55: #{tpu_custom_call.1} parent=39 // pred_region
          %341 = dma.done [#allocation9], 64
        $region56: #{tpu_custom_call.1} parent=39 // pred_fallthru
          _
        %s342 = sand.u32 %s52, 1
        %s343 = scalar_lea.sflag [#allocation3], %s342
        %s344 = sand.u32 %s52, 1
        %s345 = smul.addr %s344, 512
        %s346 = scalar_lea.vmem [#allocation2], %s345
        %p347 = pneg %p65
        %p348 = pneg %p62
        %p349 = pneg %p86
        %p350 = pneg %p83
        %p351 = pneg %p107
        %p352 = pneg %p104
        %p353 = pneg %p128
        %p354 = pneg %p125
        %p355 = pneg %p149
        %p356 = pneg %p146
        %p357 = pneg %p177
        %p358 = pneg %p174
        %s359 = sand.u32 %s164, 1
        %s360 = scalar_lea.sflag [#allocation4], %s359
        %s361 = sand.u32 %s164, 1
        %s362 = smul.addr %s361, 512
        %s363 = scalar_lea.vmem [#allocation10], %s362
        %p364 = pneg %p205
        %p365 = pneg %p202
        %s366 = sand.u32 %s30, 1
        %s367 = scalar_lea.sflag [#allocation12], %s366
        %s368 = sand.u32 %s192, 1
        %s369 = smul.addr %s368, 512
        %s370 = scalar_lea.vmem [#allocation11], %s369
        %p371 = pneg %p231
        %p372 = pneg %p228
        %s373 = sand.u32 %s30, 1
        %s374 = scalar_lea.sflag [#allocation12], %s373
        %s375 = sand.u32 %s218, 1
        %s376 = smul.addr %s375, 2
        %s377 = scalar_lea.vmem [#allocation13], %s376
        %s378 = smul.u32 32, %s35
        %s379 = smul.u32 32, %s35
        %s380 = smul.u32 32, %s35
        %v381 = vld [vmem:[%s325] sm:$0xff]
        %v382 = vld [vmem:[%s325 + $0x8] sm:$0xff]
        %v383 = vld [vmem:[%s325 + $0x10] sm:$0xff]
        %v384 = vld [vmem:[%s325 + $0x18] sm:$0xff]
        %v385 = vld [vmem:[%s325 + $0x20] sm:$0xff]
        %v386 = vld [vmem:[%s325 + $0x28] sm:$0xff]
        %v387 = vld [vmem:[%s325 + $0x30] sm:$0xff]
        %v388 = vld [vmem:[%s325 + $0x38] sm:$0xff]
        %v389 = vld [vmem:[%s325 + $0x40] sm:$0xff]
        %v390 = vld [vmem:[%s325 + $0x48] sm:$0xff]
        %v391 = vld [vmem:[%s325 + $0x50] sm:$0xff]
        %v392 = vld [vmem:[%s325 + $0x58] sm:$0xff]
        %v393 = vld [vmem:[%s325 + $0x60] sm:$0xff]
        %v394 = vld [vmem:[%s325 + $0x68] sm:$0xff]
        %v395 = vld [vmem:[%s325 + $0x70] sm:$0xff]
        %v396 = vld [vmem:[%s325 + $0x78] sm:$0xff]
        %v397 = vld [vmem:[%s325 + $0x80] sm:$0xff]
        %v398 = vld [vmem:[%s325 + $0x88] sm:$0xff]
        %v399 = vld [vmem:[%s325 + $0x90] sm:$0xff]
        %v400 = vld [vmem:[%s325 + $0x98] sm:$0xff]
        %v401 = vld [vmem:[%s325 + $0xa0] sm:$0xff]
        %v402 = vld [vmem:[%s325 + $0xa8] sm:$0xff]
        %v403 = vld [vmem:[%s325 + $0xb0] sm:$0xff]
        %v404 = vld [vmem:[%s325 + $0xb8] sm:$0xff]
        %v405 = vld [vmem:[%s325 + $0xc0] sm:$0xff]
        %v406 = vld [vmem:[%s325 + $0xc8] sm:$0xff]
        %v407 = vld [vmem:[%s325 + $0xd0] sm:$0xff]
        %v408 = vld [vmem:[%s325 + $0xd8] sm:$0xff]
        %v409 = vld [vmem:[%s325 + $0xe0] sm:$0xff]
        %v410 = vld [vmem:[%s325 + $0xe8] sm:$0xff]
        %v411 = vld [vmem:[%s325 + $0xf0] sm:$0xff]
        %v412 = vld [vmem:[%s325 + $0xf8] sm:$0xff]
        %v413 = vld [vmem:[%s325 + $0x100] sm:$0xff]
        %v414 = vld [vmem:[%s325 + $0x108] sm:$0xff]
        %v415 = vld [vmem:[%s325 + $0x110] sm:$0xff]
        %v416 = vld [vmem:[%s325 + $0x118] sm:$0xff]
        %v417 = vld [vmem:[%s325 + $0x120] sm:$0xff]
        %v418 = vld [vmem:[%s325 + $0x128] sm:$0xff]
        %v419 = vld [vmem:[%s325 + $0x130] sm:$0xff]
        %v420 = vld [vmem:[%s325 + $0x138] sm:$0xff]
        %v421 = vld [vmem:[%s325 + $0x140] sm:$0xff]
        %v422 = vld [vmem:[%s325 + $0x148] sm:$0xff]
        %v423 = vld [vmem:[%s325 + $0x150] sm:$0xff]
        %v424 = vld [vmem:[%s325 + $0x158] sm:$0xff]
        %v425 = vld [vmem:[%s325 + $0x160] sm:$0xff]
        %v426 = vld [vmem:[%s325 + $0x168] sm:$0xff]
        %v427 = vld [vmem:[%s325 + $0x170] sm:$0xff]
        %v428 = vld [vmem:[%s325 + $0x178] sm:$0xff]
        %v429 = vld [vmem:[%s325 + $0x180] sm:$0xff]
        %v430 = vld [vmem:[%s325 + $0x188] sm:$0xff]
        %v431 = vld [vmem:[%s325 + $0x190] sm:$0xff]
        %v432 = vld [vmem:[%s325 + $0x198] sm:$0xff]
        %v433 = vld [vmem:[%s325 + $0x1a0] sm:$0xff]
        %v434 = vld [vmem:[%s325 + $0x1a8] sm:$0xff]
        %v435 = vld [vmem:[%s325 + $0x1b0] sm:$0xff]
        %v436 = vld [vmem:[%s325 + $0x1b8] sm:$0xff]
        %v437 = vld [vmem:[%s325 + $0x1c0] sm:$0xff]
        %v438 = vld [vmem:[%s325 + $0x1c8] sm:$0xff]
        %v439 = vld [vmem:[%s325 + $0x1d0] sm:$0xff]
        %v440 = vld [vmem:[%s325 + $0x1d8] sm:$0xff]
        %v441 = vld [vmem:[%s325 + $0x1e0] sm:$0xff]
        %v442 = vld [vmem:[%s325 + $0x1e8] sm:$0xff]
        %v443 = vld [vmem:[%s325 + $0x1f0] sm:$0xff]
        %v444 = vld [vmem:[%s325 + $0x1f8] sm:$0xff]
        %v445 = vadd.f32 %v381, %v383
        %v446 = vadd.f32 %v445, %v385
        %v447 = vadd.f32 %v446, %v387
        %v448 = vadd.f32 %v447, %v389
        %v449 = vadd.f32 %v448, %v391
        %v450 = vadd.f32 %v449, %v393
        %v451 = vadd.f32 %v450, %v395
        %v452 = vadd.f32 %v451, %v397
        %v453 = vadd.f32 %v452, %v399
        %v454 = vadd.f32 %v453, %v401
        %v455 = vadd.f32 %v454, %v403
        %v456 = vadd.f32 %v455, %v405
        %v457 = vadd.f32 %v456, %v407
        %v458 = vadd.f32 %v457, %v409
        %v459 = vadd.f32 %v458, %v411
        %v460 = vadd.f32 %v459, %v413
        %v461 = vadd.f32 %v460, %v415
        %v462 = vadd.f32 %v461, %v417
        %v463 = vadd.f32 %v462, %v419
        %v464 = vadd.f32 %v463, %v421
        %v465 = vadd.f32 %v464, %v423
        %v466 = vadd.f32 %v465, %v425
        %v467 = vadd.f32 %v466, %v427
        %v468 = vadd.f32 %v467, %v429
        %v469 = vadd.f32 %v468, %v431
        %v470 = vadd.f32 %v469, %v433
        %v471 = vadd.f32 %v470, %v435
        %v472 = vadd.f32 %v471, %v437
        %v473 = vadd.f32 %v472, %v439
        %v474 = vadd.f32 %v473, %v441
        %v475 = vadd.f32 %v474, %v443
        %v476 = vrot.slane %v475, 4
        %v477 = vadd.f32 %v475, %v476
        %v478 = vrot.slane %v477, 2
        %v479 = vadd.f32 %v477, %v478
        %v480 = vrot.slane %v479, 1
        %v481 = vadd.f32 %v479, %v480
        %v482 = vadd.f32 %v382, %v384
        %v483 = vadd.f32 %v482, %v386
        %v484 = vadd.f32 %v483, %v388
        %v485 = vadd.f32 %v484, %v390
        %v486 = vadd.f32 %v485, %v392
        %v487 = vadd.f32 %v486, %v394
        %v488 = vadd.f32 %v487, %v396
        %v489 = vadd.f32 %v488, %v398
        %v490 = vadd.f32 %v489, %v400
        %v491 = vadd.f32 %v490, %v402
        %v492 = vadd.f32 %v491, %v404
        %v493 = vadd.f32 %v492, %v406
        %v494 = vadd.f32 %v493, %v408
        %v495 = vadd.f32 %v494, %v410
        %v496 = vadd.f32 %v495, %v412
        %v497 = vadd.f32 %v496, %v414
        %v498 = vadd.f32 %v497, %v416
        %v499 = vadd.f32 %v498, %v418
        %v500 = vadd.f32 %v499, %v420
        %v501 = vadd.f32 %v500, %v422
        %v502 = vadd.f32 %v501, %v424
        %v503 = vadd.f32 %v502, %v426
        %v504 = vadd.f32 %v503, %v428
        %v505 = vadd.f32 %v504, %v430
        %v506 = vadd.f32 %v505, %v432
        %v507 = vadd.f32 %v506, %v434
        %v508 = vadd.f32 %v507, %v436
        %v509 = vadd.f32 %v508, %v438
        %v510 = vadd.f32 %v509, %v440
        %v511 = vadd.f32 %v510, %v442
        %v512 = vadd.f32 %v511, %v444
        %v513 = vrot.slane %v512, 4
        %v514 = vadd.f32 %v512, %v513
        %v515 = vrot.slane %v514, 2
        %v516 = vadd.f32 %v514, %v515
        %v517 = vrot.slane %v516, 1
        %v518 = vadd.f32 %v516, %v517
        %v519 = vmul.f32 %v481, 0.00390625
        %v520 = vmul.f32 %v518, 0.00390625
        %p521 = scmp.eq.s32.totalorder %s35, 0
        // Predicated region
        $region57: #{tpu_custom_call.1} parent=39 // pred_check
          %p522 = pneg %p521
        $region58: #{tpu_custom_call.1} parent=39 // pred_check_branch
          %524 = sbr.rel (%p522) target = $region60
        $region59: #{tpu_custom_call.1} parent=39 // pred_region
          %v527 = vcombine.low %v519, %v520
          %v529 = vunpack.c.l.s4 1966171168
          %v530 = vunpack.c.0.s8 %v529
          %v531 = vlaneseq
          %v532 = vshrl.u32 %v531, 7
          %v533 = vsub.s32 %v530, %v532
          %v534 = vrot.slane %v527, %v533
          %v536 = vunpack.c.l.s4 1966171168
          %v537 = vunpack.c.0.s8 %v536
          %v538 = vlaneseq
          %v539 = vshrl.u32 %v538, 7
          %v540 = vsub.s32 %v537, %v539
          %v541 = vrot.slane %v534, %v540
          %v543 = vlaneseq
          %vm544 = vcmp.ge.s32.totalorder %v543, 0
          %vm545 = vcmp.lt.s32.totalorder %v543, 256
          %vm546 = vmand %vm544, %vm545
          %547 = vst.msk [vmem:[%s377] sm:$0x3] %vm546, %v541
        $region60: #{tpu_custom_call.1} parent=39 // pred_fallthru
          _
        %p548 = scmp.gt.s32.totalorder %s35, 0
        // Predicated region
        $region61: #{tpu_custom_call.1} parent=39 // pred_check
          %p549 = pneg %p548
        $region62: #{tpu_custom_call.1} parent=39 // pred_check_branch
          %551 = sbr.rel (%p549) target = $region64
        $region63: #{tpu_custom_call.1} parent=39 // pred_region
          %v552 = vld [vmem:[%s377] sm:$0x3]
          %v555 = vcombine.low %v519, %v520
          %v557 = vunpack.c.l.s4 1966171168
          %v558 = vunpack.c.0.s8 %v557
          %v559 = vlaneseq
          %v560 = vshrl.u32 %v559, 7
          %v561 = vsub.s32 %v558, %v560
          %v562 = vrot.slane %v555, %v561
          %v564 = vunpack.c.l.s4 1966171168
          %v565 = vunpack.c.0.s8 %v564
          %v566 = vlaneseq
          %v567 = vshrl.u32 %v566, 7
          %v568 = vsub.s32 %v565, %v567
          %v569 = vrot.slane %v562, %v568
          %v571 = vadd.f32 %v552, %v569
          %v572 = vlaneseq
          %vm573 = vcmp.ge.s32.totalorder %v572, 0
          %vm574 = vcmp.lt.s32.totalorder %v572, 256
          %vm575 = vmand %vm573, %vm574
          %576 = vst.msk [vmem:[%s377] sm:$0x3] %vm575, %v571
        $region64: #{tpu_custom_call.1} parent=39 // pred_fallthru
          _
        %v577 = vpack.c.bf16 %v383, %v381
        %v578 = vpack.c.bf16 %v384, %v382
        %v579 = vpack.c.bf16 %v387, %v385
        %v580 = vpack.c.bf16 %v388, %v386
        %v581 = vpack.c.bf16 %v391, %v389
        %v582 = vpack.c.bf16 %v392, %v390
        %v583 = vpack.c.bf16 %v395, %v393
        %v584 = vpack.c.bf16 %v396, %v394
        %v585 = vpack.c.bf16 %v399, %v397
        %v586 = vpack.c.bf16 %v400, %v398
        %v587 = vpack.c.bf16 %v403, %v401
        %v588 = vpack.c.bf16 %v404, %v402
        %v589 = vpack.c.bf16 %v407, %v405
        %v590 = vpack.c.bf16 %v408, %v406
        %v591 = vpack.c.bf16 %v411, %v409
        %v592 = vpack.c.bf16 %v412, %v410
        %v593 = vpack.c.bf16 %v415, %v413
        %v594 = vpack.c.bf16 %v416, %v414
        %v595 = vpack.c.bf16 %v419, %v417
        %v596 = vpack.c.bf16 %v420, %v418
        %v597 = vpack.c.bf16 %v423, %v421
        %v598 = vpack.c.bf16 %v424, %v422
        %v599 = vpack.c.bf16 %v427, %v425
        %v600 = vpack.c.bf16 %v428, %v426
        %v601 = vpack.c.bf16 %v431, %v429
        %v602 = vpack.c.bf16 %v432, %v430
        %v603 = vpack.c.bf16 %v435, %v433
        %v604 = vpack.c.bf16 %v436, %v434
        %v605 = vpack.c.bf16 %v439, %v437
        %v606 = vpack.c.bf16 %v440, %v438
        %v607 = vpack.c.bf16 %v443, %v441
        %v608 = vpack.c.bf16 %v444, %v442
        %v609 = vld [vmem:[#allocation5] sm:$0xff]
        %v610 = vld [vmem:[#allocation5 + $0x8] sm:$0xff]
        %v611 = vld [vmem:[#allocation5 + $0x10] sm:$0xff]
        %v612 = vld [vmem:[#allocation5 + $0x18] sm:$0xff]
        %v613 = vld [vmem:[#allocation5 + $0x20] sm:$0xff]
        %v614 = vld [vmem:[#allocation5 + $0x28] sm:$0xff]
        %v615 = vld [vmem:[#allocation5 + $0x30] sm:$0xff]
        %v616 = vld [vmem:[#allocation5 + $0x38] sm:$0xff]
        %v617 = vld [vmem:[#allocation5 + $0x40] sm:$0xff]
        %v618 = vld [vmem:[#allocation5 + $0x48] sm:$0xff]
        %v619 = vld [vmem:[#allocation5 + $0x50] sm:$0xff]
        %v620 = vld [vmem:[#allocation5 + $0x58] sm:$0xff]
        %v621 = vld [vmem:[#allocation5 + $0x60] sm:$0xff]
        %v622 = vld [vmem:[#allocation5 + $0x68] sm:$0xff]
        %v623 = vld [vmem:[#allocation5 + $0x70] sm:$0xff]
        %v624 = vld [vmem:[#allocation5 + $0x78] sm:$0xff]
        %v625 = vld [vmem:[#allocation5 + $0x80] sm:$0xff]
        %v626 = vld [vmem:[#allocation5 + $0x88] sm:$0xff]
        %v627 = vld [vmem:[#allocation5 + $0x90] sm:$0xff]
        %v628 = vld [vmem:[#allocation5 + $0x98] sm:$0xff]
        %v629 = vld [vmem:[#allocation5 + $0xa0] sm:$0xff]
        %v630 = vld [vmem:[#allocation5 + $0xa8] sm:$0xff]
        %v631 = vld [vmem:[#allocation5 + $0xb0] sm:$0xff]
        %v632 = vld [vmem:[#allocation5 + $0xb8] sm:$0xff]
        %v633 = vld [vmem:[#allocation5 + $0xc0] sm:$0xff]
        %v634 = vld [vmem:[#allocation5 + $0xc8] sm:$0xff]
        %v635 = vld [vmem:[#allocation5 + $0xd0] sm:$0xff]
        %v636 = vld [vmem:[#allocation5 + $0xd8] sm:$0xff]
        %v637 = vld [vmem:[#allocation5 + $0xe0] sm:$0xff]
        %v638 = vld [vmem:[#allocation5 + $0xe8] sm:$0xff]
        %v639 = vld [vmem:[#allocation5 + $0xf0] sm:$0xff]
        %v640 = vld [vmem:[#allocation5 + $0xf8] sm:$0xff]
        %v641 = vld [vmem:[#allocation5 + $0x100] sm:$0xff]
        %v642 = vld [vmem:[#allocation5 + $0x108] sm:$0xff]
        %v643 = vld [vmem:[#allocation5 + $0x110] sm:$0xff]
        %v644 = vld [vmem:[#allocation5 + $0x118] sm:$0xff]
        %v645 = vld [vmem:[#allocation5 + $0x120] sm:$0xff]
        %v646 = vld [vmem:[#allocation5 + $0x128] sm:$0xff]
        %v647 = vld [vmem:[#allocation5 + $0x130] sm:$0xff]
        %v648 = vld [vmem:[#allocation5 + $0x138] sm:$0xff]
        %v649 = vld [vmem:[#allocation5 + $0x140] sm:$0xff]
        %v650 = vld [vmem:[#allocation5 + $0x148] sm:$0xff]
        %v651 = vld [vmem:[#allocation5 + $0x150] sm:$0xff]
        %v652 = vld [vmem:[#allocation5 + $0x158] sm:$0xff]
        %v653 = vld [vmem:[#allocation5 + $0x160] sm:$0xff]
        %v654 = vld [vmem:[#allocation5 + $0x168] sm:$0xff]
        %v655 = vld [vmem:[#allocation5 + $0x170] sm:$0xff]
        %v656 = vld [vmem:[#allocation5 + $0x178] sm:$0xff]
        %v657 = vld [vmem:[#allocation5 + $0x180] sm:$0xff]
        %v658 = vld [vmem:[#allocation5 + $0x188] sm:$0xff]
        %v659 = vld [vmem:[#allocation5 + $0x190] sm:$0xff]
        %v660 = vld [vmem:[#allocation5 + $0x198] sm:$0xff]
        %v661 = vld [vmem:[#allocation5 + $0x1a0] sm:$0xff]
        %v662 = vld [vmem:[#allocation5 + $0x1a8] sm:$0xff]
        %v663 = vld [vmem:[#allocation5 + $0x1b0] sm:$0xff]
        %v664 = vld [vmem:[#allocation5 + $0x1b8] sm:$0xff]
        %v665 = vld [vmem:[#allocation5 + $0x1c0] sm:$0xff]
        %v666 = vld [vmem:[#allocation5 + $0x1c8] sm:$0xff]
        %v667 = vld [vmem:[#allocation5 + $0x1d0] sm:$0xff]
        %v668 = vld [vmem:[#allocation5 + $0x1d8] sm:$0xff]
        %v669 = vld [vmem:[#allocation5 + $0x1e0] sm:$0xff]
        %v670 = vld [vmem:[#allocation5 + $0x1e8] sm:$0xff]
        %v671 = vld [vmem:[#allocation5 + $0x1f0] sm:$0xff]
        %v672 = vld [vmem:[#allocation5 + $0x1f8] sm:$0xff]
        %v673 = vld [vmem:[%s3] sm:$0xf]
        %v675 = vlaneseq
        %v676 = vshrl.u32 %v675, 7
        %v677 = vsub.s32 0, %v676
        %v678 = vrot.slane %v673, %v677
        %v679 = vlaneseq
        %v680 = vshrl.u32 %v679, 7
        %v681 = vsub.s32 1, %v680
        %v682 = vrot.slane %v673, %v681
        %v683 = vlaneseq
        %v684 = vshrl.u32 %v683, 7
        %v685 = vsub.s32 2, %v684
        %v686 = vrot.slane %v673, %v685
        %v687 = vlaneseq
        %v688 = vshrl.u32 %v687, 7
        %v689 = vsub.s32 3, %v688
        %v690 = vrot.slane %v673, %v689
        %v759 = vunpack.c.l.b16 %v609
        %v760 = vunpack.c.h.b16 %v609
        %v761 = vunpack.c.l.b16 %v610
        %v762 = vunpack.c.h.b16 %v610
        %v763 = vunpack.c.l.b16 %v611
        %v764 = vunpack.c.h.b16 %v611
        %v765 = vunpack.c.l.b16 %v612
        %v766 = vunpack.c.h.b16 %v612
        %v767 = vunpack.c.l.b16 %v613
        %v768 = vunpack.c.h.b16 %v613
        %v769 = vunpack.c.l.b16 %v614
        %v770 = vunpack.c.h.b16 %v614
        %v771 = vunpack.c.l.b16 %v615
        %v772 = vunpack.c.h.b16 %v615
        %v773 = vunpack.c.l.b16 %v616
        %v774 = vunpack.c.h.b16 %v616
        %v775 = vunpack.c.l.b16 %v617
        %v776 = vunpack.c.h.b16 %v617
        %v777 = vunpack.c.l.b16 %v618
        %v778 = vunpack.c.h.b16 %v618
        %v779 = vunpack.c.l.b16 %v619
        %v780 = vunpack.c.h.b16 %v619
        %v781 = vunpack.c.l.b16 %v620
        %v782 = vunpack.c.h.b16 %v620
        %v783 = vunpack.c.l.b16 %v621
        %v784 = vunpack.c.h.b16 %v621
        %v785 = vunpack.c.l.b16 %v622
        %v786 = vunpack.c.h.b16 %v622
        %v787 = vunpack.c.l.b16 %v623
        %v788 = vunpack.c.h.b16 %v623
        %v789 = vunpack.c.l.b16 %v624
        %v790 = vunpack.c.h.b16 %v624
        %v791 = vunpack.c.l.b16 %v625
        %v792 = vunpack.c.h.b16 %v625
        %v793 = vunpack.c.l.b16 %v626
        %v794 = vunpack.c.h.b16 %v626
        %v795 = vunpack.c.l.b16 %v627
        %v796 = vunpack.c.h.b16 %v627
        %v797 = vunpack.c.l.b16 %v628
        %v798 = vunpack.c.h.b16 %v628
        %v799 = vunpack.c.l.b16 %v629
        %v800 = vunpack.c.h.b16 %v629
        %v801 = vunpack.c.l.b16 %v630
        %v802 = vunpack.c.h.b16 %v630
        %v803 = vunpack.c.l.b16 %v631
        %v804 = vunpack.c.h.b16 %v631
        %v805 = vunpack.c.l.b16 %v632
        %v806 = vunpack.c.h.b16 %v632
        %v807 = vunpack.c.l.b16 %v633
        %v808 = vunpack.c.h.b16 %v633
        %v809 = vunpack.c.l.b16 %v634
        %v810 = vunpack.c.h.b16 %v634
        %v811 = vunpack.c.l.b16 %v635
        %v812 = vunpack.c.h.b16 %v635
        %v813 = vunpack.c.l.b16 %v636
        %v814 = vunpack.c.h.b16 %v636
        %v815 = vunpack.c.l.b16 %v637
        %v816 = vunpack.c.h.b16 %v637
        %v817 = vunpack.c.l.b16 %v638
        %v818 = vunpack.c.h.b16 %v638
        %v819 = vunpack.c.l.b16 %v639
        %v820 = vunpack.c.h.b16 %v639
        %v821 = vunpack.c.l.b16 %v640
        %v822 = vunpack.c.h.b16 %v640
        %v823 = vunpack.c.l.b16 %v641
        %v824 = vunpack.c.h.b16 %v641
        %v825 = vunpack.c.l.b16 %v642
        %v826 = vunpack.c.h.b16 %v642
        %v827 = vunpack.c.l.b16 %v643
        %v828 = vunpack.c.h.b16 %v643
        %v829 = vunpack.c.l.b16 %v644
        %v830 = vunpack.c.h.b16 %v644
        %v831 = vunpack.c.l.b16 %v645
        %v832 = vunpack.c.h.b16 %v645
        %v833 = vunpack.c.l.b16 %v646
        %v834 = vunpack.c.h.b16 %v646
        %v835 = vunpack.c.l.b16 %v647
        %v836 = vunpack.c.h.b16 %v647
        %v837 = vunpack.c.l.b16 %v648
        %v838 = vunpack.c.h.b16 %v648
        %v839 = vunpack.c.l.b16 %v649
        %v840 = vunpack.c.h.b16 %v649
        %v841 = vunpack.c.l.b16 %v650
        %v842 = vunpack.c.h.b16 %v650
        %v843 = vunpack.c.l.b16 %v651
        %v844 = vunpack.c.h.b16 %v651
        %v845 = vunpack.c.l.b16 %v652
        %v846 = vunpack.c.h.b16 %v652
        %v847 = vunpack.c.l.b16 %v653
        %v848 = vunpack.c.h.b16 %v653
        %v849 = vunpack.c.l.b16 %v654
        %v850 = vunpack.c.h.b16 %v654
        %v851 = vunpack.c.l.b16 %v655
        %v852 = vunpack.c.h.b16 %v655
        %v853 = vunpack.c.l.b16 %v656
        %v854 = vunpack.c.h.b16 %v656
        %v855 = vunpack.c.l.b16 %v657
        %v856 = vunpack.c.h.b16 %v657
        %v857 = vunpack.c.l.b16 %v658
        %v858 = vunpack.c.h.b16 %v658
        %v859 = vunpack.c.l.b16 %v659
        %v860 = vunpack.c.h.b16 %v659
        %v861 = vunpack.c.l.b16 %v660
        %v862 = vunpack.c.h.b16 %v660
        %v863 = vunpack.c.l.b16 %v661
        %v864 = vunpack.c.h.b16 %v661
        %v865 = vunpack.c.l.b16 %v662
        %v866 = vunpack.c.h.b16 %v662
        %v867 = vunpack.c.l.b16 %v663
        %v868 = vunpack.c.h.b16 %v663
        %v869 = vunpack.c.l.b16 %v664
        %v870 = vunpack.c.h.b16 %v664
        %v871 = vunpack.c.l.b16 %v665
        %v872 = vunpack.c.h.b16 %v665
        %v873 = vunpack.c.l.b16 %v666
        %v874 = vunpack.c.h.b16 %v666
        %v875 = vunpack.c.l.b16 %v667
        %v876 = vunpack.c.h.b16 %v667
        %v877 = vunpack.c.l.b16 %v668
        %v878 = vunpack.c.h.b16 %v668
        %v879 = vunpack.c.l.b16 %v669
        %v880 = vunpack.c.h.b16 %v669
        %v881 = vunpack.c.l.b16 %v670
        %v882 = vunpack.c.h.b16 %v670
        %v883 = vunpack.c.l.b16 %v671
        %v884 = vunpack.c.h.b16 %v671
        %v885 = vunpack.c.l.b16 %v672
        %v886 = vunpack.c.h.b16 %v672
        %v887 = vpack.c.b16 %v763, %v759
        %v888 = vpack.c.b16 %v764, %v760
        %v889 = vpack.c.b16 %v765, %v761
        %v890 = vpack.c.b16 %v766, %v762
        %v891 = vpack.c.b16 %v771, %v767
        %v892 = vpack.c.b16 %v772, %v768
        %v893 = vpack.c.b16 %v773, %v769
        %v894 = vpack.c.b16 %v774, %v770
        %v895 = vpack.c.b16 %v779, %v775
        %v896 = vpack.c.b16 %v780, %v776
        %v897 = vpack.c.b16 %v781, %v777
        %v898 = vpack.c.b16 %v782, %v778
        %v899 = vpack.c.b16 %v787, %v783
        %v900 = vpack.c.b16 %v788, %v784
        %v901 = vpack.c.b16 %v789, %v785
        %v902 = vpack.c.b16 %v790, %v786
        %v903 = vpack.c.b16 %v795, %v791
        %v904 = vpack.c.b16 %v796, %v792
        %v905 = vpack.c.b16 %v797, %v793
        %v906 = vpack.c.b16 %v798, %v794
        %v907 = vpack.c.b16 %v803, %v799
        %v908 = vpack.c.b16 %v804, %v800
        %v909 = vpack.c.b16 %v805, %v801
        %v910 = vpack.c.b16 %v806, %v802
        %v911 = vpack.c.b16 %v811, %v807
        %v912 = vpack.c.b16 %v812, %v808
        %v913 = vpack.c.b16 %v813, %v809
        %v914 = vpack.c.b16 %v814, %v810
        %v915 = vpack.c.b16 %v819, %v815
        %v916 = vpack.c.b16 %v820, %v816
        %v917 = vpack.c.b16 %v821, %v817
        %v918 = vpack.c.b16 %v822, %v818
        %v919 = vpack.c.b16 %v827, %v823
        %v920 = vpack.c.b16 %v828, %v824
        %v921 = vpack.c.b16 %v829, %v825
        %v922 = vpack.c.b16 %v830, %v826
        %v923 = vpack.c.b16 %v835, %v831
        %v924 = vpack.c.b16 %v836, %v832
        %v925 = vpack.c.b16 %v837, %v833
        %v926 = vpack.c.b16 %v838, %v834
        %v927 = vpack.c.b16 %v843, %v839
        %v928 = vpack.c.b16 %v844, %v840
        %v929 = vpack.c.b16 %v845, %v841
        %v930 = vpack.c.b16 %v846, %v842
        %v931 = vpack.c.b16 %v851, %v847
        %v932 = vpack.c.b16 %v852, %v848
        %v933 = vpack.c.b16 %v853, %v849
        %v934 = vpack.c.b16 %v854, %v850
        %v935 = vpack.c.b16 %v859, %v855
        %v936 = vpack.c.b16 %v860, %v856
        %v937 = vpack.c.b16 %v861, %v857
        %v938 = vpack.c.b16 %v862, %v858
        %v939 = vpack.c.b16 %v867, %v863
        %v940 = vpack.c.b16 %v868, %v864
        %v941 = vpack.c.b16 %v869, %v865
        %v942 = vpack.c.b16 %v870, %v866
        %v943 = vpack.c.b16 %v875, %v871
        %v944 = vpack.c.b16 %v876, %v872
        %v945 = vpack.c.b16 %v877, %v873
        %v946 = vpack.c.b16 %v878, %v874
        %v947 = vpack.c.b16 %v883, %v879
        %v948 = vpack.c.b16 %v884, %v880
        %v949 = vpack.c.b16 %v885, %v881
        %v950 = vpack.c.b16 %v886, %v882
        %1015 = vmatprep.subr.bf16.mxu0 %v916
        %1016 = vmatpush1.bf16.msra.mxu0 %v915
        %1017 = vmatprep.subr.bf16.mxu0 %v912
        %1018 = vmatpush1.bf16.msra.mxu0 %v911
        %1019 = vmatprep.subr.bf16.mxu0 %v908
        %1020 = vmatpush1.bf16.msra.mxu0 %v907
        %1021 = vmatprep.subr.bf16.mxu0 %v904
        %1022 = vmatpush1.bf16.msra.mxu0 %v903
        %1023 = vmatprep.subr.bf16.mxu0 %v900
        %1024 = vmatpush1.bf16.msra.mxu0 %v899
        %1025 = vmatprep.subr.bf16.mxu0 %v896
        %1026 = vmatpush1.bf16.msra.mxu0 %v895
        %1027 = vmatprep.subr.bf16.mxu0 %v892
        %1028 = vmatpush1.bf16.msra.mxu0 %v891
        %1029 = vmatprep.subr.bf16.mxu0 %v888
        %1030 = vmatpush1.bf16.msra.mxu0 %v887
        %1031 = vmatprep.subr.bf16.mxu0 %v948
        %1032 = vmatpush2.bf16.msra.mxu0 %v947
        %1033 = vmatprep.subr.bf16.mxu0 %v944
        %1034 = vmatpush2.bf16.msra.mxu0 %v943
        %1035 = vmatprep.subr.bf16.mxu0 %v940
        %1036 = vmatpush2.bf16.msra.mxu0 %v939
        %1037 = vmatprep.subr.bf16.mxu0 %v936
        %1038 = vmatpush2.bf16.msra.mxu0 %v935
        %1039 = vmatprep.subr.bf16.mxu0 %v932
        %1040 = vmatpush2.bf16.msra.mxu0 %v931
        %1041 = vmatprep.subr.bf16.mxu0 %v928
        %1042 = vmatpush2.bf16.msra.mxu0 %v927
        %1043 = vmatprep.subr.bf16.mxu0 %v924
        %1044 = vmatpush2.bf16.msra.mxu0 %v923
        %1045 = vmatprep.subr.bf16.mxu0 %v920
        %1046 = vmatpush2.bf16.msra.mxu0 %v919
        %1047 = vmatprep.mubr.bf16.mxu0 %v578
        %1048 = vmatmul.mubr.bf16.gmra.mxu0 %v577
        %v1049 = vpop.f32.mrf.mxu0
        %v1050 = vadd.f32 %v678, %v1049
        %v1051 = vpop.f32.mrf.mxu0
        %v1052 = vadd.f32 %v682, %v1051
        %v1053 = vpop.f32.mrf.mxu0
        %v1054 = vadd.f32 %v678, %v1053
        %v1055 = vpop.f32.mrf.mxu0
        %v1056 = vadd.f32 %v682, %v1055
        %1057 = vmatprep.mubr.bf16.mxu0 %v580
        %1058 = vmatmul.mubr.bf16.gmra.mxu0 %v579
        %v1059 = vpop.f32.mrf.mxu0
        %v1060 = vadd.f32 %v678, %v1059
        %v1061 = vpop.f32.mrf.mxu0
        %v1062 = vadd.f32 %v682, %v1061
        %v1063 = vpop.f32.mrf.mxu0
        %v1064 = vadd.f32 %v678, %v1063
        %v1065 = vpop.f32.mrf.mxu0
        %v1066 = vadd.f32 %v682, %v1065
        %1067 = vmatprep.mubr.bf16.mxu0 %v582
        %1068 = vmatmul.mubr.bf16.gmra.mxu0 %v581
        %v1069 = vpop.f32.mrf.mxu0
        %v1070 = vadd.f32 %v678, %v1069
        %v1071 = vpop.f32.mrf.mxu0
        %v1072 = vadd.f32 %v682, %v1071
        %v1073 = vpop.f32.mrf.mxu0
        %v1074 = vadd.f32 %v678, %v1073
        %v1075 = vpop.f32.mrf.mxu0
        %v1076 = vadd.f32 %v682, %v1075
        %1077 = vmatprep.mubr.bf16.mxu0 %v584
        %1078 = vmatmul.mubr.bf16.gmra.mxu0 %v583
        %v1079 = vpop.f32.mrf.mxu0
        %v1080 = vadd.f32 %v678, %v1079
        %v1081 = vpop.f32.mrf.mxu0
        %v1082 = vadd.f32 %v682, %v1081
        %v1083 = vpop.f32.mrf.mxu0
        %v1084 = vadd.f32 %v678, %v1083
        %v1085 = vpop.f32.mrf.mxu0
        %v1086 = vadd.f32 %v682, %v1085
        %1087 = vmatprep.mubr.bf16.mxu0 %v586
        %1088 = vmatmul.mubr.bf16.gmra.mxu0 %v585
        %v1089 = vpop.f32.mrf.mxu0
        %v1090 = vadd.f32 %v678, %v1089
        %v1091 = vpop.f32.mrf.mxu0
        %v1092 = vadd.f32 %v682, %v1091
        %v1093 = vpop.f32.mrf.mxu0
        %v1094 = vadd.f32 %v678, %v1093
        %v1095 = vpop.f32.mrf.mxu0
        %v1096 = vadd.f32 %v682, %v1095
        %1097 = vmatprep.mubr.bf16.mxu0 %v588
        %1098 = vmatmul.mubr.bf16.gmra.mxu0 %v587
        %v1099 = vpop.f32.mrf.mxu0
        %v1100 = vadd.f32 %v678, %v1099
        %v1101 = vpop.f32.mrf.mxu0
        %v1102 = vadd.f32 %v682, %v1101
        %v1103 = vpop.f32.mrf.mxu0
        %v1104 = vadd.f32 %v678, %v1103
        %v1105 = vpop.f32.mrf.mxu0
        %v1106 = vadd.f32 %v682, %v1105
        %1107 = vmatprep.mubr.bf16.mxu0 %v590
        %1108 = vmatmul.mubr.bf16.gmra.mxu0 %v589
        %v1109 = vpop.f32.mrf.mxu0
        %v1110 = vadd.f32 %v678, %v1109
        %v1111 = vpop.f32.mrf.mxu0
        %v1112 = vadd.f32 %v682, %v1111
        %v1113 = vpop.f32.mrf.mxu0
        %v1114 = vadd.f32 %v678, %v1113
        %v1115 = vpop.f32.mrf.mxu0
        %v1116 = vadd.f32 %v682, %v1115
        %1117 = vmatprep.mubr.bf16.mxu0 %v592
        %1118 = vmatmul.mubr.bf16.gmra.mxu0 %v591
        %v1119 = vpop.f32.mrf.mxu0
        %v1120 = vadd.f32 %v678, %v1119
        %v1121 = vpop.f32.mrf.mxu0
        %v1122 = vadd.f32 %v682, %v1121
        %v1123 = vpop.f32.mrf.mxu0
        %v1124 = vadd.f32 %v678, %v1123
        %v1125 = vpop.f32.mrf.mxu0
        %v1126 = vadd.f32 %v682, %v1125
        %1127 = vmatprep.mubr.bf16.mxu0 %v594
        %1128 = vmatmul.mubr.bf16.gmra.mxu0 %v593
        %v1129 = vpop.f32.mrf.mxu0
        %v1130 = vadd.f32 %v678, %v1129
        %v1131 = vpop.f32.mrf.mxu0
        %v1132 = vadd.f32 %v682, %v1131
        %v1133 = vpop.f32.mrf.mxu0
        %v1134 = vadd.f32 %v678, %v1133
        %v1135 = vpop.f32.mrf.mxu0
        %v1136 = vadd.f32 %v682, %v1135
        %1137 = vmatprep.mubr.bf16.mxu0 %v596
        %1138 = vmatmul.mubr.bf16.gmra.mxu0 %v595
        %v1139 = vpop.f32.mrf.mxu0
        %v1140 = vadd.f32 %v678, %v1139
        %v1141 = vpop.f32.mrf.mxu0
        %v1142 = vadd.f32 %v682, %v1141
        %v1143 = vpop.f32.mrf.mxu0
        %v1144 = vadd.f32 %v678, %v1143
        %v1145 = vpop.f32.mrf.mxu0
        %v1146 = vadd.f32 %v682, %v1145
        %1147 = vmatprep.mubr.bf16.mxu0 %v598
        %1148 = vmatmul.mubr.bf16.gmra.mxu0 %v597
        %v1149 = vpop.f32.mrf.mxu0
        %v1150 = vadd.f32 %v678, %v1149
        %v1151 = vpop.f32.mrf.mxu0
        %v1152 = vadd.f32 %v682, %v1151
        %v1153 = vpop.f32.mrf.mxu0
        %v1154 = vadd.f32 %v678, %v1153
        %v1155 = vpop.f32.mrf.mxu0
        %v1156 = vadd.f32 %v682, %v1155
        %1157 = vmatprep.mubr.bf16.mxu0 %v600
        %1158 = vmatmul.mubr.bf16.gmra.mxu0 %v599
        %v1159 = vpop.f32.mrf.mxu0
        %v1160 = vadd.f32 %v678, %v1159
        %v1161 = vpop.f32.mrf.mxu0
        %v1162 = vadd.f32 %v682, %v1161
        %v1163 = vpop.f32.mrf.mxu0
        %v1164 = vadd.f32 %v678, %v1163
        %v1165 = vpop.f32.mrf.mxu0
        %v1166 = vadd.f32 %v682, %v1165
        %1167 = vmatprep.mubr.bf16.mxu0 %v602
        %1168 = vmatmul.mubr.bf16.gmra.mxu0 %v601
        %v1169 = vpop.f32.mrf.mxu0
        %v1170 = vadd.f32 %v678, %v1169
        %v1171 = vpop.f32.mrf.mxu0
        %v1172 = vadd.f32 %v682, %v1171
        %v1173 = vpop.f32.mrf.mxu0
        %v1174 = vadd.f32 %v678, %v1173
        %v1175 = vpop.f32.mrf.mxu0
        %v1176 = vadd.f32 %v682, %v1175
        %1177 = vmatprep.mubr.bf16.mxu0 %v604
        %1178 = vmatmul.mubr.bf16.gmra.mxu0 %v603
        %v1179 = vpop.f32.mrf.mxu0
        %v1180 = vadd.f32 %v678, %v1179
        %v1181 = vpop.f32.mrf.mxu0
        %v1182 = vadd.f32 %v682, %v1181
        %v1183 = vpop.f32.mrf.mxu0
        %v1184 = vadd.f32 %v678, %v1183
        %v1185 = vpop.f32.mrf.mxu0
        %v1186 = vadd.f32 %v682, %v1185
        %1187 = vmatprep.mubr.bf16.mxu0 %v606
        %1188 = vmatmul.mubr.bf16.gmra.mxu0 %v605
        %v1189 = vpop.f32.mrf.mxu0
        %v1190 = vadd.f32 %v678, %v1189
        %v1191 = vpop.f32.mrf.mxu0
        %v1192 = vadd.f32 %v682, %v1191
        %v1193 = vpop.f32.mrf.mxu0
        %v1194 = vadd.f32 %v678, %v1193
        %v1195 = vpop.f32.mrf.mxu0
        %v1196 = vadd.f32 %v682, %v1195
        %1197 = vmatprep.mubr.bf16.mxu0 %v608
        %1198 = vmatmul.mubr.bf16.gmra.mxu0 %v607
        %v1199 = vpop.f32.mrf.mxu0
        %v1200 = vadd.f32 %v678, %v1199
        %v1201 = vpop.f32.mrf.mxu0
        %v1202 = vadd.f32 %v682, %v1201
        %v1203 = vpop.f32.mrf.mxu0
        %v1204 = vadd.f32 %v678, %v1203
        %v1205 = vpop.f32.mrf.mxu0
        %v1206 = vadd.f32 %v682, %v1205
        %1207 = vdwg.mxu0
        %1208 = vmatprep.subr.bf16.mxu0 %v918
        %1209 = vmatpush1.bf16.msra.mxu0 %v917
        %1210 = vmatprep.subr.bf16.mxu0 %v914
        %1211 = vmatpush1.bf16.msra.mxu0 %v913
        %1212 = vmatprep.subr.bf16.mxu0 %v910
        %1213 = vmatpush1.bf16.msra.mxu0 %v909
        %1214 = vmatprep.subr.bf16.mxu0 %v906
        %1215 = vmatpush1.bf16.msra.mxu0 %v905
        %1216 = vmatprep.subr.bf16.mxu0 %v902
        %1217 = vmatpush1.bf16.msra.mxu0 %v901
        %1218 = vmatprep.subr.bf16.mxu0 %v898
        %1219 = vmatpush1.bf16.msra.mxu0 %v897
        %1220 = vmatprep.subr.bf16.mxu0 %v894
        %1221 = vmatpush1.bf16.msra.mxu0 %v893
        %1222 = vmatprep.subr.bf16.mxu0 %v890
        %1223 = vmatpush1.bf16.msra.mxu0 %v889
        %1224 = vmatprep.subr.bf16.mxu0 %v950
        %1225 = vmatpush2.bf16.msra.mxu0 %v949
        %1226 = vmatprep.subr.bf16.mxu0 %v946
        %1227 = vmatpush2.bf16.msra.mxu0 %v945
        %1228 = vmatprep.subr.bf16.mxu0 %v942
        %1229 = vmatpush2.bf16.msra.mxu0 %v941
        %1230 = vmatprep.subr.bf16.mxu0 %v938
        %1231 = vmatpush2.bf16.msra.mxu0 %v937
        %1232 = vmatprep.subr.bf16.mxu0 %v934
        %1233 = vmatpush2.bf16.msra.mxu0 %v933
        %1234 = vmatprep.subr.bf16.mxu0 %v930
        %1235 = vmatpush2.bf16.msra.mxu0 %v929
        %1236 = vmatprep.subr.bf16.mxu0 %v926
        %1237 = vmatpush2.bf16.msra.mxu0 %v925
        %1238 = vmatprep.subr.bf16.mxu0 %v922
        %1239 = vmatpush2.bf16.msra.mxu0 %v921
        %1240 = vmatprep.mubr.bf16.mxu0 %v578
        %1241 = vmatmul.mubr.bf16.gmra.mxu0 %v577
        %v1242 = vpop.f32.mrf.mxu0
        %v1243 = vadd.f32 %v686, %v1242
        %v1244 = vpop.f32.mrf.mxu0
        %v1245 = vadd.f32 %v690, %v1244
        %v1246 = vpop.f32.mrf.mxu0
        %v1247 = vadd.f32 %v686, %v1246
        %v1248 = vpop.f32.mrf.mxu0
        %v1249 = vadd.f32 %v690, %v1248
        %1250 = vmatprep.mubr.bf16.mxu0 %v580
        %1251 = vmatmul.mubr.bf16.gmra.mxu0 %v579
        %v1252 = vpop.f32.mrf.mxu0
        %v1253 = vadd.f32 %v686, %v1252
        %v1254 = vpop.f32.mrf.mxu0
        %v1255 = vadd.f32 %v690, %v1254
        %v1256 = vpop.f32.mrf.mxu0
        %v1257 = vadd.f32 %v686, %v1256
        %v1258 = vpop.f32.mrf.mxu0
        %v1259 = vadd.f32 %v690, %v1258
        %1260 = vmatprep.mubr.bf16.mxu0 %v582
        %1261 = vmatmul.mubr.bf16.gmra.mxu0 %v581
        %v1262 = vpop.f32.mrf.mxu0
        %v1263 = vadd.f32 %v686, %v1262
        %v1264 = vpop.f32.mrf.mxu0
        %v1265 = vadd.f32 %v690, %v1264
        %v1266 = vpop.f32.mrf.mxu0
        %v1267 = vadd.f32 %v686, %v1266
        %v1268 = vpop.f32.mrf.mxu0
        %v1269 = vadd.f32 %v690, %v1268
        %1270 = vmatprep.mubr.bf16.mxu0 %v584
        %1271 = vmatmul.mubr.bf16.gmra.mxu0 %v583
        %v1272 = vpop.f32.mrf.mxu0
        %v1273 = vadd.f32 %v686, %v1272
        %v1274 = vpop.f32.mrf.mxu0
        %v1275 = vadd.f32 %v690, %v1274
        %v1276 = vpop.f32.mrf.mxu0
        %v1277 = vadd.f32 %v686, %v1276
        %v1278 = vpop.f32.mrf.mxu0
        %v1279 = vadd.f32 %v690, %v1278
        %1280 = vmatprep.mubr.bf16.mxu0 %v586
        %1281 = vmatmul.mubr.bf16.gmra.mxu0 %v585
        %v1282 = vpop.f32.mrf.mxu0
        %v1283 = vadd.f32 %v686, %v1282
        %v1284 = vpop.f32.mrf.mxu0
        %v1285 = vadd.f32 %v690, %v1284
        %v1286 = vpop.f32.mrf.mxu0
        %v1287 = vadd.f32 %v686, %v1286
        %v1288 = vpop.f32.mrf.mxu0
        %v1289 = vadd.f32 %v690, %v1288
        %1290 = vmatprep.mubr.bf16.mxu0 %v588
        %1291 = vmatmul.mubr.bf16.gmra.mxu0 %v587
        %v1292 = vpop.f32.mrf.mxu0
        %v1293 = vadd.f32 %v686, %v1292
        %v1294 = vpop.f32.mrf.mxu0
        %v1295 = vadd.f32 %v690, %v1294
        %v1296 = vpop.f32.mrf.mxu0
        %v1297 = vadd.f32 %v686, %v1296
        %v1298 = vpop.f32.mrf.mxu0
        %v1299 = vadd.f32 %v690, %v1298
        %1300 = vmatprep.mubr.bf16.mxu0 %v590
        %1301 = vmatmul.mubr.bf16.gmra.mxu0 %v589
        %v1302 = vpop.f32.mrf.mxu0
        %v1303 = vadd.f32 %v686, %v1302
        %v1304 = vpop.f32.mrf.mxu0
        %v1305 = vadd.f32 %v690, %v1304
        %v1306 = vpop.f32.mrf.mxu0
        %v1307 = vadd.f32 %v686, %v1306
        %v1308 = vpop.f32.mrf.mxu0
        %v1309 = vadd.f32 %v690, %v1308
        %1310 = vmatprep.mubr.bf16.mxu0 %v592
        %1311 = vmatmul.mubr.bf16.gmra.mxu0 %v591
        %v1312 = vpop.f32.mrf.mxu0
        %v1313 = vadd.f32 %v686, %v1312
        %v1314 = vpop.f32.mrf.mxu0
        %v1315 = vadd.f32 %v690, %v1314
        %v1316 = vpop.f32.mrf.mxu0
        %v1317 = vadd.f32 %v686, %v1316
        %v1318 = vpop.f32.mrf.mxu0
        %v1319 = vadd.f32 %v690, %v1318
        %1320 = vmatprep.mubr.bf16.mxu0 %v594
        %1321 = vmatmul.mubr.bf16.gmra.mxu0 %v593
        %v1322 = vpop.f32.mrf.mxu0
        %v1323 = vadd.f32 %v686, %v1322
        %v1324 = vpop.f32.mrf.mxu0
        %v1325 = vadd.f32 %v690, %v1324
        %v1326 = vpop.f32.mrf.mxu0
        %v1327 = vadd.f32 %v686, %v1326
        %v1328 = vpop.f32.mrf.mxu0
        %v1329 = vadd.f32 %v690, %v1328
        %1330 = vmatprep.mubr.bf16.mxu0 %v596
        %1331 = vmatmul.mubr.bf16.gmra.mxu0 %v595
        %v1332 = vpop.f32.mrf.mxu0
        %v1333 = vadd.f32 %v686, %v1332
        %v1334 = vpop.f32.mrf.mxu0
        %v1335 = vadd.f32 %v690, %v1334
        %v1336 = vpop.f32.mrf.mxu0
        %v1337 = vadd.f32 %v686, %v1336
        %v1338 = vpop.f32.mrf.mxu0
        %v1339 = vadd.f32 %v690, %v1338
        %1340 = vmatprep.mubr.bf16.mxu0 %v598
        %1341 = vmatmul.mubr.bf16.gmra.mxu0 %v597
        %v1342 = vpop.f32.mrf.mxu0
        %v1343 = vadd.f32 %v686, %v1342
        %v1344 = vpop.f32.mrf.mxu0
        %v1345 = vadd.f32 %v690, %v1344
        %v1346 = vpop.f32.mrf.mxu0
        %v1347 = vadd.f32 %v686, %v1346
        %v1348 = vpop.f32.mrf.mxu0
        %v1349 = vadd.f32 %v690, %v1348
        %1350 = vmatprep.mubr.bf16.mxu0 %v600
        %1351 = vmatmul.mubr.bf16.gmra.mxu0 %v599
        %v1352 = vpop.f32.mrf.mxu0
        %v1353 = vadd.f32 %v686, %v1352
        %v1354 = vpop.f32.mrf.mxu0
        %v1355 = vadd.f32 %v690, %v1354
        %v1356 = vpop.f32.mrf.mxu0
        %v1357 = vadd.f32 %v686, %v1356
        %v1358 = vpop.f32.mrf.mxu0
        %v1359 = vadd.f32 %v690, %v1358
        %1360 = vmatprep.mubr.bf16.mxu0 %v602
        %1361 = vmatmul.mubr.bf16.gmra.mxu0 %v601
        %v1362 = vpop.f32.mrf.mxu0
        %v1363 = vadd.f32 %v686, %v1362
        %v1364 = vpop.f32.mrf.mxu0
        %v1365 = vadd.f32 %v690, %v1364
        %v1366 = vpop.f32.mrf.mxu0
        %v1367 = vadd.f32 %v686, %v1366
        %v1368 = vpop.f32.mrf.mxu0
        %v1369 = vadd.f32 %v690, %v1368
        %1370 = vmatprep.mubr.bf16.mxu0 %v604
        %1371 = vmatmul.mubr.bf16.gmra.mxu0 %v603
        %v1372 = vpop.f32.mrf.mxu0
        %v1373 = vadd.f32 %v686, %v1372
        %v1374 = vpop.f32.mrf.mxu0
        %v1375 = vadd.f32 %v690, %v1374
        %v1376 = vpop.f32.mrf.mxu0
        %v1377 = vadd.f32 %v686, %v1376
        %v1378 = vpop.f32.mrf.mxu0
        %v1379 = vadd.f32 %v690, %v1378
        %1380 = vmatprep.mubr.bf16.mxu0 %v606
        %1381 = vmatmul.mubr.bf16.gmra.mxu0 %v605
        %v1382 = vpop.f32.mrf.mxu0
        %v1383 = vadd.f32 %v686, %v1382
        %v1384 = vpop.f32.mrf.mxu0
        %v1385 = vadd.f32 %v690, %v1384
        %v1386 = vpop.f32.mrf.mxu0
        %v1387 = vadd.f32 %v686, %v1386
        %v1388 = vpop.f32.mrf.mxu0
        %v1389 = vadd.f32 %v690, %v1388
        %1390 = vmatprep.mubr.bf16.mxu0 %v608
        %1391 = vmatmul.mubr.bf16.gmra.mxu0 %v607
        %v1392 = vpop.f32.mrf.mxu0
        %v1393 = vadd.f32 %v686, %v1392
        %v1394 = vpop.f32.mrf.mxu0
        %v1395 = vadd.f32 %v690, %v1394
        %v1396 = vpop.f32.mrf.mxu0
        %v1397 = vadd.f32 %v686, %v1396
        %v1398 = vpop.f32.mrf.mxu0
        %v1399 = vadd.f32 %v690, %v1398
        %1400 = vdwg.mxu0
        %v1401 = vmax.f32 %v1050, 0.0
        %v1402 = vmax.f32 %v1052, 0.0
        %v1403 = vmax.f32 %v1243, 0.0
        %v1404 = vmax.f32 %v1245, 0.0
        %v1405 = vmax.f32 %v1054, 0.0
        %v1406 = vmax.f32 %v1056, 0.0
        %v1407 = vmax.f32 %v1247, 0.0
        %v1408 = vmax.f32 %v1249, 0.0
        %v1409 = vmax.f32 %v1060, 0.0
        %v1410 = vmax.f32 %v1062, 0.0
        %v1411 = vmax.f32 %v1253, 0.0
        %v1412 = vmax.f32 %v1255, 0.0
        %v1413 = vmax.f32 %v1064, 0.0
        %v1414 = vmax.f32 %v1066, 0.0
        %v1415 = vmax.f32 %v1257, 0.0
        %v1416 = vmax.f32 %v1259, 0.0
        %v1417 = vmax.f32 %v1070, 0.0
        %v1418 = vmax.f32 %v1072, 0.0
        %v1419 = vmax.f32 %v1263, 0.0
        %v1420 = vmax.f32 %v1265, 0.0
        %v1421 = vmax.f32 %v1074, 0.0
        %v1422 = vmax.f32 %v1076, 0.0
        %v1423 = vmax.f32 %v1267, 0.0
        %v1424 = vmax.f32 %v1269, 0.0
        %v1425 = vmax.f32 %v1080, 0.0
        %v1426 = vmax.f32 %v1082, 0.0
        %v1427 = vmax.f32 %v1273, 0.0
        %v1428 = vmax.f32 %v1275, 0.0
        %v1429 = vmax.f32 %v1084, 0.0
        %v1430 = vmax.f32 %v1086, 0.0
        %v1431 = vmax.f32 %v1277, 0.0
        %v1432 = vmax.f32 %v1279, 0.0
        %v1433 = vmax.f32 %v1090, 0.0
        %v1434 = vmax.f32 %v1092, 0.0
        %v1435 = vmax.f32 %v1283, 0.0
        %v1436 = vmax.f32 %v1285, 0.0
        %v1437 = vmax.f32 %v1094, 0.0
        %v1438 = vmax.f32 %v1096, 0.0
        %v1439 = vmax.f32 %v1287, 0.0
        %v1440 = vmax.f32 %v1289, 0.0
        %v1441 = vmax.f32 %v1100, 0.0
        %v1442 = vmax.f32 %v1102, 0.0
        %v1443 = vmax.f32 %v1293, 0.0
        %v1444 = vmax.f32 %v1295, 0.0
        %v1445 = vmax.f32 %v1104, 0.0
        %v1446 = vmax.f32 %v1106, 0.0
        %v1447 = vmax.f32 %v1297, 0.0
        %v1448 = vmax.f32 %v1299, 0.0
        %v1449 = vmax.f32 %v1110, 0.0
        %v1450 = vmax.f32 %v1112, 0.0
        %v1451 = vmax.f32 %v1303, 0.0
        %v1452 = vmax.f32 %v1305, 0.0
        %v1453 = vmax.f32 %v1114, 0.0
        %v1454 = vmax.f32 %v1116, 0.0
        %v1455 = vmax.f32 %v1307, 0.0
        %v1456 = vmax.f32 %v1309, 0.0
        %v1457 = vmax.f32 %v1120, 0.0
        %v1458 = vmax.f32 %v1122, 0.0
        %v1459 = vmax.f32 %v1313, 0.0
        %v1460 = vmax.f32 %v1315, 0.0
        %v1461 = vmax.f32 %v1124, 0.0
        %v1462 = vmax.f32 %v1126, 0.0
        %v1463 = vmax.f32 %v1317, 0.0
        %v1464 = vmax.f32 %v1319, 0.0
        %v1465 = vmax.f32 %v1130, 0.0
        %v1466 = vmax.f32 %v1132, 0.0
        %v1467 = vmax.f32 %v1323, 0.0
        %v1468 = vmax.f32 %v1325, 0.0
        %v1469 = vmax.f32 %v1134, 0.0
        %v1470 = vmax.f32 %v1136, 0.0
        %v1471 = vmax.f32 %v1327, 0.0
        %v1472 = vmax.f32 %v1329, 0.0
        %v1473 = vmax.f32 %v1140, 0.0
        %v1474 = vmax.f32 %v1142, 0.0
        %v1475 = vmax.f32 %v1333, 0.0
        %v1476 = vmax.f32 %v1335, 0.0
        %v1477 = vmax.f32 %v1144, 0.0
        %v1478 = vmax.f32 %v1146, 0.0
        %v1479 = vmax.f32 %v1337, 0.0
        %v1480 = vmax.f32 %v1339, 0.0
        %v1481 = vmax.f32 %v1150, 0.0
        %v1482 = vmax.f32 %v1152, 0.0
        %v1483 = vmax.f32 %v1343, 0.0
        %v1484 = vmax.f32 %v1345, 0.0
        %v1485 = vmax.f32 %v1154, 0.0
        %v1486 = vmax.f32 %v1156, 0.0
        %v1487 = vmax.f32 %v1347, 0.0
        %v1488 = vmax.f32 %v1349, 0.0
        %v1489 = vmax.f32 %v1160, 0.0
        %v1490 = vmax.f32 %v1162, 0.0
        %v1491 = vmax.f32 %v1353, 0.0
        %v1492 = vmax.f32 %v1355, 0.0
        %v1493 = vmax.f32 %v1164, 0.0
        %v1494 = vmax.f32 %v1166, 0.0
        %v1495 = vmax.f32 %v1357, 0.0
        %v1496 = vmax.f32 %v1359, 0.0
        %v1497 = vmax.f32 %v1170, 0.0
        %v1498 = vmax.f32 %v1172, 0.0
        %v1499 = vmax.f32 %v1363, 0.0
        %v1500 = vmax.f32 %v1365, 0.0
        %v1501 = vmax.f32 %v1174, 0.0
        %v1502 = vmax.f32 %v1176, 0.0
        %v1503 = vmax.f32 %v1367, 0.0
        %v1504 = vmax.f32 %v1369, 0.0
        %v1505 = vmax.f32 %v1180, 0.0
        %v1506 = vmax.f32 %v1182, 0.0
        %v1507 = vmax.f32 %v1373, 0.0
        %v1508 = vmax.f32 %v1375, 0.0
        %v1509 = vmax.f32 %v1184, 0.0
        %v1510 = vmax.f32 %v1186, 0.0
        %v1511 = vmax.f32 %v1377, 0.0
        %v1512 = vmax.f32 %v1379, 0.0
        %v1513 = vmax.f32 %v1190, 0.0
        %v1514 = vmax.f32 %v1192, 0.0
        %v1515 = vmax.f32 %v1383, 0.0
        %v1516 = vmax.f32 %v1385, 0.0
        %v1517 = vmax.f32 %v1194, 0.0
        %v1518 = vmax.f32 %v1196, 0.0
        %v1519 = vmax.f32 %v1387, 0.0
        %v1520 = vmax.f32 %v1389, 0.0
        %v1521 = vmax.f32 %v1200, 0.0
        %v1522 = vmax.f32 %v1202, 0.0
        %v1523 = vmax.f32 %v1393, 0.0
        %v1524 = vmax.f32 %v1395, 0.0
        %v1525 = vmax.f32 %v1204, 0.0
        %v1526 = vmax.f32 %v1206, 0.0
        %v1527 = vmax.f32 %v1397, 0.0
        %v1528 = vmax.f32 %v1399, 0.0
        %v1529 = vpack.c.bf16 %v1405, %v1401
        %v1530 = vpack.c.bf16 %v1406, %v1402
        %v1531 = vpack.c.bf16 %v1407, %v1403
        %v1532 = vpack.c.bf16 %v1408, %v1404
        %v1533 = vpack.c.bf16 %v1413, %v1409
        %v1534 = vpack.c.bf16 %v1414, %v1410
        %v1535 = vpack.c.bf16 %v1415, %v1411
        %v1536 = vpack.c.bf16 %v1416, %v1412
        %v1537 = vpack.c.bf16 %v1421, %v1417
        %v1538 = vpack.c.bf16 %v1422, %v1418
        %v1539 = vpack.c.bf16 %v1423, %v1419
        %v1540 = vpack.c.bf16 %v1424, %v1420
        %v1541 = vpack.c.bf16 %v1429, %v1425
        %v1542 = vpack.c.bf16 %v1430, %v1426
        %v1543 = vpack.c.bf16 %v1431, %v1427
        %v1544 = vpack.c.bf16 %v1432, %v1428
        %v1545 = vpack.c.bf16 %v1437, %v1433
        %v1546 = vpack.c.bf16 %v1438, %v1434
        %v1547 = vpack.c.bf16 %v1439, %v1435
        %v1548 = vpack.c.bf16 %v1440, %v1436
        %v1549 = vpack.c.bf16 %v1445, %v1441
        %v1550 = vpack.c.bf16 %v1446, %v1442
        %v1551 = vpack.c.bf16 %v1447, %v1443
        %v1552 = vpack.c.bf16 %v1448, %v1444
        %v1553 = vpack.c.bf16 %v1453, %v1449
        %v1554 = vpack.c.bf16 %v1454, %v1450
        %v1555 = vpack.c.bf16 %v1455, %v1451
        %v1556 = vpack.c.bf16 %v1456, %v1452
        %v1557 = vpack.c.bf16 %v1461, %v1457
        %v1558 = vpack.c.bf16 %v1462, %v1458
        %v1559 = vpack.c.bf16 %v1463, %v1459
        %v1560 = vpack.c.bf16 %v1464, %v1460
        %v1561 = vpack.c.bf16 %v1469, %v1465
        %v1562 = vpack.c.bf16 %v1470, %v1466
        %v1563 = vpack.c.bf16 %v1471, %v1467
        %v1564 = vpack.c.bf16 %v1472, %v1468
        %v1565 = vpack.c.bf16 %v1477, %v1473
        %v1566 = vpack.c.bf16 %v1478, %v1474
        %v1567 = vpack.c.bf16 %v1479, %v1475
        %v1568 = vpack.c.bf16 %v1480, %v1476
        %v1569 = vpack.c.bf16 %v1485, %v1481
        %v1570 = vpack.c.bf16 %v1486, %v1482
        %v1571 = vpack.c.bf16 %v1487, %v1483
        %v1572 = vpack.c.bf16 %v1488, %v1484
        %v1573 = vpack.c.bf16 %v1493, %v1489
        %v1574 = vpack.c.bf16 %v1494, %v1490
        %v1575 = vpack.c.bf16 %v1495, %v1491
        %v1576 = vpack.c.bf16 %v1496, %v1492
        %v1577 = vpack.c.bf16 %v1501, %v1497
        %v1578 = vpack.c.bf16 %v1502, %v1498
        %v1579 = vpack.c.bf16 %v1503, %v1499
        %v1580 = vpack.c.bf16 %v1504, %v1500
        %v1581 = vpack.c.bf16 %v1509, %v1505
        %v1582 = vpack.c.bf16 %v1510, %v1506
        %v1583 = vpack.c.bf16 %v1511, %v1507
        %v1584 = vpack.c.bf16 %v1512, %v1508
        %v1585 = vpack.c.bf16 %v1517, %v1513
        %v1586 = vpack.c.bf16 %v1518, %v1514
        %v1587 = vpack.c.bf16 %v1519, %v1515
        %v1588 = vpack.c.bf16 %v1520, %v1516
        %v1589 = vpack.c.bf16 %v1525, %v1521
        %v1590 = vpack.c.bf16 %v1526, %v1522
        %v1591 = vpack.c.bf16 %v1527, %v1523
        %v1592 = vpack.c.bf16 %v1528, %v1524
        %v1657 = vunpack.c.l.b16 %v1529
        %v1658 = vunpack.c.l.b16 %v1530
        %v1659 = vunpack.c.l.b16 %v1531
        %v1660 = vunpack.c.l.b16 %v1532
        %v1661 = vunpack.c.h.b16 %v1529
        %v1662 = vunpack.c.h.b16 %v1530
        %v1663 = vunpack.c.h.b16 %v1531
        %v1664 = vunpack.c.h.b16 %v1532
        %v1665 = vunpack.c.l.b16 %v1533
        %v1666 = vunpack.c.l.b16 %v1534
        %v1667 = vunpack.c.l.b16 %v1535
        %v1668 = vunpack.c.l.b16 %v1536
        %v1669 = vunpack.c.h.b16 %v1533
        %v1670 = vunpack.c.h.b16 %v1534
        %v1671 = vunpack.c.h.b16 %v1535
        %v1672 = vunpack.c.h.b16 %v1536
        %v1673 = vunpack.c.l.b16 %v1537
        %v1674 = vunpack.c.l.b16 %v1538
        %v1675 = vunpack.c.l.b16 %v1539
        %v1676 = vunpack.c.l.b16 %v1540
        %v1677 = vunpack.c.h.b16 %v1537
        %v1678 = vunpack.c.h.b16 %v1538
        %v1679 = vunpack.c.h.b16 %v1539
        %v1680 = vunpack.c.h.b16 %v1540
        %v1681 = vunpack.c.l.b16 %v1541
        %v1682 = vunpack.c.l.b16 %v1542
        %v1683 = vunpack.c.l.b16 %v1543
        %v1684 = vunpack.c.l.b16 %v1544
        %v1685 = vunpack.c.h.b16 %v1541
        %v1686 = vunpack.c.h.b16 %v1542
        %v1687 = vunpack.c.h.b16 %v1543
        %v1688 = vunpack.c.h.b16 %v1544
        %v1689 = vunpack.c.l.b16 %v1545
        %v1690 = vunpack.c.l.b16 %v1546
        %v1691 = vunpack.c.l.b16 %v1547
        %v1692 = vunpack.c.l.b16 %v1548
        %v1693 = vunpack.c.h.b16 %v1545
        %v1694 = vunpack.c.h.b16 %v1546
        %v1695 = vunpack.c.h.b16 %v1547
        %v1696 = vunpack.c.h.b16 %v1548
        %v1697 = vunpack.c.l.b16 %v1549
        %v1698 = vunpack.c.l.b16 %v1550
        %v1699 = vunpack.c.l.b16 %v1551
        %v1700 = vunpack.c.l.b16 %v1552
        %v1701 = vunpack.c.h.b16 %v1549
        %v1702 = vunpack.c.h.b16 %v1550
        %v1703 = vunpack.c.h.b16 %v1551
        %v1704 = vunpack.c.h.b16 %v1552
        %v1705 = vunpack.c.l.b16 %v1553
        %v1706 = vunpack.c.l.b16 %v1554
        %v1707 = vunpack.c.l.b16 %v1555
        %v1708 = vunpack.c.l.b16 %v1556
        %v1709 = vunpack.c.h.b16 %v1553
        %v1710 = vunpack.c.h.b16 %v1554
        %v1711 = vunpack.c.h.b16 %v1555
        %v1712 = vunpack.c.h.b16 %v1556
        %v1713 = vunpack.c.l.b16 %v1557
        %v1714 = vunpack.c.l.b16 %v1558
        %v1715 = vunpack.c.l.b16 %v1559
        %v1716 = vunpack.c.l.b16 %v1560
        %v1717 = vunpack.c.h.b16 %v1557
        %v1718 = vunpack.c.h.b16 %v1558
        %v1719 = vunpack.c.h.b16 %v1559
        %v1720 = vunpack.c.h.b16 %v1560
        %v1721 = vunpack.c.l.b16 %v1561
        %v1722 = vunpack.c.l.b16 %v1562
        %v1723 = vunpack.c.l.b16 %v1563
        %v1724 = vunpack.c.l.b16 %v1564
        %v1725 = vunpack.c.h.b16 %v1561
        %v1726 = vunpack.c.h.b16 %v1562
        %v1727 = vunpack.c.h.b16 %v1563
        %v1728 = vunpack.c.h.b16 %v1564
        %v1729 = vunpack.c.l.b16 %v1565
        %v1730 = vunpack.c.l.b16 %v1566
        %v1731 = vunpack.c.l.b16 %v1567
        %v1732 = vunpack.c.l.b16 %v1568
        %v1733 = vunpack.c.h.b16 %v1565
        %v1734 = vunpack.c.h.b16 %v1566
        %v1735 = vunpack.c.h.b16 %v1567
        %v1736 = vunpack.c.h.b16 %v1568
        %v1737 = vunpack.c.l.b16 %v1569
        %v1738 = vunpack.c.l.b16 %v1570
        %v1739 = vunpack.c.l.b16 %v1571
        %v1740 = vunpack.c.l.b16 %v1572
        %v1741 = vunpack.c.h.b16 %v1569
        %v1742 = vunpack.c.h.b16 %v1570
        %v1743 = vunpack.c.h.b16 %v1571
        %v1744 = vunpack.c.h.b16 %v1572
        %v1745 = vunpack.c.l.b16 %v1573
        %v1746 = vunpack.c.l.b16 %v1574
        %v1747 = vunpack.c.l.b16 %v1575
        %v1748 = vunpack.c.l.b16 %v1576
        %v1749 = vunpack.c.h.b16 %v1573
        %v1750 = vunpack.c.h.b16 %v1574
        %v1751 = vunpack.c.h.b16 %v1575
        %v1752 = vunpack.c.h.b16 %v1576
        %v1753 = vunpack.c.l.b16 %v1577
        %v1754 = vunpack.c.l.b16 %v1578
        %v1755 = vunpack.c.l.b16 %v1579
        %v1756 = vunpack.c.l.b16 %v1580
        %v1757 = vunpack.c.h.b16 %v1577
        %v1758 = vunpack.c.h.b16 %v1578
        %v1759 = vunpack.c.h.b16 %v1579
        %v1760 = vunpack.c.h.b16 %v1580
        %v1761 = vunpack.c.l.b16 %v1581
        %v1762 = vunpack.c.l.b16 %v1582
        %v1763 = vunpack.c.l.b16 %v1583
        %v1764 = vunpack.c.l.b16 %v1584
        %v1765 = vunpack.c.h.b16 %v1581
        %v1766 = vunpack.c.h.b16 %v1582
        %v1767 = vunpack.c.h.b16 %v1583
        %v1768 = vunpack.c.h.b16 %v1584
        %v1769 = vunpack.c.l.b16 %v1585
        %v1770 = vunpack.c.l.b16 %v1586
        %v1771 = vunpack.c.l.b16 %v1587
        %v1772 = vunpack.c.l.b16 %v1588
        %v1773 = vunpack.c.h.b16 %v1585
        %v1774 = vunpack.c.h.b16 %v1586
        %v1775 = vunpack.c.h.b16 %v1587
        %v1776 = vunpack.c.h.b16 %v1588
        %v1777 = vunpack.c.l.b16 %v1589
        %v1778 = vunpack.c.l.b16 %v1590
        %v1779 = vunpack.c.l.b16 %v1591
        %v1780 = vunpack.c.l.b16 %v1592
        %v1781 = vunpack.c.h.b16 %v1589
        %v1782 = vunpack.c.h.b16 %v1590
        %v1783 = vunpack.c.h.b16 %v1591
        %v1784 = vunpack.c.h.b16 %v1592
        %v1785 = vpack.c.b16 %v1658, %v1657
        %v1786 = vpack.c.b16 %v1660, %v1659
        %v1787 = vpack.c.b16 %v1662, %v1661
        %v1788 = vpack.c.b16 %v1664, %v1663
        %v1789 = vpack.c.b16 %v1666, %v1665
        %v1790 = vpack.c.b16 %v1668, %v1667
        %v1791 = vpack.c.b16 %v1670, %v1669
        %v1792 = vpack.c.b16 %v1672, %v1671
        %v1793 = vpack.c.b16 %v1674, %v1673
        %v1794 = vpack.c.b16 %v1676, %v1675
        %v1795 = vpack.c.b16 %v1678, %v1677
        %v1796 = vpack.c.b16 %v1680, %v1679
        %v1797 = vpack.c.b16 %v1682, %v1681
        %v1798 = vpack.c.b16 %v1684, %v1683
        %v1799 = vpack.c.b16 %v1686, %v1685
        %v1800 = vpack.c.b16 %v1688, %v1687
        %v1801 = vpack.c.b16 %v1690, %v1689
        %v1802 = vpack.c.b16 %v1692, %v1691
        %v1803 = vpack.c.b16 %v1694, %v1693
        %v1804 = vpack.c.b16 %v1696, %v1695
        %v1805 = vpack.c.b16 %v1698, %v1697
        %v1806 = vpack.c.b16 %v1700, %v1699
        %v1807 = vpack.c.b16 %v1702, %v1701
        %v1808 = vpack.c.b16 %v1704, %v1703
        %v1809 = vpack.c.b16 %v1706, %v1705
        %v1810 = vpack.c.b16 %v1708, %v1707
        %v1811 = vpack.c.b16 %v1710, %v1709
        %v1812 = vpack.c.b16 %v1712, %v1711
        %v1813 = vpack.c.b16 %v1714, %v1713
        %v1814 = vpack.c.b16 %v1716, %v1715
        %v1815 = vpack.c.b16 %v1718, %v1717
        %v1816 = vpack.c.b16 %v1720, %v1719
        %v1817 = vpack.c.b16 %v1722, %v1721
        %v1818 = vpack.c.b16 %v1724, %v1723
        %v1819 = vpack.c.b16 %v1726, %v1725
        %v1820 = vpack.c.b16 %v1728, %v1727
        %v1821 = vpack.c.b16 %v1730, %v1729
        %v1822 = vpack.c.b16 %v1732, %v1731
        %v1823 = vpack.c.b16 %v1734, %v1733
        %v1824 = vpack.c.b16 %v1736, %v1735
        %v1825 = vpack.c.b16 %v1738, %v1737
        %v1826 = vpack.c.b16 %v1740, %v1739
        %v1827 = vpack.c.b16 %v1742, %v1741
        %v1828 = vpack.c.b16 %v1744, %v1743
        %v1829 = vpack.c.b16 %v1746, %v1745
        %v1830 = vpack.c.b16 %v1748, %v1747
        %v1831 = vpack.c.b16 %v1750, %v1749
        %v1832 = vpack.c.b16 %v1752, %v1751
        %v1833 = vpack.c.b16 %v1754, %v1753
        %v1834 = vpack.c.b16 %v1756, %v1755
        %v1835 = vpack.c.b16 %v1758, %v1757
        %v1836 = vpack.c.b16 %v1760, %v1759
        %v1837 = vpack.c.b16 %v1762, %v1761
        %v1838 = vpack.c.b16 %v1764, %v1763
        %v1839 = vpack.c.b16 %v1766, %v1765
        %v1840 = vpack.c.b16 %v1768, %v1767
        %v1841 = vpack.c.b16 %v1770, %v1769
        %v1842 = vpack.c.b16 %v1772, %v1771
        %v1843 = vpack.c.b16 %v1774, %v1773
        %v1844 = vpack.c.b16 %v1776, %v1775
        %v1845 = vpack.c.b16 %v1778, %v1777
        %v1846 = vpack.c.b16 %v1780, %v1779
        %v1847 = vpack.c.b16 %v1782, %v1781
        %v1848 = vpack.c.b16 %v1784, %v1783
        %1913 = vst [vmem:[%s363] sm:$0xff] %v1785
        %1914 = vst [vmem:[%s363 + $0x8] sm:$0xff] %v1786
        %1915 = vst [vmem:[%s363 + $0x10] sm:$0xff] %v1787
        %1916 = vst [vmem:[%s363 + $0x18] sm:$0xff] %v1788
        %1917 = vst [vmem:[%s363 + $0x20] sm:$0xff] %v1789
        %1918 = vst [vmem:[%s363 + $0x28] sm:$0xff] %v1790
        %1919 = vst [vmem:[%s363 + $0x30] sm:$0xff] %v1791
        %1920 = vst [vmem:[%s363 + $0x38] sm:$0xff] %v1792
        %1921 = vst [vmem:[%s363 + $0x40] sm:$0xff] %v1793
        %1922 = vst [vmem:[%s363 + $0x48] sm:$0xff] %v1794
        %1923 = vst [vmem:[%s363 + $0x50] sm:$0xff] %v1795
        %1924 = vst [vmem:[%s363 + $0x58] sm:$0xff] %v1796
        %1925 = vst [vmem:[%s363 + $0x60] sm:$0xff] %v1797
        %1926 = vst [vmem:[%s363 + $0x68] sm:$0xff] %v1798
        %1927 = vst [vmem:[%s363 + $0x70] sm:$0xff] %v1799
        %1928 = vst [vmem:[%s363 + $0x78] sm:$0xff] %v1800
        %1929 = vst [vmem:[%s363 + $0x80] sm:$0xff] %v1801
        %1930 = vst [vmem:[%s363 + $0x88] sm:$0xff] %v1802
        %1931 = vst [vmem:[%s363 + $0x90] sm:$0xff] %v1803
        %1932 = vst [vmem:[%s363 + $0x98] sm:$0xff] %v1804
        %1933 = vst [vmem:[%s363 + $0xa0] sm:$0xff] %v1805
        %1934 = vst [vmem:[%s363 + $0xa8] sm:$0xff] %v1806
        %1935 = vst [vmem:[%s363 + $0xb0] sm:$0xff] %v1807
        %1936 = vst [vmem:[%s363 + $0xb8] sm:$0xff] %v1808
        %1937 = vst [vmem:[%s363 + $0xc0] sm:$0xff] %v1809
        %1938 = vst [vmem:[%s363 + $0xc8] sm:$0xff] %v1810
        %1939 = vst [vmem:[%s363 + $0xd0] sm:$0xff] %v1811
        %1940 = vst [vmem:[%s363 + $0xd8] sm:$0xff] %v1812
        %1941 = vst [vmem:[%s363 + $0xe0] sm:$0xff] %v1813
        %1942 = vst [vmem:[%s363 + $0xe8] sm:$0xff] %v1814
        %1943 = vst [vmem:[%s363 + $0xf0] sm:$0xff] %v1815
        %1944 = vst [vmem:[%s363 + $0xf8] sm:$0xff] %v1816
        %1945 = vst [vmem:[%s363 + $0x100] sm:$0xff] %v1817
        %1946 = vst [vmem:[%s363 + $0x108] sm:$0xff] %v1818
        %1947 = vst [vmem:[%s363 + $0x110] sm:$0xff] %v1819
        %1948 = vst [vmem:[%s363 + $0x118] sm:$0xff] %v1820
        %1949 = vst [vmem:[%s363 + $0x120] sm:$0xff] %v1821
        %1950 = vst [vmem:[%s363 + $0x128] sm:$0xff] %v1822
        %1951 = vst [vmem:[%s363 + $0x130] sm:$0xff] %v1823
        %1952 = vst [vmem:[%s363 + $0x138] sm:$0xff] %v1824
        %1953 = vst [vmem:[%s363 + $0x140] sm:$0xff] %v1825
        %1954 = vst [vmem:[%s363 + $0x148] sm:$0xff] %v1826
        %1955 = vst [vmem:[%s363 + $0x150] sm:$0xff] %v1827
        %1956 = vst [vmem:[%s363 + $0x158] sm:$0xff] %v1828
        %1957 = vst [vmem:[%s363 + $0x160] sm:$0xff] %v1829
        %1958 = vst [vmem:[%s363 + $0x168] sm:$0xff] %v1830
        %1959 = vst [vmem:[%s363 + $0x170] sm:$0xff] %v1831
        %1960 = vst [vmem:[%s363 + $0x178] sm:$0xff] %v1832
        %1961 = vst [vmem:[%s363 + $0x180] sm:$0xff] %v1833
        %1962 = vst [vmem:[%s363 + $0x188] sm:$0xff] %v1834
        %1963 = vst [vmem:[%s363 + $0x190] sm:$0xff] %v1835
        %1964 = vst [vmem:[%s363 + $0x198] sm:$0xff] %v1836
        %1965 = vst [vmem:[%s363 + $0x1a0] sm:$0xff] %v1837
        %1966 = vst [vmem:[%s363 + $0x1a8] sm:$0xff] %v1838
        %1967 = vst [vmem:[%s363 + $0x1b0] sm:$0xff] %v1839
        %1968 = vst [vmem:[%s363 + $0x1b8] sm:$0xff] %v1840
        %1969 = vst [vmem:[%s363 + $0x1c0] sm:$0xff] %v1841
        %1970 = vst [vmem:[%s363 + $0x1c8] sm:$0xff] %v1842
        %1971 = vst [vmem:[%s363 + $0x1d0] sm:$0xff] %v1843
        %1972 = vst [vmem:[%s363 + $0x1d8] sm:$0xff] %v1844
        %1973 = vst [vmem:[%s363 + $0x1e0] sm:$0xff] %v1845
        %1974 = vst [vmem:[%s363 + $0x1e8] sm:$0xff] %v1846
        %1975 = vst [vmem:[%s363 + $0x1f0] sm:$0xff] %v1847
        %1976 = vst [vmem:[%s363 + $0x1f8] sm:$0xff] %v1848
        %v1977 = vld [vmem:[#allocation7] sm:$0xff]
        %v1978 = vld [vmem:[#allocation7 + $0x8] sm:$0xff]
        %v1979 = vld [vmem:[#allocation7 + $0x10] sm:$0xff]
        %v1980 = vld [vmem:[#allocation7 + $0x18] sm:$0xff]
        %v1981 = vld [vmem:[#allocation7 + $0x20] sm:$0xff]
        %v1982 = vld [vmem:[#allocation7 + $0x28] sm:$0xff]
        %v1983 = vld [vmem:[#allocation7 + $0x30] sm:$0xff]
        %v1984 = vld [vmem:[#allocation7 + $0x38] sm:$0xff]
        %v1985 = vld [vmem:[#allocation7 + $0x40] sm:$0xff]
        %v1986 = vld [vmem:[#allocation7 + $0x48] sm:$0xff]
        %v1987 = vld [vmem:[#allocation7 + $0x50] sm:$0xff]
        %v1988 = vld [vmem:[#allocation7 + $0x58] sm:$0xff]
        %v1989 = vld [vmem:[#allocation7 + $0x60] sm:$0xff]
        %v1990 = vld [vmem:[#allocation7 + $0x68] sm:$0xff]
        %v1991 = vld [vmem:[#allocation7 + $0x70] sm:$0xff]
        %v1992 = vld [vmem:[#allocation7 + $0x78] sm:$0xff]
        %v1993 = vld [vmem:[#allocation7 + $0x80] sm:$0xff]
        %v1994 = vld [vmem:[#allocation7 + $0x88] sm:$0xff]
        %v1995 = vld [vmem:[#allocation7 + $0x90] sm:$0xff]
        %v1996 = vld [vmem:[#allocation7 + $0x98] sm:$0xff]
        %v1997 = vld [vmem:[#allocation7 + $0xa0] sm:$0xff]
        %v1998 = vld [vmem:[#allocation7 + $0xa8] sm:$0xff]
        %v1999 = vld [vmem:[#allocation7 + $0xb0] sm:$0xff]
        %v2000 = vld [vmem:[#allocation7 + $0xb8] sm:$0xff]
        %v2001 = vld [vmem:[#allocation7 + $0xc0] sm:$0xff]
        %v2002 = vld [vmem:[#allocation7 + $0xc8] sm:$0xff]
        %v2003 = vld [vmem:[#allocation7 + $0xd0] sm:$0xff]
        %v2004 = vld [vmem:[#allocation7 + $0xd8] sm:$0xff]
        %v2005 = vld [vmem:[#allocation7 + $0xe0] sm:$0xff]
        %v2006 = vld [vmem:[#allocation7 + $0xe8] sm:$0xff]
        %v2007 = vld [vmem:[#allocation7 + $0xf0] sm:$0xff]
        %v2008 = vld [vmem:[#allocation7 + $0xf8] sm:$0xff]
        %v2009 = vld [vmem:[#allocation7 + $0x100] sm:$0xff]
        %v2010 = vld [vmem:[#allocation7 + $0x108] sm:$0xff]
        %v2011 = vld [vmem:[#allocation7 + $0x110] sm:$0xff]
        %v2012 = vld [vmem:[#allocation7 + $0x118] sm:$0xff]
        %v2013 = vld [vmem:[#allocation7 + $0x120] sm:$0xff]
        %v2014 = vld [vmem:[#allocation7 + $0x128] sm:$0xff]
        %v2015 = vld [vmem:[#allocation7 + $0x130] sm:$0xff]
        %v2016 = vld [vmem:[#allocation7 + $0x138] sm:$0xff]
        %v2017 = vld [vmem:[#allocation7 + $0x140] sm:$0xff]
        %v2018 = vld [vmem:[#allocation7 + $0x148] sm:$0xff]
        %v2019 = vld [vmem:[#allocation7 + $0x150] sm:$0xff]
        %v2020 = vld [vmem:[#allocation7 + $0x158] sm:$0xff]
        %v2021 = vld [vmem:[#allocation7 + $0x160] sm:$0xff]
        %v2022 = vld [vmem:[#allocation7 + $0x168] sm:$0xff]
        %v2023 = vld [vmem:[#allocation7 + $0x170] sm:$0xff]
        %v2024 = vld [vmem:[#allocation7 + $0x178] sm:$0xff]
        %v2025 = vld [vmem:[#allocation7 + $0x180] sm:$0xff]
        %v2026 = vld [vmem:[#allocation7 + $0x188] sm:$0xff]
        %v2027 = vld [vmem:[#allocation7 + $0x190] sm:$0xff]
        %v2028 = vld [vmem:[#allocation7 + $0x198] sm:$0xff]
        %v2029 = vld [vmem:[#allocation7 + $0x1a0] sm:$0xff]
        %v2030 = vld [vmem:[#allocation7 + $0x1a8] sm:$0xff]
        %v2031 = vld [vmem:[#allocation7 + $0x1b0] sm:$0xff]
        %v2032 = vld [vmem:[#allocation7 + $0x1b8] sm:$0xff]
        %v2033 = vld [vmem:[#allocation7 + $0x1c0] sm:$0xff]
        %v2034 = vld [vmem:[#allocation7 + $0x1c8] sm:$0xff]
        %v2035 = vld [vmem:[#allocation7 + $0x1d0] sm:$0xff]
        %v2036 = vld [vmem:[#allocation7 + $0x1d8] sm:$0xff]
        %v2037 = vld [vmem:[#allocation7 + $0x1e0] sm:$0xff]
        %v2038 = vld [vmem:[#allocation7 + $0x1e8] sm:$0xff]
        %v2039 = vld [vmem:[#allocation7 + $0x1f0] sm:$0xff]
        %v2040 = vld [vmem:[#allocation7 + $0x1f8] sm:$0xff]
        %v2041 = vld [vmem:[#allocation8] sm:$0xf]
        %v2043 = vlaneseq
        %v2044 = vshrl.u32 %v2043, 7
        %v2045 = vsub.s32 0, %v2044
        %v2046 = vrot.slane %v2041, %v2045
        %v2047 = vlaneseq
        %v2048 = vshrl.u32 %v2047, 7
        %v2049 = vsub.s32 1, %v2048
        %v2050 = vrot.slane %v2041, %v2049
        %v2051 = vlaneseq
        %v2052 = vshrl.u32 %v2051, 7
        %v2053 = vsub.s32 2, %v2052
        %v2054 = vrot.slane %v2041, %v2053
        %v2055 = vlaneseq
        %v2056 = vshrl.u32 %v2055, 7
        %v2057 = vsub.s32 3, %v2056
        %v2058 = vrot.slane %v2041, %v2057
        %v2127 = vunpack.c.l.b16 %v1977
        %v2128 = vunpack.c.h.b16 %v1977
        %v2129 = vunpack.c.l.b16 %v1978
        %v2130 = vunpack.c.h.b16 %v1978
        %v2131 = vunpack.c.l.b16 %v1979
        %v2132 = vunpack.c.h.b16 %v1979
        %v2133 = vunpack.c.l.b16 %v1980
        %v2134 = vunpack.c.h.b16 %v1980
        %v2135 = vunpack.c.l.b16 %v1981
        %v2136 = vunpack.c.h.b16 %v1981
        %v2137 = vunpack.c.l.b16 %v1982
        %v2138 = vunpack.c.h.b16 %v1982
        %v2139 = vunpack.c.l.b16 %v1983
        %v2140 = vunpack.c.h.b16 %v1983
        %v2141 = vunpack.c.l.b16 %v1984
        %v2142 = vunpack.c.h.b16 %v1984
        %v2143 = vunpack.c.l.b16 %v1985
        %v2144 = vunpack.c.h.b16 %v1985
        %v2145 = vunpack.c.l.b16 %v1986
        %v2146 = vunpack.c.h.b16 %v1986
        %v2147 = vunpack.c.l.b16 %v1987
        %v2148 = vunpack.c.h.b16 %v1987
        %v2149 = vunpack.c.l.b16 %v1988
        %v2150 = vunpack.c.h.b16 %v1988
        %v2151 = vunpack.c.l.b16 %v1989
        %v2152 = vunpack.c.h.b16 %v1989
        %v2153 = vunpack.c.l.b16 %v1990
        %v2154 = vunpack.c.h.b16 %v1990
        %v2155 = vunpack.c.l.b16 %v1991
        %v2156 = vunpack.c.h.b16 %v1991
        %v2157 = vunpack.c.l.b16 %v1992
        %v2158 = vunpack.c.h.b16 %v1992
        %v2159 = vunpack.c.l.b16 %v1993
        %v2160 = vunpack.c.h.b16 %v1993
        %v2161 = vunpack.c.l.b16 %v1994
        %v2162 = vunpack.c.h.b16 %v1994
        %v2163 = vunpack.c.l.b16 %v1995
        %v2164 = vunpack.c.h.b16 %v1995
        %v2165 = vunpack.c.l.b16 %v1996
        %v2166 = vunpack.c.h.b16 %v1996
        %v2167 = vunpack.c.l.b16 %v1997
        %v2168 = vunpack.c.h.b16 %v1997
        %v2169 = vunpack.c.l.b16 %v1998
        %v2170 = vunpack.c.h.b16 %v1998
        %v2171 = vunpack.c.l.b16 %v1999
        %v2172 = vunpack.c.h.b16 %v1999
        %v2173 = vunpack.c.l.b16 %v2000
        %v2174 = vunpack.c.h.b16 %v2000
        %v2175 = vunpack.c.l.b16 %v2001
        %v2176 = vunpack.c.h.b16 %v2001
        %v2177 = vunpack.c.l.b16 %v2002
        %v2178 = vunpack.c.h.b16 %v2002
        %v2179 = vunpack.c.l.b16 %v2003
        %v2180 = vunpack.c.h.b16 %v2003
        %v2181 = vunpack.c.l.b16 %v2004
        %v2182 = vunpack.c.h.b16 %v2004
        %v2183 = vunpack.c.l.b16 %v2005
        %v2184 = vunpack.c.h.b16 %v2005
        %v2185 = vunpack.c.l.b16 %v2006
        %v2186 = vunpack.c.h.b16 %v2006
        %v2187 = vunpack.c.l.b16 %v2007
        %v2188 = vunpack.c.h.b16 %v2007
        %v2189 = vunpack.c.l.b16 %v2008
        %v2190 = vunpack.c.h.b16 %v2008
        %v2191 = vunpack.c.l.b16 %v2009
        %v2192 = vunpack.c.h.b16 %v2009
        %v2193 = vunpack.c.l.b16 %v2010
        %v2194 = vunpack.c.h.b16 %v2010
        %v2195 = vunpack.c.l.b16 %v2011
        %v2196 = vunpack.c.h.b16 %v2011
        %v2197 = vunpack.c.l.b16 %v2012
        %v2198 = vunpack.c.h.b16 %v2012
        %v2199 = vunpack.c.l.b16 %v2013
        %v2200 = vunpack.c.h.b16 %v2013
        %v2201 = vunpack.c.l.b16 %v2014
        %v2202 = vunpack.c.h.b16 %v2014
        %v2203 = vunpack.c.l.b16 %v2015
        %v2204 = vunpack.c.h.b16 %v2015
        %v2205 = vunpack.c.l.b16 %v2016
        %v2206 = vunpack.c.h.b16 %v2016
        %v2207 = vunpack.c.l.b16 %v2017
        %v2208 = vunpack.c.h.b16 %v2017
        %v2209 = vunpack.c.l.b16 %v2018
        %v2210 = vunpack.c.h.b16 %v2018
        %v2211 = vunpack.c.l.b16 %v2019
        %v2212 = vunpack.c.h.b16 %v2019
        %v2213 = vunpack.c.l.b16 %v2020
        %v2214 = vunpack.c.h.b16 %v2020
        %v2215 = vunpack.c.l.b16 %v2021
        %v2216 = vunpack.c.h.b16 %v2021
        %v2217 = vunpack.c.l.b16 %v2022
        %v2218 = vunpack.c.h.b16 %v2022
        %v2219 = vunpack.c.l.b16 %v2023
        %v2220 = vunpack.c.h.b16 %v2023
        %v2221 = vunpack.c.l.b16 %v2024
        %v2222 = vunpack.c.h.b16 %v2024
        %v2223 = vunpack.c.l.b16 %v2025
        %v2224 = vunpack.c.h.b16 %v2025
        %v2225 = vunpack.c.l.b16 %v2026
        %v2226 = vunpack.c.h.b16 %v2026
        %v2227 = vunpack.c.l.b16 %v2027
        %v2228 = vunpack.c.h.b16 %v2027
        %v2229 = vunpack.c.l.b16 %v2028
        %v2230 = vunpack.c.h.b16 %v2028
        %v2231 = vunpack.c.l.b16 %v2029
        %v2232 = vunpack.c.h.b16 %v2029
        %v2233 = vunpack.c.l.b16 %v2030
        %v2234 = vunpack.c.h.b16 %v2030
        %v2235 = vunpack.c.l.b16 %v2031
        %v2236 = vunpack.c.h.b16 %v2031
        %v2237 = vunpack.c.l.b16 %v2032
        %v2238 = vunpack.c.h.b16 %v2032
        %v2239 = vunpack.c.l.b16 %v2033
        %v2240 = vunpack.c.h.b16 %v2033
        %v2241 = vunpack.c.l.b16 %v2034
        %v2242 = vunpack.c.h.b16 %v2034
        %v2243 = vunpack.c.l.b16 %v2035
        %v2244 = vunpack.c.h.b16 %v2035
        %v2245 = vunpack.c.l.b16 %v2036
        %v2246 = vunpack.c.h.b16 %v2036
        %v2247 = vunpack.c.l.b16 %v2037
        %v2248 = vunpack.c.h.b16 %v2037
        %v2249 = vunpack.c.l.b16 %v2038
        %v2250 = vunpack.c.h.b16 %v2038
        %v2251 = vunpack.c.l.b16 %v2039
        %v2252 = vunpack.c.h.b16 %v2039
        %v2253 = vunpack.c.l.b16 %v2040
        %v2254 = vunpack.c.h.b16 %v2040
        %v2255 = vpack.c.b16 %v2131, %v2127
        %v2256 = vpack.c.b16 %v2132, %v2128
        %v2257 = vpack.c.b16 %v2133, %v2129
        %v2258 = vpack.c.b16 %v2134, %v2130
        %v2259 = vpack.c.b16 %v2139, %v2135
        %v2260 = vpack.c.b16 %v2140, %v2136
        %v2261 = vpack.c.b16 %v2141, %v2137
        %v2262 = vpack.c.b16 %v2142, %v2138
        %v2263 = vpack.c.b16 %v2147, %v2143
        %v2264 = vpack.c.b16 %v2148, %v2144
        %v2265 = vpack.c.b16 %v2149, %v2145
        %v2266 = vpack.c.b16 %v2150, %v2146
        %v2267 = vpack.c.b16 %v2155, %v2151
        %v2268 = vpack.c.b16 %v2156, %v2152
        %v2269 = vpack.c.b16 %v2157, %v2153
        %v2270 = vpack.c.b16 %v2158, %v2154
        %v2271 = vpack.c.b16 %v2163, %v2159
        %v2272 = vpack.c.b16 %v2164, %v2160
        %v2273 = vpack.c.b16 %v2165, %v2161
        %v2274 = vpack.c.b16 %v2166, %v2162
        %v2275 = vpack.c.b16 %v2171, %v2167
        %v2276 = vpack.c.b16 %v2172, %v2168
        %v2277 = vpack.c.b16 %v2173, %v2169
        %v2278 = vpack.c.b16 %v2174, %v2170
        %v2279 = vpack.c.b16 %v2179, %v2175
        %v2280 = vpack.c.b16 %v2180, %v2176
        %v2281 = vpack.c.b16 %v2181, %v2177
        %v2282 = vpack.c.b16 %v2182, %v2178
        %v2283 = vpack.c.b16 %v2187, %v2183
        %v2284 = vpack.c.b16 %v2188, %v2184
        %v2285 = vpack.c.b16 %v2189, %v2185
        %v2286 = vpack.c.b16 %v2190, %v2186
        %v2287 = vpack.c.b16 %v2195, %v2191
        %v2288 = vpack.c.b16 %v2196, %v2192
        %v2289 = vpack.c.b16 %v2197, %v2193
        %v2290 = vpack.c.b16 %v2198, %v2194
        %v2291 = vpack.c.b16 %v2203, %v2199
        %v2292 = vpack.c.b16 %v2204, %v2200
        %v2293 = vpack.c.b16 %v2205, %v2201
        %v2294 = vpack.c.b16 %v2206, %v2202
        %v2295 = vpack.c.b16 %v2211, %v2207
        %v2296 = vpack.c.b16 %v2212, %v2208
        %v2297 = vpack.c.b16 %v2213, %v2209
        %v2298 = vpack.c.b16 %v2214, %v2210
        %v2299 = vpack.c.b16 %v2219, %v2215
        %v2300 = vpack.c.b16 %v2220, %v2216
        %v2301 = vpack.c.b16 %v2221, %v2217
        %v2302 = vpack.c.b16 %v2222, %v2218
        %v2303 = vpack.c.b16 %v2227, %v2223
        %v2304 = vpack.c.b16 %v2228, %v2224
        %v2305 = vpack.c.b16 %v2229, %v2225
        %v2306 = vpack.c.b16 %v2230, %v2226
        %v2307 = vpack.c.b16 %v2235, %v2231
        %v2308 = vpack.c.b16 %v2236, %v2232
        %v2309 = vpack.c.b16 %v2237, %v2233
        %v2310 = vpack.c.b16 %v2238, %v2234
        %v2311 = vpack.c.b16 %v2243, %v2239
        %v2312 = vpack.c.b16 %v2244, %v2240
        %v2313 = vpack.c.b16 %v2245, %v2241
        %v2314 = vpack.c.b16 %v2246, %v2242
        %v2315 = vpack.c.b16 %v2251, %v2247
        %v2316 = vpack.c.b16 %v2252, %v2248
        %v2317 = vpack.c.b16 %v2253, %v2249
        %v2318 = vpack.c.b16 %v2254, %v2250
        %2383 = vmatprep.subr.bf16.mxu0 %v2284
        %2384 = vmatpush1.bf16.msra.mxu0 %v2283
        %2385 = vmatprep.subr.bf16.mxu0 %v2280
        %2386 = vmatpush1.bf16.msra.mxu0 %v2279
        %2387 = vmatprep.subr.bf16.mxu0 %v2276
        %2388 = vmatpush1.bf16.msra.mxu0 %v2275
        %2389 = vmatprep.subr.bf16.mxu0 %v2272
        %2390 = vmatpush1.bf16.msra.mxu0 %v2271
        %2391 = vmatprep.subr.bf16.mxu0 %v2268
        %2392 = vmatpush1.bf16.msra.mxu0 %v2267
        %2393 = vmatprep.subr.bf16.mxu0 %v2264
        %2394 = vmatpush1.bf16.msra.mxu0 %v2263
        %2395 = vmatprep.subr.bf16.mxu0 %v2260
        %2396 = vmatpush1.bf16.msra.mxu0 %v2259
        %2397 = vmatprep.subr.bf16.mxu0 %v2256
        %2398 = vmatpush1.bf16.msra.mxu0 %v2255
        %2399 = vmatprep.subr.bf16.mxu0 %v2316
        %2400 = vmatpush2.bf16.msra.mxu0 %v2315
        %2401 = vmatprep.subr.bf16.mxu0 %v2312
        %2402 = vmatpush2.bf16.msra.mxu0 %v2311
        %2403 = vmatprep.subr.bf16.mxu0 %v2308
        %2404 = vmatpush2.bf16.msra.mxu0 %v2307
        %2405 = vmatprep.subr.bf16.mxu0 %v2304
        %2406 = vmatpush2.bf16.msra.mxu0 %v2303
        %2407 = vmatprep.subr.bf16.mxu0 %v2300
        %2408 = vmatpush2.bf16.msra.mxu0 %v2299
        %2409 = vmatprep.subr.bf16.mxu0 %v2296
        %2410 = vmatpush2.bf16.msra.mxu0 %v2295
        %2411 = vmatprep.subr.bf16.mxu0 %v2292
        %2412 = vmatpush2.bf16.msra.mxu0 %v2291
        %2413 = vmatprep.subr.bf16.mxu0 %v2288
        %2414 = vmatpush2.bf16.msra.mxu0 %v2287
        %2415 = vmatprep.mubr.bf16.mxu0 %v578
        %2416 = vmatmul.mubr.bf16.gmra.mxu0 %v577
        %v2417 = vpop.f32.mrf.mxu0
        %v2418 = vadd.f32 %v2046, %v2417
        %v2419 = vpop.f32.mrf.mxu0
        %v2420 = vadd.f32 %v2050, %v2419
        %v2421 = vpop.f32.mrf.mxu0
        %v2422 = vadd.f32 %v2046, %v2421
        %v2423 = vpop.f32.mrf.mxu0
        %v2424 = vadd.f32 %v2050, %v2423
        %2425 = vmatprep.mubr.bf16.mxu0 %v580
        %2426 = vmatmul.mubr.bf16.gmra.mxu0 %v579
        %v2427 = vpop.f32.mrf.mxu0
        %v2428 = vadd.f32 %v2046, %v2427
        %v2429 = vpop.f32.mrf.mxu0
        %v2430 = vadd.f32 %v2050, %v2429
        %v2431 = vpop.f32.mrf.mxu0
        %v2432 = vadd.f32 %v2046, %v2431
        %v2433 = vpop.f32.mrf.mxu0
        %v2434 = vadd.f32 %v2050, %v2433
        %2435 = vmatprep.mubr.bf16.mxu0 %v582
        %2436 = vmatmul.mubr.bf16.gmra.mxu0 %v581
        %v2437 = vpop.f32.mrf.mxu0
        %v2438 = vadd.f32 %v2046, %v2437
        %v2439 = vpop.f32.mrf.mxu0
        %v2440 = vadd.f32 %v2050, %v2439
        %v2441 = vpop.f32.mrf.mxu0
        %v2442 = vadd.f32 %v2046, %v2441
        %v2443 = vpop.f32.mrf.mxu0
        %v2444 = vadd.f32 %v2050, %v2443
        %2445 = vmatprep.mubr.bf16.mxu0 %v584
        %2446 = vmatmul.mubr.bf16.gmra.mxu0 %v583
        %v2447 = vpop.f32.mrf.mxu0
        %v2448 = vadd.f32 %v2046, %v2447
        %v2449 = vpop.f32.mrf.mxu0
        %v2450 = vadd.f32 %v2050, %v2449
        %v2451 = vpop.f32.mrf.mxu0
        %v2452 = vadd.f32 %v2046, %v2451
        %v2453 = vpop.f32.mrf.mxu0
        %v2454 = vadd.f32 %v2050, %v2453
        %2455 = vmatprep.mubr.bf16.mxu0 %v586
        %2456 = vmatmul.mubr.bf16.gmra.mxu0 %v585
        %v2457 = vpop.f32.mrf.mxu0
        %v2458 = vadd.f32 %v2046, %v2457
        %v2459 = vpop.f32.mrf.mxu0
        %v2460 = vadd.f32 %v2050, %v2459
        %v2461 = vpop.f32.mrf.mxu0
        %v2462 = vadd.f32 %v2046, %v2461
        %v2463 = vpop.f32.mrf.mxu0
        %v2464 = vadd.f32 %v2050, %v2463
        %2465 = vmatprep.mubr.bf16.mxu0 %v588
        %2466 = vmatmul.mubr.bf16.gmra.mxu0 %v587
        %v2467 = vpop.f32.mrf.mxu0
        %v2468 = vadd.f32 %v2046, %v2467
        %v2469 = vpop.f32.mrf.mxu0
        %v2470 = vadd.f32 %v2050, %v2469
        %v2471 = vpop.f32.mrf.mxu0
        %v2472 = vadd.f32 %v2046, %v2471
        %v2473 = vpop.f32.mrf.mxu0
        %v2474 = vadd.f32 %v2050, %v2473
        %2475 = vmatprep.mubr.bf16.mxu0 %v590
        %2476 = vmatmul.mubr.bf16.gmra.mxu0 %v589
        %v2477 = vpop.f32.mrf.mxu0
        %v2478 = vadd.f32 %v2046, %v2477
        %v2479 = vpop.f32.mrf.mxu0
        %v2480 = vadd.f32 %v2050, %v2479
        %v2481 = vpop.f32.mrf.mxu0
        %v2482 = vadd.f32 %v2046, %v2481
        %v2483 = vpop.f32.mrf.mxu0
        %v2484 = vadd.f32 %v2050, %v2483
        %2485 = vmatprep.mubr.bf16.mxu0 %v592
        %2486 = vmatmul.mubr.bf16.gmra.mxu0 %v591
        %v2487 = vpop.f32.mrf.mxu0
        %v2488 = vadd.f32 %v2046, %v2487
        %v2489 = vpop.f32.mrf.mxu0
        %v2490 = vadd.f32 %v2050, %v2489
        %v2491 = vpop.f32.mrf.mxu0
        %v2492 = vadd.f32 %v2046, %v2491
        %v2493 = vpop.f32.mrf.mxu0
        %v2494 = vadd.f32 %v2050, %v2493
        %2495 = vmatprep.mubr.bf16.mxu0 %v594
        %2496 = vmatmul.mubr.bf16.gmra.mxu0 %v593
        %v2497 = vpop.f32.mrf.mxu0
        %v2498 = vadd.f32 %v2046, %v2497
        %v2499 = vpop.f32.mrf.mxu0
        %v2500 = vadd.f32 %v2050, %v2499
        %v2501 = vpop.f32.mrf.mxu0
        %v2502 = vadd.f32 %v2046, %v2501
        %v2503 = vpop.f32.mrf.mxu0
        %v2504 = vadd.f32 %v2050, %v2503
        %2505 = vmatprep.mubr.bf16.mxu0 %v596
        %2506 = vmatmul.mubr.bf16.gmra.mxu0 %v595
        %v2507 = vpop.f32.mrf.mxu0
        %v2508 = vadd.f32 %v2046, %v2507
        %v2509 = vpop.f32.mrf.mxu0
        %v2510 = vadd.f32 %v2050, %v2509
        %v2511 = vpop.f32.mrf.mxu0
        %v2512 = vadd.f32 %v2046, %v2511
        %v2513 = vpop.f32.mrf.mxu0
        %v2514 = vadd.f32 %v2050, %v2513
        %2515 = vmatprep.mubr.bf16.mxu0 %v598
        %2516 = vmatmul.mubr.bf16.gmra.mxu0 %v597
        %v2517 = vpop.f32.mrf.mxu0
        %v2518 = vadd.f32 %v2046, %v2517
        %v2519 = vpop.f32.mrf.mxu0
        %v2520 = vadd.f32 %v2050, %v2519
        %v2521 = vpop.f32.mrf.mxu0
        %v2522 = vadd.f32 %v2046, %v2521
        %v2523 = vpop.f32.mrf.mxu0
        %v2524 = vadd.f32 %v2050, %v2523
        %2525 = vmatprep.mubr.bf16.mxu0 %v600
        %2526 = vmatmul.mubr.bf16.gmra.mxu0 %v599
        %v2527 = vpop.f32.mrf.mxu0
        %v2528 = vadd.f32 %v2046, %v2527
        %v2529 = vpop.f32.mrf.mxu0
        %v2530 = vadd.f32 %v2050, %v2529
        %v2531 = vpop.f32.mrf.mxu0
        %v2532 = vadd.f32 %v2046, %v2531
        %v2533 = vpop.f32.mrf.mxu0
        %v2534 = vadd.f32 %v2050, %v2533
        %2535 = vmatprep.mubr.bf16.mxu0 %v602
        %2536 = vmatmul.mubr.bf16.gmra.mxu0 %v601
        %v2537 = vpop.f32.mrf.mxu0
        %v2538 = vadd.f32 %v2046, %v2537
        %v2539 = vpop.f32.mrf.mxu0
        %v2540 = vadd.f32 %v2050, %v2539
        %v2541 = vpop.f32.mrf.mxu0
        %v2542 = vadd.f32 %v2046, %v2541
        %v2543 = vpop.f32.mrf.mxu0
        %v2544 = vadd.f32 %v2050, %v2543
        %2545 = vmatprep.mubr.bf16.mxu0 %v604
        %2546 = vmatmul.mubr.bf16.gmra.mxu0 %v603
        %v2547 = vpop.f32.mrf.mxu0
        %v2548 = vadd.f32 %v2046, %v2547
        %v2549 = vpop.f32.mrf.mxu0
        %v2550 = vadd.f32 %v2050, %v2549
        %v2551 = vpop.f32.mrf.mxu0
        %v2552 = vadd.f32 %v2046, %v2551
        %v2553 = vpop.f32.mrf.mxu0
        %v2554 = vadd.f32 %v2050, %v2553
        %2555 = vmatprep.mubr.bf16.mxu0 %v606
        %2556 = vmatmul.mubr.bf16.gmra.mxu0 %v605
        %v2557 = vpop.f32.mrf.mxu0
        %v2558 = vadd.f32 %v2046, %v2557
        %v2559 = vpop.f32.mrf.mxu0
        %v2560 = vadd.f32 %v2050, %v2559
        %v2561 = vpop.f32.mrf.mxu0
        %v2562 = vadd.f32 %v2046, %v2561
        %v2563 = vpop.f32.mrf.mxu0
        %v2564 = vadd.f32 %v2050, %v2563
        %2565 = vmatprep.mubr.bf16.mxu0 %v608
        %2566 = vmatmul.mubr.bf16.gmra.mxu0 %v607
        %v2567 = vpop.f32.mrf.mxu0
        %v2568 = vadd.f32 %v2046, %v2567
        %v2569 = vpop.f32.mrf.mxu0
        %v2570 = vadd.f32 %v2050, %v2569
        %v2571 = vpop.f32.mrf.mxu0
        %v2572 = vadd.f32 %v2046, %v2571
        %v2573 = vpop.f32.mrf.mxu0
        %v2574 = vadd.f32 %v2050, %v2573
        %2575 = vdwg.mxu0
        %2576 = vmatprep.subr.bf16.mxu0 %v2286
        %2577 = vmatpush1.bf16.msra.mxu0 %v2285
        %2578 = vmatprep.subr.bf16.mxu0 %v2282
        %2579 = vmatpush1.bf16.msra.mxu0 %v2281
        %2580 = vmatprep.subr.bf16.mxu0 %v2278
        %2581 = vmatpush1.bf16.msra.mxu0 %v2277
        %2582 = vmatprep.subr.bf16.mxu0 %v2274
        %2583 = vmatpush1.bf16.msra.mxu0 %v2273
        %2584 = vmatprep.subr.bf16.mxu0 %v2270
        %2585 = vmatpush1.bf16.msra.mxu0 %v2269
        %2586 = vmatprep.subr.bf16.mxu0 %v2266
        %2587 = vmatpush1.bf16.msra.mxu0 %v2265
        %2588 = vmatprep.subr.bf16.mxu0 %v2262
        %2589 = vmatpush1.bf16.msra.mxu0 %v2261
        %2590 = vmatprep.subr.bf16.mxu0 %v2258
        %2591 = vmatpush1.bf16.msra.mxu0 %v2257
        %2592 = vmatprep.subr.bf16.mxu0 %v2318
        %2593 = vmatpush2.bf16.msra.mxu0 %v2317
        %2594 = vmatprep.subr.bf16.mxu0 %v2314
        %2595 = vmatpush2.bf16.msra.mxu0 %v2313
        %2596 = vmatprep.subr.bf16.mxu0 %v2310
        %2597 = vmatpush2.bf16.msra.mxu0 %v2309
        %2598 = vmatprep.subr.bf16.mxu0 %v2306
        %2599 = vmatpush2.bf16.msra.mxu0 %v2305
        %2600 = vmatprep.subr.bf16.mxu0 %v2302
        %2601 = vmatpush2.bf16.msra.mxu0 %v2301
        %2602 = vmatprep.subr.bf16.mxu0 %v2298
        %2603 = vmatpush2.bf16.msra.mxu0 %v2297
        %2604 = vmatprep.subr.bf16.mxu0 %v2294
        %2605 = vmatpush2.bf16.msra.mxu0 %v2293
        %2606 = vmatprep.subr.bf16.mxu0 %v2290
        %2607 = vmatpush2.bf16.msra.mxu0 %v2289
        %2608 = vmatprep.mubr.bf16.mxu0 %v578
        %2609 = vmatmul.mubr.bf16.gmra.mxu0 %v577
        %v2610 = vpop.f32.mrf.mxu0
        %v2611 = vadd.f32 %v2054, %v2610
        %v2612 = vpop.f32.mrf.mxu0
        %v2613 = vadd.f32 %v2058, %v2612
        %v2614 = vpop.f32.mrf.mxu0
        %v2615 = vadd.f32 %v2054, %v2614
        %v2616 = vpop.f32.mrf.mxu0
        %v2617 = vadd.f32 %v2058, %v2616
        %2618 = vmatprep.mubr.bf16.mxu0 %v580
        %2619 = vmatmul.mubr.bf16.gmra.mxu0 %v579
        %v2620 = vpop.f32.mrf.mxu0
        %v2621 = vadd.f32 %v2054, %v2620
        %v2622 = vpop.f32.mrf.mxu0
        %v2623 = vadd.f32 %v2058, %v2622
        %v2624 = vpop.f32.mrf.mxu0
        %v2625 = vadd.f32 %v2054, %v2624
        %v2626 = vpop.f32.mrf.mxu0
        %v2627 = vadd.f32 %v2058, %v2626
        %2628 = vmatprep.mubr.bf16.mxu0 %v582
        %2629 = vmatmul.mubr.bf16.gmra.mxu0 %v581
        %v2630 = vpop.f32.mrf.mxu0
        %v2631 = vadd.f32 %v2054, %v2630
        %v2632 = vpop.f32.mrf.mxu0
        %v2633 = vadd.f32 %v2058, %v2632
        %v2634 = vpop.f32.mrf.mxu0
        %v2635 = vadd.f32 %v2054, %v2634
        %v2636 = vpop.f32.mrf.mxu0
        %v2637 = vadd.f32 %v2058, %v2636
        %2638 = vmatprep.mubr.bf16.mxu0 %v584
        %2639 = vmatmul.mubr.bf16.gmra.mxu0 %v583
        %v2640 = vpop.f32.mrf.mxu0
        %v2641 = vadd.f32 %v2054, %v2640
        %v2642 = vpop.f32.mrf.mxu0
        %v2643 = vadd.f32 %v2058, %v2642
        %v2644 = vpop.f32.mrf.mxu0
        %v2645 = vadd.f32 %v2054, %v2644
        %v2646 = vpop.f32.mrf.mxu0
        %v2647 = vadd.f32 %v2058, %v2646
        %2648 = vmatprep.mubr.bf16.mxu0 %v586
        %2649 = vmatmul.mubr.bf16.gmra.mxu0 %v585
        %v2650 = vpop.f32.mrf.mxu0
        %v2651 = vadd.f32 %v2054, %v2650
        %v2652 = vpop.f32.mrf.mxu0
        %v2653 = vadd.f32 %v2058, %v2652
        %v2654 = vpop.f32.mrf.mxu0
        %v2655 = vadd.f32 %v2054, %v2654
        %v2656 = vpop.f32.mrf.mxu0
        %v2657 = vadd.f32 %v2058, %v2656
        %2658 = vmatprep.mubr.bf16.mxu0 %v588
        %2659 = vmatmul.mubr.bf16.gmra.mxu0 %v587
        %v2660 = vpop.f32.mrf.mxu0
        %v2661 = vadd.f32 %v2054, %v2660
        %v2662 = vpop.f32.mrf.mxu0
        %v2663 = vadd.f32 %v2058, %v2662
        %v2664 = vpop.f32.mrf.mxu0
        %v2665 = vadd.f32 %v2054, %v2664
        %v2666 = vpop.f32.mrf.mxu0
        %v2667 = vadd.f32 %v2058, %v2666
        %2668 = vmatprep.mubr.bf16.mxu0 %v590
        %2669 = vmatmul.mubr.bf16.gmra.mxu0 %v589
        %v2670 = vpop.f32.mrf.mxu0
        %v2671 = vadd.f32 %v2054, %v2670
        %v2672 = vpop.f32.mrf.mxu0
        %v2673 = vadd.f32 %v2058, %v2672
        %v2674 = vpop.f32.mrf.mxu0
        %v2675 = vadd.f32 %v2054, %v2674
        %v2676 = vpop.f32.mrf.mxu0
        %v2677 = vadd.f32 %v2058, %v2676
        %2678 = vmatprep.mubr.bf16.mxu0 %v592
        %2679 = vmatmul.mubr.bf16.gmra.mxu0 %v591
        %v2680 = vpop.f32.mrf.mxu0
        %v2681 = vadd.f32 %v2054, %v2680
        %v2682 = vpop.f32.mrf.mxu0
        %v2683 = vadd.f32 %v2058, %v2682
        %v2684 = vpop.f32.mrf.mxu0
        %v2685 = vadd.f32 %v2054, %v2684
        %v2686 = vpop.f32.mrf.mxu0
        %v2687 = vadd.f32 %v2058, %v2686
        %2688 = vmatprep.mubr.bf16.mxu0 %v594
        %2689 = vmatmul.mubr.bf16.gmra.mxu0 %v593
        %v2690 = vpop.f32.mrf.mxu0
        %v2691 = vadd.f32 %v2054, %v2690
        %v2692 = vpop.f32.mrf.mxu0
        %v2693 = vadd.f32 %v2058, %v2692
        %v2694 = vpop.f32.mrf.mxu0
        %v2695 = vadd.f32 %v2054, %v2694
        %v2696 = vpop.f32.mrf.mxu0
        %v2697 = vadd.f32 %v2058, %v2696
        %2698 = vmatprep.mubr.bf16.mxu0 %v596
        %2699 = vmatmul.mubr.bf16.gmra.mxu0 %v595
        %v2700 = vpop.f32.mrf.mxu0
        %v2701 = vadd.f32 %v2054, %v2700
        %v2702 = vpop.f32.mrf.mxu0
        %v2703 = vadd.f32 %v2058, %v2702
        %v2704 = vpop.f32.mrf.mxu0
        %v2705 = vadd.f32 %v2054, %v2704
        %v2706 = vpop.f32.mrf.mxu0
        %v2707 = vadd.f32 %v2058, %v2706
        %2708 = vmatprep.mubr.bf16.mxu0 %v598
        %2709 = vmatmul.mubr.bf16.gmra.mxu0 %v597
        %v2710 = vpop.f32.mrf.mxu0
        %v2711 = vadd.f32 %v2054, %v2710
        %v2712 = vpop.f32.mrf.mxu0
        %v2713 = vadd.f32 %v2058, %v2712
        %v2714 = vpop.f32.mrf.mxu0
        %v2715 = vadd.f32 %v2054, %v2714
        %v2716 = vpop.f32.mrf.mxu0
        %v2717 = vadd.f32 %v2058, %v2716
        %2718 = vmatprep.mubr.bf16.mxu0 %v600
        %2719 = vmatmul.mubr.bf16.gmra.mxu0 %v599
        %v2720 = vpop.f32.mrf.mxu0
        %v2721 = vadd.f32 %v2054, %v2720
        %v2722 = vpop.f32.mrf.mxu0
        %v2723 = vadd.f32 %v2058, %v2722
        %v2724 = vpop.f32.mrf.mxu0
        %v2725 = vadd.f32 %v2054, %v2724
        %v2726 = vpop.f32.mrf.mxu0
        %v2727 = vadd.f32 %v2058, %v2726
        %2728 = vmatprep.mubr.bf16.mxu0 %v602
        %2729 = vmatmul.mubr.bf16.gmra.mxu0 %v601
        %v2730 = vpop.f32.mrf.mxu0
        %v2731 = vadd.f32 %v2054, %v2730
        %v2732 = vpop.f32.mrf.mxu0
        %v2733 = vadd.f32 %v2058, %v2732
        %v2734 = vpop.f32.mrf.mxu0
        %v2735 = vadd.f32 %v2054, %v2734
        %v2736 = vpop.f32.mrf.mxu0
        %v2737 = vadd.f32 %v2058, %v2736
        %2738 = vmatprep.mubr.bf16.mxu0 %v604
        %2739 = vmatmul.mubr.bf16.gmra.mxu0 %v603
        %v2740 = vpop.f32.mrf.mxu0
        %v2741 = vadd.f32 %v2054, %v2740
        %v2742 = vpop.f32.mrf.mxu0
        %v2743 = vadd.f32 %v2058, %v2742
        %v2744 = vpop.f32.mrf.mxu0
        %v2745 = vadd.f32 %v2054, %v2744
        %v2746 = vpop.f32.mrf.mxu0
        %v2747 = vadd.f32 %v2058, %v2746
        %2748 = vmatprep.mubr.bf16.mxu0 %v606
        %2749 = vmatmul.mubr.bf16.gmra.mxu0 %v605
        %v2750 = vpop.f32.mrf.mxu0
        %v2751 = vadd.f32 %v2054, %v2750
        %v2752 = vpop.f32.mrf.mxu0
        %v2753 = vadd.f32 %v2058, %v2752
        %v2754 = vpop.f32.mrf.mxu0
        %v2755 = vadd.f32 %v2054, %v2754
        %v2756 = vpop.f32.mrf.mxu0
        %v2757 = vadd.f32 %v2058, %v2756
        %2758 = vmatprep.mubr.bf16.mxu0 %v608
        %2759 = vmatmul.mubr.bf16.gmra.mxu0 %v607
        %v2760 = vpop.f32.mrf.mxu0
        %v2761 = vadd.f32 %v2054, %v2760
        %v2762 = vpop.f32.mrf.mxu0
        %v2763 = vadd.f32 %v2058, %v2762
        %v2764 = vpop.f32.mrf.mxu0
        %v2765 = vadd.f32 %v2054, %v2764
        %v2766 = vpop.f32.mrf.mxu0
        %v2767 = vadd.f32 %v2058, %v2766
        %2768 = vdwg.mxu0
        %v2769 = vmax.f32 %v2418, 0.0
        %v2770 = vmax.f32 %v2420, 0.0
        %v2771 = vmax.f32 %v2611, 0.0
        %v2772 = vmax.f32 %v2613, 0.0
        %v2773 = vmax.f32 %v2422, 0.0
        %v2774 = vmax.f32 %v2424, 0.0
        %v2775 = vmax.f32 %v2615, 0.0
        %v2776 = vmax.f32 %v2617, 0.0
        %v2777 = vmax.f32 %v2428, 0.0
        %v2778 = vmax.f32 %v2430, 0.0
        %v2779 = vmax.f32 %v2621, 0.0
        %v2780 = vmax.f32 %v2623, 0.0
        %v2781 = vmax.f32 %v2432, 0.0
        %v2782 = vmax.f32 %v2434, 0.0
        %v2783 = vmax.f32 %v2625, 0.0
        %v2784 = vmax.f32 %v2627, 0.0
        %v2785 = vmax.f32 %v2438, 0.0
        %v2786 = vmax.f32 %v2440, 0.0
        %v2787 = vmax.f32 %v2631, 0.0
        %v2788 = vmax.f32 %v2633, 0.0
        %v2789 = vmax.f32 %v2442, 0.0
        %v2790 = vmax.f32 %v2444, 0.0
        %v2791 = vmax.f32 %v2635, 0.0
        %v2792 = vmax.f32 %v2637, 0.0
        %v2793 = vmax.f32 %v2448, 0.0
        %v2794 = vmax.f32 %v2450, 0.0
        %v2795 = vmax.f32 %v2641, 0.0
        %v2796 = vmax.f32 %v2643, 0.0
        %v2797 = vmax.f32 %v2452, 0.0
        %v2798 = vmax.f32 %v2454, 0.0
        %v2799 = vmax.f32 %v2645, 0.0
        %v2800 = vmax.f32 %v2647, 0.0
        %v2801 = vmax.f32 %v2458, 0.0
        %v2802 = vmax.f32 %v2460, 0.0
        %v2803 = vmax.f32 %v2651, 0.0
        %v2804 = vmax.f32 %v2653, 0.0
        %v2805 = vmax.f32 %v2462, 0.0
        %v2806 = vmax.f32 %v2464, 0.0
        %v2807 = vmax.f32 %v2655, 0.0
        %v2808 = vmax.f32 %v2657, 0.0
        %v2809 = vmax.f32 %v2468, 0.0
        %v2810 = vmax.f32 %v2470, 0.0
        %v2811 = vmax.f32 %v2661, 0.0
        %v2812 = vmax.f32 %v2663, 0.0
        %v2813 = vmax.f32 %v2472, 0.0
        %v2814 = vmax.f32 %v2474, 0.0
        %v2815 = vmax.f32 %v2665, 0.0
        %v2816 = vmax.f32 %v2667, 0.0
        %v2817 = vmax.f32 %v2478, 0.0
        %v2818 = vmax.f32 %v2480, 0.0
        %v2819 = vmax.f32 %v2671, 0.0
        %v2820 = vmax.f32 %v2673, 0.0
        %v2821 = vmax.f32 %v2482, 0.0
        %v2822 = vmax.f32 %v2484, 0.0
        %v2823 = vmax.f32 %v2675, 0.0
        %v2824 = vmax.f32 %v2677, 0.0
        %v2825 = vmax.f32 %v2488, 0.0
        %v2826 = vmax.f32 %v2490, 0.0
        %v2827 = vmax.f32 %v2681, 0.0
        %v2828 = vmax.f32 %v2683, 0.0
        %v2829 = vmax.f32 %v2492, 0.0
        %v2830 = vmax.f32 %v2494, 0.0
        %v2831 = vmax.f32 %v2685, 0.0
        %v2832 = vmax.f32 %v2687, 0.0
        %v2833 = vmax.f32 %v2498, 0.0
        %v2834 = vmax.f32 %v2500, 0.0
        %v2835 = vmax.f32 %v2691, 0.0
        %v2836 = vmax.f32 %v2693, 0.0
        %v2837 = vmax.f32 %v2502, 0.0
        %v2838 = vmax.f32 %v2504, 0.0
        %v2839 = vmax.f32 %v2695, 0.0
        %v2840 = vmax.f32 %v2697, 0.0
        %v2841 = vmax.f32 %v2508, 0.0
        %v2842 = vmax.f32 %v2510, 0.0
        %v2843 = vmax.f32 %v2701, 0.0
        %v2844 = vmax.f32 %v2703, 0.0
        %v2845 = vmax.f32 %v2512, 0.0
        %v2846 = vmax.f32 %v2514, 0.0
        %v2847 = vmax.f32 %v2705, 0.0
        %v2848 = vmax.f32 %v2707, 0.0
        %v2849 = vmax.f32 %v2518, 0.0
        %v2850 = vmax.f32 %v2520, 0.0
        %v2851 = vmax.f32 %v2711, 0.0
        %v2852 = vmax.f32 %v2713, 0.0
        %v2853 = vmax.f32 %v2522, 0.0
        %v2854 = vmax.f32 %v2524, 0.0
        %v2855 = vmax.f32 %v2715, 0.0
        %v2856 = vmax.f32 %v2717, 0.0
        %v2857 = vmax.f32 %v2528, 0.0
        %v2858 = vmax.f32 %v2530, 0.0
        %v2859 = vmax.f32 %v2721, 0.0
        %v2860 = vmax.f32 %v2723, 0.0
        %v2861 = vmax.f32 %v2532, 0.0
        %v2862 = vmax.f32 %v2534, 0.0
        %v2863 = vmax.f32 %v2725, 0.0
        %v2864 = vmax.f32 %v2727, 0.0
        %v2865 = vmax.f32 %v2538, 0.0
        %v2866 = vmax.f32 %v2540, 0.0
        %v2867 = vmax.f32 %v2731, 0.0
        %v2868 = vmax.f32 %v2733, 0.0
        %v2869 = vmax.f32 %v2542, 0.0
        %v2870 = vmax.f32 %v2544, 0.0
        %v2871 = vmax.f32 %v2735, 0.0
        %v2872 = vmax.f32 %v2737, 0.0
        %v2873 = vmax.f32 %v2548, 0.0
        %v2874 = vmax.f32 %v2550, 0.0
        %v2875 = vmax.f32 %v2741, 0.0
        %v2876 = vmax.f32 %v2743, 0.0
        %v2877 = vmax.f32 %v2552, 0.0
        %v2878 = vmax.f32 %v2554, 0.0
        %v2879 = vmax.f32 %v2745, 0.0
        %v2880 = vmax.f32 %v2747, 0.0
        %v2881 = vmax.f32 %v2558, 0.0
        %v2882 = vmax.f32 %v2560, 0.0
        %v2883 = vmax.f32 %v2751, 0.0
        %v2884 = vmax.f32 %v2753, 0.0
        %v2885 = vmax.f32 %v2562, 0.0
        %v2886 = vmax.f32 %v2564, 0.0
        %v2887 = vmax.f32 %v2755, 0.0
        %v2888 = vmax.f32 %v2757, 0.0
        %v2889 = vmax.f32 %v2568, 0.0
        %v2890 = vmax.f32 %v2570, 0.0
        %v2891 = vmax.f32 %v2761, 0.0
        %v2892 = vmax.f32 %v2763, 0.0
        %v2893 = vmax.f32 %v2572, 0.0
        %v2894 = vmax.f32 %v2574, 0.0
        %v2895 = vmax.f32 %v2765, 0.0
        %v2896 = vmax.f32 %v2767, 0.0
        %v2897 = vpack.c.bf16 %v2773, %v2769
        %v2898 = vpack.c.bf16 %v2774, %v2770
        %v2899 = vpack.c.bf16 %v2775, %v2771
        %v2900 = vpack.c.bf16 %v2776, %v2772
        %v2901 = vpack.c.bf16 %v2781, %v2777
        %v2902 = vpack.c.bf16 %v2782, %v2778
        %v2903 = vpack.c.bf16 %v2783, %v2779
        %v2904 = vpack.c.bf16 %v2784, %v2780
        %v2905 = vpack.c.bf16 %v2789, %v2785
        %v2906 = vpack.c.bf16 %v2790, %v2786
        %v2907 = vpack.c.bf16 %v2791, %v2787
        %v2908 = vpack.c.bf16 %v2792, %v2788
        %v2909 = vpack.c.bf16 %v2797, %v2793
        %v2910 = vpack.c.bf16 %v2798, %v2794
        %v2911 = vpack.c.bf16 %v2799, %v2795
        %v2912 = vpack.c.bf16 %v2800, %v2796
        %v2913 = vpack.c.bf16 %v2805, %v2801
        %v2914 = vpack.c.bf16 %v2806, %v2802
        %v2915 = vpack.c.bf16 %v2807, %v2803
        %v2916 = vpack.c.bf16 %v2808, %v2804
        %v2917 = vpack.c.bf16 %v2813, %v2809
        %v2918 = vpack.c.bf16 %v2814, %v2810
        %v2919 = vpack.c.bf16 %v2815, %v2811
        %v2920 = vpack.c.bf16 %v2816, %v2812
        %v2921 = vpack.c.bf16 %v2821, %v2817
        %v2922 = vpack.c.bf16 %v2822, %v2818
        %v2923 = vpack.c.bf16 %v2823, %v2819
        %v2924 = vpack.c.bf16 %v2824, %v2820
        %v2925 = vpack.c.bf16 %v2829, %v2825
        %v2926 = vpack.c.bf16 %v2830, %v2826
        %v2927 = vpack.c.bf16 %v2831, %v2827
        %v2928 = vpack.c.bf16 %v2832, %v2828
        %v2929 = vpack.c.bf16 %v2837, %v2833
        %v2930 = vpack.c.bf16 %v2838, %v2834
        %v2931 = vpack.c.bf16 %v2839, %v2835
        %v2932 = vpack.c.bf16 %v2840, %v2836
        %v2933 = vpack.c.bf16 %v2845, %v2841
        %v2934 = vpack.c.bf16 %v2846, %v2842
        %v2935 = vpack.c.bf16 %v2847, %v2843
        %v2936 = vpack.c.bf16 %v2848, %v2844
        %v2937 = vpack.c.bf16 %v2853, %v2849
        %v2938 = vpack.c.bf16 %v2854, %v2850
        %v2939 = vpack.c.bf16 %v2855, %v2851
        %v2940 = vpack.c.bf16 %v2856, %v2852
        %v2941 = vpack.c.bf16 %v2861, %v2857
        %v2942 = vpack.c.bf16 %v2862, %v2858
        %v2943 = vpack.c.bf16 %v2863, %v2859
        %v2944 = vpack.c.bf16 %v2864, %v2860
        %v2945 = vpack.c.bf16 %v2869, %v2865
        %v2946 = vpack.c.bf16 %v2870, %v2866
        %v2947 = vpack.c.bf16 %v2871, %v2867
        %v2948 = vpack.c.bf16 %v2872, %v2868
        %v2949 = vpack.c.bf16 %v2877, %v2873
        %v2950 = vpack.c.bf16 %v2878, %v2874
        %v2951 = vpack.c.bf16 %v2879, %v2875
        %v2952 = vpack.c.bf16 %v2880, %v2876
        %v2953 = vpack.c.bf16 %v2885, %v2881
        %v2954 = vpack.c.bf16 %v2886, %v2882
        %v2955 = vpack.c.bf16 %v2887, %v2883
        %v2956 = vpack.c.bf16 %v2888, %v2884
        %v2957 = vpack.c.bf16 %v2893, %v2889
        %v2958 = vpack.c.bf16 %v2894, %v2890
        %v2959 = vpack.c.bf16 %v2895, %v2891
        %v2960 = vpack.c.bf16 %v2896, %v2892
        %v3025 = vunpack.c.l.b16 %v2897
        %v3026 = vunpack.c.l.b16 %v2898
        %v3027 = vunpack.c.l.b16 %v2899
        %v3028 = vunpack.c.l.b16 %v2900
        %v3029 = vunpack.c.h.b16 %v2897
        %v3030 = vunpack.c.h.b16 %v2898
        %v3031 = vunpack.c.h.b16 %v2899
        %v3032 = vunpack.c.h.b16 %v2900
        %v3033 = vunpack.c.l.b16 %v2901
        %v3034 = vunpack.c.l.b16 %v2902
        %v3035 = vunpack.c.l.b16 %v2903
        %v3036 = vunpack.c.l.b16 %v2904
        %v3037 = vunpack.c.h.b16 %v2901
        %v3038 = vunpack.c.h.b16 %v2902
        %v3039 = vunpack.c.h.b16 %v2903
        %v3040 = vunpack.c.h.b16 %v2904
        %v3041 = vunpack.c.l.b16 %v2905
        %v3042 = vunpack.c.l.b16 %v2906
        %v3043 = vunpack.c.l.b16 %v2907
        %v3044 = vunpack.c.l.b16 %v2908
        %v3045 = vunpack.c.h.b16 %v2905
        %v3046 = vunpack.c.h.b16 %v2906
        %v3047 = vunpack.c.h.b16 %v2907
        %v3048 = vunpack.c.h.b16 %v2908
        %v3049 = vunpack.c.l.b16 %v2909
        %v3050 = vunpack.c.l.b16 %v2910
        %v3051 = vunpack.c.l.b16 %v2911
        %v3052 = vunpack.c.l.b16 %v2912
        %v3053 = vunpack.c.h.b16 %v2909
        %v3054 = vunpack.c.h.b16 %v2910
        %v3055 = vunpack.c.h.b16 %v2911
        %v3056 = vunpack.c.h.b16 %v2912
        %v3057 = vunpack.c.l.b16 %v2913
        %v3058 = vunpack.c.l.b16 %v2914
        %v3059 = vunpack.c.l.b16 %v2915
        %v3060 = vunpack.c.l.b16 %v2916
        %v3061 = vunpack.c.h.b16 %v2913
        %v3062 = vunpack.c.h.b16 %v2914
        %v3063 = vunpack.c.h.b16 %v2915
        %v3064 = vunpack.c.h.b16 %v2916
        %v3065 = vunpack.c.l.b16 %v2917
        %v3066 = vunpack.c.l.b16 %v2918
        %v3067 = vunpack.c.l.b16 %v2919
        %v3068 = vunpack.c.l.b16 %v2920
        %v3069 = vunpack.c.h.b16 %v2917
        %v3070 = vunpack.c.h.b16 %v2918
        %v3071 = vunpack.c.h.b16 %v2919
        %v3072 = vunpack.c.h.b16 %v2920
        %v3073 = vunpack.c.l.b16 %v2921
        %v3074 = vunpack.c.l.b16 %v2922
        %v3075 = vunpack.c.l.b16 %v2923
        %v3076 = vunpack.c.l.b16 %v2924
        %v3077 = vunpack.c.h.b16 %v2921
        %v3078 = vunpack.c.h.b16 %v2922
        %v3079 = vunpack.c.h.b16 %v2923
        %v3080 = vunpack.c.h.b16 %v2924
        %v3081 = vunpack.c.l.b16 %v2925
        %v3082 = vunpack.c.l.b16 %v2926
        %v3083 = vunpack.c.l.b16 %v2927
        %v3084 = vunpack.c.l.b16 %v2928
        %v3085 = vunpack.c.h.b16 %v2925
        %v3086 = vunpack.c.h.b16 %v2926
        %v3087 = vunpack.c.h.b16 %v2927
        %v3088 = vunpack.c.h.b16 %v2928
        %v3089 = vunpack.c.l.b16 %v2929
        %v3090 = vunpack.c.l.b16 %v2930
        %v3091 = vunpack.c.l.b16 %v2931
        %v3092 = vunpack.c.l.b16 %v2932
        %v3093 = vunpack.c.h.b16 %v2929
        %v3094 = vunpack.c.h.b16 %v2930
        %v3095 = vunpack.c.h.b16 %v2931
        %v3096 = vunpack.c.h.b16 %v2932
        %v3097 = vunpack.c.l.b16 %v2933
        %v3098 = vunpack.c.l.b16 %v2934
        %v3099 = vunpack.c.l.b16 %v2935
        %v3100 = vunpack.c.l.b16 %v2936
        %v3101 = vunpack.c.h.b16 %v2933
        %v3102 = vunpack.c.h.b16 %v2934
        %v3103 = vunpack.c.h.b16 %v2935
        %v3104 = vunpack.c.h.b16 %v2936
        %v3105 = vunpack.c.l.b16 %v2937
        %v3106 = vunpack.c.l.b16 %v2938
        %v3107 = vunpack.c.l.b16 %v2939
        %v3108 = vunpack.c.l.b16 %v2940
        %v3109 = vunpack.c.h.b16 %v2937
        %v3110 = vunpack.c.h.b16 %v2938
        %v3111 = vunpack.c.h.b16 %v2939
        %v3112 = vunpack.c.h.b16 %v2940
        %v3113 = vunpack.c.l.b16 %v2941
        %v3114 = vunpack.c.l.b16 %v2942
        %v3115 = vunpack.c.l.b16 %v2943
        %v3116 = vunpack.c.l.b16 %v2944
        %v3117 = vunpack.c.h.b16 %v2941
        %v3118 = vunpack.c.h.b16 %v2942
        %v3119 = vunpack.c.h.b16 %v2943
        %v3120 = vunpack.c.h.b16 %v2944
        %v3121 = vunpack.c.l.b16 %v2945
        %v3122 = vunpack.c.l.b16 %v2946
        %v3123 = vunpack.c.l.b16 %v2947
        %v3124 = vunpack.c.l.b16 %v2948
        %v3125 = vunpack.c.h.b16 %v2945
        %v3126 = vunpack.c.h.b16 %v2946
        %v3127 = vunpack.c.h.b16 %v2947
        %v3128 = vunpack.c.h.b16 %v2948
        %v3129 = vunpack.c.l.b16 %v2949
        %v3130 = vunpack.c.l.b16 %v2950
        %v3131 = vunpack.c.l.b16 %v2951
        %v3132 = vunpack.c.l.b16 %v2952
        %v3133 = vunpack.c.h.b16 %v2949
        %v3134 = vunpack.c.h.b16 %v2950
        %v3135 = vunpack.c.h.b16 %v2951
        %v3136 = vunpack.c.h.b16 %v2952
        %v3137 = vunpack.c.l.b16 %v2953
        %v3138 = vunpack.c.l.b16 %v2954
        %v3139 = vunpack.c.l.b16 %v2955
        %v3140 = vunpack.c.l.b16 %v2956
        %v3141 = vunpack.c.h.b16 %v2953
        %v3142 = vunpack.c.h.b16 %v2954
        %v3143 = vunpack.c.h.b16 %v2955
        %v3144 = vunpack.c.h.b16 %v2956
        %v3145 = vunpack.c.l.b16 %v2957
        %v3146 = vunpack.c.l.b16 %v2958
        %v3147 = vunpack.c.l.b16 %v2959
        %v3148 = vunpack.c.l.b16 %v2960
        %v3149 = vunpack.c.h.b16 %v2957
        %v3150 = vunpack.c.h.b16 %v2958
        %v3151 = vunpack.c.h.b16 %v2959
        %v3152 = vunpack.c.h.b16 %v2960
        %v3153 = vpack.c.b16 %v3026, %v3025
        %v3154 = vpack.c.b16 %v3028, %v3027
        %v3155 = vpack.c.b16 %v3030, %v3029
        %v3156 = vpack.c.b16 %v3032, %v3031
        %v3157 = vpack.c.b16 %v3034, %v3033
        %v3158 = vpack.c.b16 %v3036, %v3035
        %v3159 = vpack.c.b16 %v3038, %v3037
        %v3160 = vpack.c.b16 %v3040, %v3039
        %v3161 = vpack.c.b16 %v3042, %v3041
        %v3162 = vpack.c.b16 %v3044, %v3043
        %v3163 = vpack.c.b16 %v3046, %v3045
        %v3164 = vpack.c.b16 %v3048, %v3047
        %v3165 = vpack.c.b16 %v3050, %v3049
        %v3166 = vpack.c.b16 %v3052, %v3051
        %v3167 = vpack.c.b16 %v3054, %v3053
        %v3168 = vpack.c.b16 %v3056, %v3055
        %v3169 = vpack.c.b16 %v3058, %v3057
        %v3170 = vpack.c.b16 %v3060, %v3059
        %v3171 = vpack.c.b16 %v3062, %v3061
        %v3172 = vpack.c.b16 %v3064, %v3063
        %v3173 = vpack.c.b16 %v3066, %v3065
        %v3174 = vpack.c.b16 %v3068, %v3067
        %v3175 = vpack.c.b16 %v3070, %v3069
        %v3176 = vpack.c.b16 %v3072, %v3071
        %v3177 = vpack.c.b16 %v3074, %v3073
        %v3178 = vpack.c.b16 %v3076, %v3075
        %v3179 = vpack.c.b16 %v3078, %v3077
        %v3180 = vpack.c.b16 %v3080, %v3079
        %v3181 = vpack.c.b16 %v3082, %v3081
        %v3182 = vpack.c.b16 %v3084, %v3083
        %v3183 = vpack.c.b16 %v3086, %v3085
        %v3184 = vpack.c.b16 %v3088, %v3087
        %v3185 = vpack.c.b16 %v3090, %v3089
        %v3186 = vpack.c.b16 %v3092, %v3091
        %v3187 = vpack.c.b16 %v3094, %v3093
        %v3188 = vpack.c.b16 %v3096, %v3095
        %v3189 = vpack.c.b16 %v3098, %v3097
        %v3190 = vpack.c.b16 %v3100, %v3099
        %v3191 = vpack.c.b16 %v3102, %v3101
        %v3192 = vpack.c.b16 %v3104, %v3103
        %v3193 = vpack.c.b16 %v3106, %v3105
        %v3194 = vpack.c.b16 %v3108, %v3107
        %v3195 = vpack.c.b16 %v3110, %v3109
        %v3196 = vpack.c.b16 %v3112, %v3111
        %v3197 = vpack.c.b16 %v3114, %v3113
        %v3198 = vpack.c.b16 %v3116, %v3115
        %v3199 = vpack.c.b16 %v3118, %v3117
        %v3200 = vpack.c.b16 %v3120, %v3119
        %v3201 = vpack.c.b16 %v3122, %v3121
        %v3202 = vpack.c.b16 %v3124, %v3123
        %v3203 = vpack.c.b16 %v3126, %v3125
        %v3204 = vpack.c.b16 %v3128, %v3127
        %v3205 = vpack.c.b16 %v3130, %v3129
        %v3206 = vpack.c.b16 %v3132, %v3131
        %v3207 = vpack.c.b16 %v3134, %v3133
        %v3208 = vpack.c.b16 %v3136, %v3135
        %v3209 = vpack.c.b16 %v3138, %v3137
        %v3210 = vpack.c.b16 %v3140, %v3139
        %v3211 = vpack.c.b16 %v3142, %v3141
        %v3212 = vpack.c.b16 %v3144, %v3143
        %v3213 = vpack.c.b16 %v3146, %v3145
        %v3214 = vpack.c.b16 %v3148, %v3147
        %v3215 = vpack.c.b16 %v3150, %v3149
        %v3216 = vpack.c.b16 %v3152, %v3151
        %3281 = vst [vmem:[%s370] sm:$0xff] %v3153
        %3282 = vst [vmem:[%s370 + $0x8] sm:$0xff] %v3154
        %3283 = vst [vmem:[%s370 + $0x10] sm:$0xff] %v3155
        %3284 = vst [vmem:[%s370 + $0x18] sm:$0xff] %v3156
        %3285 = vst [vmem:[%s370 + $0x20] sm:$0xff] %v3157
        %3286 = vst [vmem:[%s370 + $0x28] sm:$0xff] %v3158
        %3287 = vst [vmem:[%s370 + $0x30] sm:$0xff] %v3159
        %3288 = vst [vmem:[%s370 + $0x38] sm:$0xff] %v3160
        %3289 = vst [vmem:[%s370 + $0x40] sm:$0xff] %v3161
        %3290 = vst [vmem:[%s370 + $0x48] sm:$0xff] %v3162
        %3291 = vst [vmem:[%s370 + $0x50] sm:$0xff] %v3163
        %3292 = vst [vmem:[%s370 + $0x58] sm:$0xff] %v3164
        %3293 = vst [vmem:[%s370 + $0x60] sm:$0xff] %v3165
        %3294 = vst [vmem:[%s370 + $0x68] sm:$0xff] %v3166
        %3295 = vst [vmem:[%s370 + $0x70] sm:$0xff] %v3167
        %3296 = vst [vmem:[%s370 + $0x78] sm:$0xff] %v3168
        %3297 = vst [vmem:[%s370 + $0x80] sm:$0xff] %v3169
        %3298 = vst [vmem:[%s370 + $0x88] sm:$0xff] %v3170
        %3299 = vst [vmem:[%s370 + $0x90] sm:$0xff] %v3171
        %3300 = vst [vmem:[%s370 + $0x98] sm:$0xff] %v3172
        %3301 = vst [vmem:[%s370 + $0xa0] sm:$0xff] %v3173
        %3302 = vst [vmem:[%s370 + $0xa8] sm:$0xff] %v3174
        %3303 = vst [vmem:[%s370 + $0xb0] sm:$0xff] %v3175
        %3304 = vst [vmem:[%s370 + $0xb8] sm:$0xff] %v3176
        %3305 = vst [vmem:[%s370 + $0xc0] sm:$0xff] %v3177
        %3306 = vst [vmem:[%s370 + $0xc8] sm:$0xff] %v3178
        %3307 = vst [vmem:[%s370 + $0xd0] sm:$0xff] %v3179
        %3308 = vst [vmem:[%s370 + $0xd8] sm:$0xff] %v3180
        %3309 = vst [vmem:[%s370 + $0xe0] sm:$0xff] %v3181
        %3310 = vst [vmem:[%s370 + $0xe8] sm:$0xff] %v3182
        %3311 = vst [vmem:[%s370 + $0xf0] sm:$0xff] %v3183
        %3312 = vst [vmem:[%s370 + $0xf8] sm:$0xff] %v3184
        %3313 = vst [vmem:[%s370 + $0x100] sm:$0xff] %v3185
        %3314 = vst [vmem:[%s370 + $0x108] sm:$0xff] %v3186
        %3315 = vst [vmem:[%s370 + $0x110] sm:$0xff] %v3187
        %3316 = vst [vmem:[%s370 + $0x118] sm:$0xff] %v3188
        %3317 = vst [vmem:[%s370 + $0x120] sm:$0xff] %v3189
        %3318 = vst [vmem:[%s370 + $0x128] sm:$0xff] %v3190
        %3319 = vst [vmem:[%s370 + $0x130] sm:$0xff] %v3191
        %3320 = vst [vmem:[%s370 + $0x138] sm:$0xff] %v3192
        %3321 = vst [vmem:[%s370 + $0x140] sm:$0xff] %v3193
        %3322 = vst [vmem:[%s370 + $0x148] sm:$0xff] %v3194
        %3323 = vst [vmem:[%s370 + $0x150] sm:$0xff] %v3195
        %3324 = vst [vmem:[%s370 + $0x158] sm:$0xff] %v3196
        %3325 = vst [vmem:[%s370 + $0x160] sm:$0xff] %v3197
        %3326 = vst [vmem:[%s370 + $0x168] sm:$0xff] %v3198
        %3327 = vst [vmem:[%s370 + $0x170] sm:$0xff] %v3199
        %3328 = vst [vmem:[%s370 + $0x178] sm:$0xff] %v3200
        %3329 = vst [vmem:[%s370 + $0x180] sm:$0xff] %v3201
        %3330 = vst [vmem:[%s370 + $0x188] sm:$0xff] %v3202
        %3331 = vst [vmem:[%s370 + $0x190] sm:$0xff] %v3203
        %3332 = vst [vmem:[%s370 + $0x198] sm:$0xff] %v3204
        %3333 = vst [vmem:[%s370 + $0x1a0] sm:$0xff] %v3205
        %3334 = vst [vmem:[%s370 + $0x1a8] sm:$0xff] %v3206
        %3335 = vst [vmem:[%s370 + $0x1b0] sm:$0xff] %v3207
        %3336 = vst [vmem:[%s370 + $0x1b8] sm:$0xff] %v3208
        %3337 = vst [vmem:[%s370 + $0x1c0] sm:$0xff] %v3209
        %3338 = vst [vmem:[%s370 + $0x1c8] sm:$0xff] %v3210
        %3339 = vst [vmem:[%s370 + $0x1d0] sm:$0xff] %v3211
        %3340 = vst [vmem:[%s370 + $0x1d8] sm:$0xff] %v3212
        %3341 = vst [vmem:[%s370 + $0x1e0] sm:$0xff] %v3213
        %3342 = vst [vmem:[%s370 + $0x1e8] sm:$0xff] %v3214
        %3343 = vst [vmem:[%s370 + $0x1f0] sm:$0xff] %v3215
        %3344 = vst [vmem:[%s370 + $0x1f8] sm:$0xff] %v3216
        %s3345 = sand.u32 %s164, 1
        %s3346 = scalar_lea.sflag [#allocation4], %s3345
        %s3347 = sand.u32 %s164, 1
        %s3348 = smul.addr %s3347, 512
        %s3349 = scalar_lea.vmem [#allocation10], %s3348
        %s3350 = sand.u32 %s30, 1
        %s3351 = scalar_lea.sflag [#allocation12], %s3350
        %s3352 = sand.u32 %s192, 1
        %s3353 = smul.addr %s3352, 512
        %s3354 = scalar_lea.vmem [#allocation11], %s3353
        %s3355 = sand.u32 %s30, 1
        %s3356 = scalar_lea.sflag [#allocation12], %s3355
        %s3357 = sand.u32 %s218, 1
        %s3358 = smul.addr %s3357, 2
        %s3359 = scalar_lea.vmem [#allocation13], %s3358
        // Predicated region
        $region65: #{tpu_custom_call.1} parent=39 // pred_check
          %p3360 = pneg %p174
        $region66: #{tpu_custom_call.1} parent=39 // pred_check_branch
          %3362 = sbr.rel (%p3360) target = $region68
        $region67: #{tpu_custom_call.1} parent=39 // pred_region
          %s3363 = smul.u32 32, %s35
          %s3365 = ssub.s32 8192, 8192
          %3366 = vsyncadd %s3346, %s3365
          %s3367 = smul.addr %s3363, 4
          %s3368 = smul.addr %s34, 128
          %s3369 = sadd.s32 %s3367, %s3368
          %s3370 = smul.addr %s3369, 64
          %s3371 = scalar_lea.hbm %s5, %s3370
          %s3372 = sshll.u32 %s3349, 4
          %s3373 = int_to_ptr.vmem [resolvable:$true] %s3372
          %3378 = dma.vmem_to_hbm [thread:$0]  %s3373, 8192, %s3371, %s3346, 256, 256, 16
        $region68: #{tpu_custom_call.1} parent=39 // pred_fallthru
          _
        // Predicated region
        $region69: #{tpu_custom_call.1} parent=39 // pred_check
          %p3379 = pneg %p202
        $region70: #{tpu_custom_call.1} parent=39 // pred_check_branch
          %3381 = sbr.rel (%p3379) target = $region72
        $region71: #{tpu_custom_call.1} parent=39 // pred_region
          %s3382 = smul.u32 32, %s35
          %s3384 = ssub.s32 8192, 8192
          %3385 = vsyncadd %s3351, %s3384
          %s3386 = smul.addr %s3382, 4
          %s3387 = smul.addr %s34, 128
          %s3388 = sadd.s32 %s3386, %s3387
          %s3389 = smul.addr %s3388, 64
          %s3390 = scalar_lea.hbm %s6, %s3389
          %s3391 = sshll.u32 %s3354, 4
          %s3392 = int_to_ptr.vmem [resolvable:$true] %s3391
          %3397 = dma.vmem_to_hbm [thread:$0]  %s3392, 8192, %s3390, %s3351, 256, 256, 16
        $region72: #{tpu_custom_call.1} parent=39 // pred_fallthru
          _
        // Predicated region
        $region73: #{tpu_custom_call.1} parent=39 // pred_check
          %p3398 = pneg %p228
        $region74: #{tpu_custom_call.1} parent=39 // pred_check_branch
          %3400 = sbr.rel (%p3398) target = $region76
        $region75: #{tpu_custom_call.1} parent=39 // pred_region
          %s3402 = ssub.s32 32, 32
          %3403 = vsyncadd %s3356, %s3402
          %s3404 = smul.addr %s34, 2
          %s3405 = smul.addr %s3404, 16
          %s3406 = scalar_lea.hbm %s7, %s3405
          %s3408 = sshll.u32 %s3359, 4
          %s3409 = int_to_ptr.vmem [resolvable:$true] %s3408
          %3411 = dma.vmem_to_hbm [thread:$0]  %s3409, 32, %s3406, %s3356
        $region76: #{tpu_custom_call.1} parent=39 // pred_fallthru
          _
      $region40: #{tpu_custom_call.1} parent=5 // pred_fallthru
        _
      %p3412 = scmp.le.s32.totalorder 2, %s25
      // Predicated region
      $region77: #{tpu_custom_call.1} parent=5 // pred_check
        %p3413 = pneg %p3412
      $region78: #{tpu_custom_call.1} parent=5 // pred_check_branch
        %3415 = sbr.rel (%p3413) target = $region80
      $region79: #{tpu_custom_call.1} parent=5 // pred_region
        %s3416 = ssub.s32 %s25, 2
        // Predicated region
        $region81: #{tpu_custom_call.1} parent=79 // pred_check
          %p3417 = pneg %p180
        $region82: #{tpu_custom_call.1} parent=79 // pred_check_branch
          %3419 = sbr.rel (%p3417) target = $region84
        $region83: #{tpu_custom_call.1} parent=79 // pred_region
          %s3420 = sand.u32 %s165, 1
          %s3421 = scalar_lea.sflag [#allocation4], %s3420
          %s3422 = sand.u32 %s165, 1
          %s3423 = smul.addr %s3422, 512
          %s3424 = scalar_lea.vmem [#allocation10], %s3423
          %3425 = dma.done %s3421, 8192
        $region84: #{tpu_custom_call.1} parent=79 // pred_fallthru
          _
        // Predicated region
        $region85: #{tpu_custom_call.1} parent=79 // pred_check
          %p3426 = pneg %p208
        $region86: #{tpu_custom_call.1} parent=79 // pred_check_branch
          %3428 = sbr.rel (%p3426) target = $region88
        $region87: #{tpu_custom_call.1} parent=79 // pred_region
          %s3429 = sand.u32 %s31, 1
          %s3430 = scalar_lea.sflag [#allocation12], %s3429
          %s3431 = sand.u32 %s193, 1
          %s3432 = smul.addr %s3431, 512
          %s3433 = scalar_lea.vmem [#allocation11], %s3432
          %3434 = dma.done %s3430, 8192
        $region88: #{tpu_custom_call.1} parent=79 // pred_fallthru
          _
        // Predicated region
        $region89: #{tpu_custom_call.1} parent=79 // pred_check
          %p3435 = pneg %p234
        $region90: #{tpu_custom_call.1} parent=79 // pred_check_branch
          %3437 = sbr.rel (%p3435) target = $region92
        $region91: #{tpu_custom_call.1} parent=79 // pred_region
          %s3438 = sand.u32 %s31, 1
          %s3439 = scalar_lea.sflag [#allocation12], %s3438
          %s3440 = sand.u32 %s219, 1
          %s3441 = smul.addr %s3440, 2
          %s3442 = scalar_lea.vmem [#allocation13], %s3441
          %3443 = dma.done %s3439, 32
        $region92: #{tpu_custom_call.1} parent=79 // pred_fallthru
          _
      $region80: #{tpu_custom_call.1} parent=5 // pred_fallthru
        _
    $region6: #{tpu_custom_call.1} parent=1 // loop_footer
      %s29 = sadd.s32 1, %s25
    $region7: #{tpu_custom_call.1} parent=1 // loop_footer_branch
      %24 = sbr.rel target = $region3
    $region8: #{tpu_custom_call.1} parent=1 // loop_exit
      _
    %3444 = vsyncpa [#allocation3], 1
    %s3445 = scalar_lea.sflag [#allocation3], 1
    %3446 = vsyncpa %s3445, 1
    %3447 = vsyncpa [#allocation6], 1
    %3448 = vsyncpa [#allocation9], 1
    %3449 = vsyncpa [#allocation4], 1
    %s3450 = scalar_lea.sflag [#allocation4], 1
    %3451 = vsyncpa %s3450, 1
    %3452 = vsyncpa [#allocation12], 1
    %s3453 = scalar_lea.sflag [#allocation12], 1
    %3454 = vsyncpa %s3453, 1

</llo_original>
